<compile_context>
chip_gen: v7x
topology: tpu7x:2x2x1
jax: 0.10.0
libtpu: 0.0.40
codegen_flags: <defaults>
</compile_context>

<pallas_src>
import functools
import math

import jax
import jax.numpy as jnp
from jax.experimental import pallas as pl
from jax.experimental.pallas import tpu as pltpu


# ----------------------------------------------------------------------------
# In-kernel helpers
# ----------------------------------------------------------------------------
def _erf_poly(x):
    """Abramowitz & Stegun 7.1.26 erf approximation (max abs err ~1.5e-7)."""
    a1, a2, a3, a4, a5 = (0.254829592, -0.284496736, 1.421413741,
                          -1.453152027, 1.061405429)
    p = 0.3275911
    ax = jnp.abs(x)
    t = 1.0 / (1.0 + p * ax)
    poly = ((((a5 * t + a4) * t + a3) * t + a2) * t + a1) * t
    y = 1.0 - poly * jnp.exp(-ax * ax)
    return jnp.where(x >= 0.0, y, -y)


def _gelu_exact(x):
    """Exact (erf-based) GELU, matching torch.nn.GELU() default."""
    return 0.5 * x * (1.0 + _erf_poly(x * (1.0 / math.sqrt(2.0))))


def _attn_ff_block(q, kv, w_in, b_in, w_out, b_out, gamma, beta,
                   w1, b1, w2, b2, *, bb, tq, tk, nhead, eps, mm_dtype):
    """One cross-attention + residual LayerNorm + residual FF block.

    q  : (bb*tq, D) f32 value (query side, also the residual stream)
    kv : (bb*tk, D) f32 value (key/value side)
    w_in : Ref (D, 3D)  = in_proj_weight.T (mm_dtype), Q columns pre-scaled
    b_in : Ref (1, 3D)  f32, Q part pre-scaled by 1/sqrt(Dh)
    w_out: Ref (D, D)   = out_proj.weight.T (mm_dtype)
    b_out: Ref (1, D)   f32
    gamma/beta: Ref (1, D) f32 LayerNorm affine
    w1 (D,4D) mm_dtype, b1 (1,4D) f32, w2 (4D,D) mm_dtype, b2 (1,D) f32
    """
    rows_q, D = q.shape
    Dh = D // nhead

    qm = q.astype(mm_dtype)
    kvm = kv.astype(mm_dtype)

    # --- full-width fused QKV projections (128-lane MXU outputs) ------------
    Qf = jnp.dot(qm, w_in[:, :D],
                 preferred_element_type=jnp.float32) + b_in[:, :D]
    Kf = jnp.dot(kvm, w_in[:, D:2 * D],
                 preferred_element_type=jnp.float32) + b_in[:, D:2 * D]
    Vf = jnp.dot(kvm, w_in[:, 2 * D:],
                 preferred_element_type=jnp.float32) + b_in[:, 2 * D:]

    # --- attention (batch-local): unrolled loop over the bb batch elements --
    ctx_blocks = []
    for b in range(bb):
        Qbm = Qf[b * tq:(b + 1) * tq, :].astype(mm_dtype)      # (tq, D)
        Kb = Kf[b * tk:(b + 1) * tk, :]                        # (tk, D)
        Vbm = Vf[b * tk:(b + 1) * tk, :].astype(mm_dtype)      # (tk, D)
        KbT = Kb.T.astype(mm_dtype)                            # one transpose / batch elem
        heads = []
        for h in range(nhead):
            lo, hi = h * Dh, (h + 1) * Dh
            # scale already folded into the Q projection
            s = jnp.dot(Qbm[:, lo:hi], KbT[lo:hi, :],
                        preferred_element_type=jnp.float32)    # (tq, tk)
            s = s - jnp.max(s, axis=-1, keepdims=True)
            p = jnp.exp(s)
            p = p * pl.reciprocal(jnp.sum(p, axis=-1, keepdims=True), approx=True)
            heads.append(jnp.dot(p.astype(mm_dtype), Vbm[:, lo:hi],
                                 preferred_element_type=jnp.float32))
        ctx_blocks.append(jnp.concatenate(heads, axis=-1))      # (tq, D)
    ctx = jnp.concatenate(ctx_blocks, axis=0) if bb > 1 else ctx_blocks[0]

    # --- single full-width output projection (one K=128 MXU pass) -----------
    attn = jnp.dot(ctx.astype(mm_dtype), w_out[...],
                   preferred_element_type=jnp.float32) + b_out[:, :]

    # --- residual + LayerNorm (f32, biased variance = torch semantics) ------
    x = q + attn
    mu = jnp.mean(x, axis=-1, keepdims=True)
    var = jnp.mean(jnp.square(x - mu), axis=-1, keepdims=True)
    x = (x - mu) * jax.lax.rsqrt(var + eps) * gamma[:, :] + beta[:, :]

    # --- residual feed-forward (Dropout is identity in eval mode) -----------
    xm = x.astype(mm_dtype)
    h1 = jnp.dot(xm, w1[...], preferred_element_type=jnp.float32) + b1[:, :]
    h1 = _gelu_exact(h1)
    y = x + jnp.dot(h1.astype(mm_dtype), w2[...],
                    preferred_element_type=jnp.float32) + b2[:, :]
    return y


def _cross_modal_kernel(
        a_ref, v_ref,
        # audio<-visual attention + norm_a + ff_a
        a2v_win, a2v_bin, a2v_wo, a2v_bo, na_g, na_b,
        ffa_w1, ffa_b1, ffa_w2, ffa_b2,
        # visual<-audio attention + norm_v + ff_v
        v2a_win, v2a_bin, v2a_wo, v2a_bo, nv_g, nv_b,
        ffv_w1, ffv_b1, ffv_w2, ffv_b2,
        a_out_ref, v_out_ref, *, bb, ta, tv, nhead, eps, mm_dtype):
    audio = a_ref[...].astype(jnp.float32)      # (bb*ta, D)
    visual = v_ref[...].astype(jnp.float32)     # (bb*tv, D)

    a_new = _attn_ff_block(audio, visual,
                           a2v_win, a2v_bin, a2v_wo, a2v_bo, na_g, na_b,
                           ffa_w1, ffa_b1, ffa_w2, ffa_b2,
                           bb=bb, tq=ta, tk=tv, nhead=nhead, eps=eps,
                           mm_dtype=mm_dtype)
    # Second direction consumes the *updated* audio features (kept in VMEM).
    v_new = _attn_ff_block(visual, a_new,
                           v2a_win, v2a_bin, v2a_wo, v2a_bo, nv_g, nv_b,
                           ffv_w1, ffv_b1, ffv_w2, ffv_b2,
                           bb=bb, tq=tv, tk=ta, nhead=nhead, eps=eps,
                           mm_dtype=mm_dtype)

    a_out_ref[...] = a_new.astype(a_out_ref.dtype)
    v_out_ref[...] = v_new.astype(v_out_ref.dtype)


# ----------------------------------------------------------------------------
# Wrapper
# ----------------------------------------------------------------------------
def _pick_batch_block(B, Ta, Tv, target_rows=256):
    """Largest bb dividing B with bb*max(Ta,Tv) <= target_rows, keeping >= 2
    grid steps when B > 1 (v7x: both TensorCores get work) and 8-row-aligned
    activation blocks."""
    T = max(Ta, Tv)
    bb = 1
    for cand in range(1, B + 1):
        if B % cand:
            continue
        if cand * T > target_rows:
            break
        aligned = (cand == B) or (cand * Ta % 8 == 0 and cand * Tv % 8 == 0)
        splits = (B == 1) or (B // cand >= 2)
        if aligned and splits:
            bb = cand
    return bb


@functools.partial(jax.jit,
                   static_argnames=("nhead", "eps", "matmul_dtype", "target_rows"))
def cross_modal_attention(audio_feat, visual_feat, params, *, nhead=8, eps=1e-5,
                          matmul_dtype=jnp.bfloat16, target_rows=256):
    """audio_feat: (B, Ta, D), visual_feat: (B, Tv, D) -> (audio_out, visual_out)."""
    B, Ta, D = audio_feat.shape
    Bv, Tv, Dv = visual_feat.shape
    assert B == Bv and D == Dv and D % nhead == 0

    bb = _pick_batch_block(B, Ta, Tv, target_rows)
    steps = B // bb

    Dh = D // nhead
    scale = 1.0 / math.sqrt(Dh)

    # Fold the 1/sqrt(Dh) score scale into the Q projection (weights + bias),
    # then cast matmul weights to the MXU-native dtype once (halves their DMA).
    def prep_attn(p):
        w_in = jnp.concatenate([p["w_in"][:, :D] * scale, p["w_in"][:, D:]], axis=1)
        b_in = jnp.concatenate([p["b_in"][:, :D] * scale, p["b_in"][:, D:]], axis=1)
        return (w_in.astype(matmul_dtype), b_in,
                p["w_out"].astype(matmul_dtype), p["b_out"])

    def prep_ff(p):
        return (p["w1"].astype(matmul_dtype), p["b1"],
                p["w2"].astype(matmul_dtype), p["b2"])

    flat = [*prep_attn(params["a2v"]),
            params["norm_a"]["gamma"], params["norm_a"]["beta"],
            *prep_ff(params["ff_a"]),
            *prep_attn(params["v2a"]),
            params["norm_v"]["gamma"], params["norm_v"]["beta"],
            *prep_ff(params["ff_v"])]

    def rep_spec(arr):
        n = arr.ndim
        return pl.BlockSpec(tuple(arr.shape), lambda g, _n=n: (0,) * _n)

    # Present activations to the kernel as lane-dense (rows, D) slabs so each
    # grid step carries bb*T rows through the projection / FF matmuls.
    a2 = audio_feat.reshape(B * Ta, D)
    v2 = visual_feat.reshape(B * Tv, D)

    kernel = functools.partial(_cross_modal_kernel, bb=bb, ta=Ta, tv=Tv,
                               nhead=nhead, eps=eps, mm_dtype=matmul_dtype)

    a_out, v_out = pl.pallas_call(
        kernel,
        out_shape=(jax.ShapeDtypeStruct((B * Ta, D), audio_feat.dtype),
                   jax.ShapeDtypeStruct((B * Tv, D), visual_feat.dtype)),
        grid_spec=pltpu.PrefetchScalarGridSpec(
            num_scalar_prefetch=0,
            grid=(steps,),
            in_specs=[pl.BlockSpec((bb * Ta, D), lambda g: (g, 0)),
                      pl.BlockSpec((bb * Tv, D), lambda g: (g, 0))]
                     + [rep_spec(p) for p in flat],
            out_specs=[pl.BlockSpec((bb * Ta, D), lambda g: (g, 0)),
                       pl.BlockSpec((bb * Tv, D), lambda g: (g, 0))],
        ),
        compiler_params=pltpu.CompilerParams(
            dimension_semantics=("parallel",)),
    )(a2, v2, *flat)

    return a_out.reshape(B, Ta, D), v_out.reshape(B, Tv, D)


# ----------------------------------------------------------------------------
# Parameter construction (PyTorch-equivalent shapes, stored transposed for
# right-multiplication: x @ W + b)
# ----------------------------------------------------------------------------
def init_params(key, d_model, nhead):
    D = d_model
    H4 = 4 * D
    keys = iter(jax.random.split(key, 24))

    def attn_block():
        w_in = jax.random.normal(next(keys), (D, 3 * D), jnp.float32) / math.sqrt(D)
        b_in = 0.01 * jax.random.normal(next(keys), (1, 3 * D), jnp.float32)
        w_out = jax.random.normal(next(keys), (D, D), jnp.float32) / math.sqrt(D)
        b_out = 0.01 * jax.random.normal(next(keys), (1, D), jnp.float32)
        return dict(w_in=w_in, b_in=b_in, w_out=w_out, b_out=b_out)

    def norm_block():
        gamma = 1.0 + 0.05 * jax.random.normal(next(keys), (1, D), jnp.float32)
        beta = 0.05 * jax.random.normal(next(keys), (1, D), jnp.float32)
        return dict(gamma=gamma, beta=beta)

    def ff_block():
        w1 = jax.random.normal(next(keys), (D, H4), jnp.float32) / math.sqrt(D)
        b1 = 0.01 * jax.random.normal(next(keys), (1, H4), jnp.float32)
        w2 = jax.random.normal(next(keys), (H4, D), jnp.float32) / math.sqrt(H4)
        b2 = 0.01 * jax.random.normal(next(keys), (1, D), jnp.float32)
        return dict(w1=w1, b1=b1, w2=w2, b2=b2)

    return dict(a2v=attn_block(), norm_a=norm_block(), ff_a=ff_block(),
                v2a=attn_block(), norm_v=norm_block(), ff_v=ff_block())


# ----------------------------------------------------------------------------
# Pure-JAX reference (mirrors nn.MultiheadAttention / LayerNorm / FF, eval mode).
# mm_dtype=float32 -> HIGHEST-precision reference matching the PyTorch module;
# mm_dtype=bfloat16 -> mirrors the kernel's cast points (f32 accumulation).
# ----------------------------------------------------------------------------
_HI = jax.lax.Precision.HIGHEST


def _mm_ref(x, w, mm_dtype):
    prec = _HI if mm_dtype == jnp.float32 else None
    return jnp.einsum('...d,de->...e', x.astype(mm_dtype), w.astype(mm_dtype),
                      precision=prec, preferred_element_type=jnp.float32)


def _mha_ref(q, kv, w_in, b_in, w_out, b_out, nhead, mm_dtype):
    B, Tq, D = q.shape
    Tk = kv.shape[1]
    Dh = D // nhead
    qp = _mm_ref(q, w_in[:, :D], mm_dtype) + b_in[0, :D]
    kp = _mm_ref(kv, w_in[:, D:2 * D], mm_dtype) + b_in[0, D:2 * D]
    vp = _mm_ref(kv, w_in[:, 2 * D:], mm_dtype) + b_in[0, 2 * D:]
    qh = qp.reshape(B, Tq, nhead, Dh).transpose(0, 2, 1, 3)
    kh = kp.reshape(B, Tk, nhead, Dh).transpose(0, 2, 1, 3)
    vh = vp.reshape(B, Tk, nhead, Dh).transpose(0, 2, 1, 3)
    prec = _HI if mm_dtype == jnp.float32 else None
    s = jnp.einsum('bhqd,bhkd->bhqk', qh.astype(mm_dtype), kh.astype(mm_dtype),
                   precision=prec, preferred_element_type=jnp.float32) / math.sqrt(Dh)
    p = jax.nn.softmax(s, axis=-1)
    ctx = jnp.einsum('bhqk,bhkd->bhqd', p.astype(mm_dtype), vh.astype(mm_dtype),
                     precision=prec, preferred_element_type=jnp.float32)
    ctx = ctx.transpose(0, 2, 1, 3).reshape(B, Tq, D)
    return _mm_ref(ctx, w_out, mm_dtype) + b_out[0]


def _layer_norm_ref(x, gamma, beta, eps):
    mu = jnp.mean(x, axis=-1, keepdims=True)
    var = jnp.mean(jnp.square(x - mu), axis=-1, keepdims=True)
    return (x - mu) / jnp.sqrt(var + eps) * gamma[0] + beta[0]


def _ff_ref(x, p, mm_dtype):
    h = _mm_ref(x, p["w1"], mm_dtype) + p["b1"][0]
    h = jax.nn.gelu(h, approximate=False)          # exact GELU, like nn.GELU()
    return _mm_ref(h, p["w2"], mm_dtype) + p["b2"][0]


def cross_modal_attention_ref(audio, visual, params, nhead=8, eps=1e-5,
                              mm_dtype=jnp.float32):
    a_enh = _mha_ref(audio, visual, params["a2v"]["w_in"], params["a2v"]["b_in"],
                     params["a2v"]["w_out"], params["a2v"]["b_out"], nhead, mm_dtype)
    a = _layer_norm_ref(audio + a_enh,
                        params["norm_a"]["gamma"], params["norm_a"]["beta"], eps)
    a = a + _ff_ref(a, params["ff_a"], mm_dtype)
    v_enh = _mha_ref(visual, a, params["v2a"]["w_in"], params["v2a"]["b_in"],
                     params["v2a"]["w_out"], params["v2a"]["b_out"], nhead, mm_dtype)
    v = _layer_norm_ref(visual + v_enh,
                        params["norm_v"]["gamma"], params["norm_v"]["beta"], eps)
    v = v + _ff_ref(v, params["ff_v"], mm_dtype)
    return a, v


# ----------------------------------------------------------------------------
if __name__ == "__main__":
    # Small shapes consistent with the module: d_model=128, nhead=8 (head=16),
    # batch=2, seq_audio=8, seq_visual=8.
    B, Ta, Tv = 2, 8, 8
    d_model, nhead = 128, 8

    key = jax.random.PRNGKey(0)
    ka, kv_, kp = jax.random.split(key, 3)
    audio = jax.random.normal(ka, (B, Ta, d_model), jnp.float32)
    visual = jax.random.normal(kv_, (B, Tv, d_model), jnp.float32)
    params = init_params(kp, d_model, nhead)

    a_out, v_out = cross_modal_attention(audio, visual, params, nhead=nhead)
    a_out, v_out = jax.block_until_ready((a_out, v_out))

    assert a_out.shape == (B, Ta, d_model), a_out.shape
    assert v_out.shape == (B, Tv, d_model), v_out.shape

    # Tight check vs. a reference that mirrors the kernel's bf16 matmul
    # operands / f32 accumulation (residual slack: approx-reciprocal softmax,
    # erf polynomial, accumulation order).
    a_bf, v_bf = cross_modal_attention_ref(audio, visual, params, nhead=nhead,
                                           mm_dtype=jnp.bfloat16)
    err_a = float(jnp.max(jnp.abs(a_out - a_bf)))
    err_v = float(jnp.max(jnp.abs(v_out - v_bf)))
    assert err_a < 3e-2 and err_v < 3e-2, (err_a, err_v)

    # Loose sanity check vs. the full-precision (PyTorch-numerics) reference;
    # the gap here is the expected bf16-operand quantization.
    a_f32, v_f32 = cross_modal_attention_ref(audio, visual, params, nhead=nhead,
                                             mm_dtype=jnp.float32)
    sanity_a = float(jnp.max(jnp.abs(a_out - a_f32)))
    sanity_v = float(jnp.max(jnp.abs(v_out - v_f32)))
    assert sanity_a < 0.5 and sanity_v < 0.5, (sanity_a, sanity_v)

    print("KERNEL_OK")
</pallas_src>

<mosaic_0001>
module attributes {stable_mosaic.version = 11 : i64} {
  func.func @_cross_modal_kernel(%arg0: i32, %arg1: memref<8x128xf32, #tpu.memory_space<vmem>>, %arg2: memref<8x128xf32, #tpu.memory_space<vmem>>, %arg3: memref<128x384xbf16, #tpu.memory_space<vmem>>, %arg4: memref<1x384xf32, #tpu.memory_space<vmem>>, %arg5: memref<128x128xbf16, #tpu.memory_space<vmem>>, %arg6: memref<1x128xf32, #tpu.memory_space<vmem>>, %arg7: memref<1x128xf32, #tpu.memory_space<vmem>>, %arg8: memref<1x128xf32, #tpu.memory_space<vmem>>, %arg9: memref<128x512xbf16, #tpu.memory_space<vmem>>, %arg10: memref<1x512xf32, #tpu.memory_space<vmem>>, %arg11: memref<512x128xbf16, #tpu.memory_space<vmem>>, %arg12: memref<1x128xf32, #tpu.memory_space<vmem>>, %arg13: memref<128x384xbf16, #tpu.memory_space<vmem>>, %arg14: memref<1x384xf32, #tpu.memory_space<vmem>>, %arg15: memref<128x128xbf16, #tpu.memory_space<vmem>>, %arg16: memref<1x128xf32, #tpu.memory_space<vmem>>, %arg17: memref<1x128xf32, #tpu.memory_space<vmem>>, %arg18: memref<1x128xf32, #tpu.memory_space<vmem>>, %arg19: memref<128x512xbf16, #tpu.memory_space<vmem>>, %arg20: memref<1x512xf32, #tpu.memory_space<vmem>>, %arg21: memref<512x128xbf16, #tpu.memory_space<vmem>>, %arg22: memref<1x128xf32, #tpu.memory_space<vmem>>, %arg23: memref<8x128xf32, #tpu.memory_space<vmem>>, %arg24: memref<8x128xf32, #tpu.memory_space<vmem>>) attributes {dimension_semantics = [#tpu.dimension_semantics<parallel>], iteration_bounds = array<i64: 2>, scalar_prefetch = 0 : i64, scratch_operands = 0 : i64, tpu.core_type = #tpu.core_type<tc>, window_params = [{transform_indices = @transform_0, window_bounds = array<i64: 8, 128>}, {transform_indices = @transform_1, window_bounds = array<i64: 8, 128>}, {pipeline_mode = #tpu.pipeline_mode<synchronous>, transform_indices = @transform_2, window_bounds = array<i64: 128, 384>}, {pipeline_mode = #tpu.pipeline_mode<synchronous>, transform_indices = @transform_3, window_bounds = array<i64: 1, 384>}, {pipeline_mode = #tpu.pipeline_mode<synchronous>, transform_indices = @transform_4, window_bounds = array<i64: 128, 128>}, {pipeline_mode = #tpu.pipeline_mode<synchronous>, transform_indices = @transform_5, window_bounds = array<i64: 1, 128>}, {pipeline_mode = #tpu.pipeline_mode<synchronous>, transform_indices = @transform_6, window_bounds = array<i64: 1, 128>}, {pipeline_mode = #tpu.pipeline_mode<synchronous>, transform_indices = @transform_7, window_bounds = array<i64: 1, 128>}, {pipeline_mode = #tpu.pipeline_mode<synchronous>, transform_indices = @transform_8, window_bounds = array<i64: 128, 512>}, {pipeline_mode = #tpu.pipeline_mode<synchronous>, transform_indices = @transform_9, window_bounds = array<i64: 1, 512>}, {pipeline_mode = #tpu.pipeline_mode<synchronous>, transform_indices = @transform_10, window_bounds = array<i64: 512, 128>}, {pipeline_mode = #tpu.pipeline_mode<synchronous>, transform_indices = @transform_11, window_bounds = array<i64: 1, 128>}, {pipeline_mode = #tpu.pipeline_mode<synchronous>, transform_indices = @transform_12, window_bounds = array<i64: 128, 384>}, {pipeline_mode = #tpu.pipeline_mode<synchronous>, transform_indices = @transform_13, window_bounds = array<i64: 1, 384>}, {pipeline_mode = #tpu.pipeline_mode<synchronous>, transform_indices = @transform_14, window_bounds = array<i64: 128, 128>}, {pipeline_mode = #tpu.pipeline_mode<synchronous>, transform_indices = @transform_15, window_bounds = array<i64: 1, 128>}, {pipeline_mode = #tpu.pipeline_mode<synchronous>, transform_indices = @transform_16, window_bounds = array<i64: 1, 128>}, {pipeline_mode = #tpu.pipeline_mode<synchronous>, transform_indices = @transform_17, window_bounds = array<i64: 1, 128>}, {pipeline_mode = #tpu.pipeline_mode<synchronous>, transform_indices = @transform_18, window_bounds = array<i64: 128, 512>}, {pipeline_mode = #tpu.pipeline_mode<synchronous>, transform_indices = @transform_19, window_bounds = array<i64: 1, 512>}, {pipeline_mode = #tpu.pipeline_mode<synchronous>, transform_indices = @transform_20, window_bounds = array<i64: 512, 128>}, {pipeline_mode = #tpu.pipeline_mode<synchronous>, transform_indices = @transform_21, window_bounds = array<i64: 1, 128>}, {transform_indices = @transform_22, window_bounds = array<i64: 8, 128>}, {transform_indices = @transform_23, window_bounds = array<i64: 8, 128>}]} {
    %c0 = arith.constant 0 : index
    %c0_0 = arith.constant 0 : index
    %0 = vector.load %arg1[%c0, %c0_0] : memref<8x128xf32, #tpu.memory_space<vmem>>, vector<8x128xf32>
    %c0_1 = arith.constant 0 : index
    %c0_2 = arith.constant 0 : index
    %1 = vector.load %arg2[%c0_1, %c0_2] : memref<8x128xf32, #tpu.memory_space<vmem>>, vector<8x128xf32>
    %2 = arith.truncf %0 : vector<8x128xf32> to vector<8x128xbf16>
    %3 = arith.truncf %1 : vector<8x128xf32> to vector<8x128xbf16>
    %c0_3 = arith.constant 0 : index
    %c0_4 = arith.constant 0 : index
    %4 = vector.load %arg3[%c0_3, %c0_4] : memref<128x384xbf16, #tpu.memory_space<vmem>>, vector<128x128xbf16>
    %cst = arith.constant dense<0.000000e+00> : vector<8x128xf32>
    %5 = tpu.matmul %2, %4, %cst {dimension_numbers = #tpu.dot_dimension_numbers<[1], [0], [0], [1], [0, 0, 1, 1], [], []>} : vector<8x128xbf16>, vector<128x128xbf16>, vector<8x128xf32> -> vector<8x128xf32>
    %c0_5 = arith.constant 0 : index
    %c0_6 = arith.constant 0 : index
    %6 = vector.load %arg4[%c0_5, %c0_6] : memref<1x384xf32, #tpu.memory_space<vmem>>, vector<1x128xf32>
    %7 = vector.broadcast %6 : vector<1x128xf32> to vector<8x128xf32>
    %8 = arith.addf %5, %7 : vector<8x128xf32>
    %c0_7 = arith.constant 0 : index
    %c128 = arith.constant 128 : index
    %9 = vector.load %arg3[%c0_7, %c128] : memref<128x384xbf16, #tpu.memory_space<vmem>>, vector<128x128xbf16>
    %cst_8 = arith.constant dense<0.000000e+00> : vector<8x128xf32>
    %10 = tpu.matmul %3, %9, %cst_8 {dimension_numbers = #tpu.dot_dimension_numbers<[1], [0], [0], [1], [0, 0, 1, 1], [], []>} : vector<8x128xbf16>, vector<128x128xbf16>, vector<8x128xf32> -> vector<8x128xf32>
    %c0_9 = arith.constant 0 : index
    %c128_10 = arith.constant 128 : index
    %11 = vector.load %arg4[%c0_9, %c128_10] : memref<1x384xf32, #tpu.memory_space<vmem>>, vector<1x128xf32>
    %12 = vector.broadcast %11 : vector<1x128xf32> to vector<8x128xf32>
    %13 = arith.addf %10, %12 : vector<8x128xf32>
    %c0_11 = arith.constant 0 : index
    %c256 = arith.constant 256 : index
    %14 = vector.load %arg3[%c0_11, %c256] : memref<128x384xbf16, #tpu.memory_space<vmem>>, vector<128x128xbf16>
    %cst_12 = arith.constant dense<0.000000e+00> : vector<8x128xf32>
    %15 = tpu.matmul %3, %14, %cst_12 {dimension_numbers = #tpu.dot_dimension_numbers<[1], [0], [0], [1], [0, 0, 1, 1], [], []>} : vector<8x128xbf16>, vector<128x128xbf16>, vector<8x128xf32> -> vector<8x128xf32>
    %c0_13 = arith.constant 0 : index
    %c256_14 = arith.constant 256 : index
    %16 = vector.load %arg4[%c0_13, %c256_14] : memref<1x384xf32, #tpu.memory_space<vmem>>, vector<1x128xf32>
    %17 = vector.broadcast %16 : vector<1x128xf32> to vector<8x128xf32>
    %18 = arith.addf %15, %17 : vector<8x128xf32>
    %19 = arith.truncf %8 : vector<8x128xf32> to vector<8x128xbf16>
    %20 = arith.truncf %18 : vector<8x128xf32> to vector<8x128xbf16>
    %21 = tpu.transpose %13, [1, 0] : vector<8x128xf32> -> vector<128x8xf32>
    %22 = arith.truncf %21 : vector<128x8xf32> to vector<128x8xbf16>
    %23 = vector.extract_strided_slice %19 {offsets = [0, 0], sizes = [8, 16], strides = [1, 1]} : vector<8x128xbf16> to vector<8x16xbf16>
    %24 = vector.extract_strided_slice %22 {offsets = [0, 0], sizes = [16, 8], strides = [1, 1]} : vector<128x8xbf16> to vector<16x8xbf16>
    %cst_15 = arith.constant dense<0.000000e+00> : vector<8x8xf32>
    %25 = tpu.matmul %23, %24, %cst_15 {dimension_numbers = #tpu.dot_dimension_numbers<[1], [0], [0], [1], [0, 0, 1, 1], [], []>} : vector<8x16xbf16>, vector<16x8xbf16>, vector<8x8xf32> -> vector<8x8xf32>
    %cst_16 = arith.constant dense<0xFF800000> : vector<8xf32>
    %26 = vector.multi_reduction <maximumf>, %25, %cst_16 [1] : vector<8x8xf32> to vector<8xf32>
    %27 = vector.shape_cast %26 : vector<8xf32> to vector<8x1xf32>
    %28 = vector.broadcast %27 : vector<8x1xf32> to vector<8x8xf32>
    %29 = arith.subf %25, %28 : vector<8x8xf32>
    %30 = math.exp %29 : vector<8x8xf32>
    %cst_17 = arith.constant dense<0.000000e+00> : vector<8xf32>
    %31 = vector.multi_reduction <add>, %30, %cst_17 [1] : vector<8x8xf32> to vector<8xf32>
    %32 = vector.shape_cast %31 : vector<8xf32> to vector<8x1xf32>
    %33 = tpu.reciprocal %32 {approx = true} : vector<8x1xf32> -> vector<8x1xf32>
    %34 = vector.broadcast %33 : vector<8x1xf32> to vector<8x8xf32>
    %35 = arith.mulf %30, %34 : vector<8x8xf32>
    %36 = arith.truncf %35 : vector<8x8xf32> to vector<8x8xbf16>
    %37 = vector.extract_strided_slice %20 {offsets = [0, 0], sizes = [8, 16], strides = [1, 1]} : vector<8x128xbf16> to vector<8x16xbf16>
    %cst_18 = arith.constant dense<0.000000e+00> : vector<8x16xf32>
    %38 = tpu.matmul %36, %37, %cst_18 {dimension_numbers = #tpu.dot_dimension_numbers<[1], [0], [0], [1], [0, 0, 1, 1], [], []>} : vector<8x8xbf16>, vector<8x16xbf16>, vector<8x16xf32> -> vector<8x16xf32>
    %39 = vector.extract_strided_slice %19 {offsets = [0, 16], sizes = [8, 16], strides = [1, 1]} : vector<8x128xbf16> to vector<8x16xbf16>
    %40 = vector.extract_strided_slice %22 {offsets = [16, 0], sizes = [16, 8], strides = [1, 1]} : vector<128x8xbf16> to vector<16x8xbf16>
    %cst_19 = arith.constant dense<0.000000e+00> : vector<8x8xf32>
    %41 = tpu.matmul %39, %40, %cst_19 {dimension_numbers = #tpu.dot_dimension_numbers<[1], [0], [0], [1], [0, 0, 1, 1], [], []>} : vector<8x16xbf16>, vector<16x8xbf16>, vector<8x8xf32> -> vector<8x8xf32>
    %cst_20 = arith.constant dense<0xFF800000> : vector<8xf32>
    %42 = vector.multi_reduction <maximumf>, %41, %cst_20 [1] : vector<8x8xf32> to vector<8xf32>
    %43 = vector.shape_cast %42 : vector<8xf32> to vector<8x1xf32>
    %44 = vector.broadcast %43 : vector<8x1xf32> to vector<8x8xf32>
    %45 = arith.subf %41, %44 : vector<8x8xf32>
    %46 = math.exp %45 : vector<8x8xf32>
    %cst_21 = arith.constant dense<0.000000e+00> : vector<8xf32>
    %47 = vector.multi_reduction <add>, %46, %cst_21 [1] : vector<8x8xf32> to vector<8xf32>
    %48 = vector.shape_cast %47 : vector<8xf32> to vector<8x1xf32>
    %49 = tpu.reciprocal %48 {approx = true} : vector<8x1xf32> -> vector<8x1xf32>
    %50 = vector.broadcast %49 : vector<8x1xf32> to vector<8x8xf32>
    %51 = arith.mulf %46, %50 : vector<8x8xf32>
    %52 = arith.truncf %51 : vector<8x8xf32> to vector<8x8xbf16>
    %53 = vector.extract_strided_slice %20 {offsets = [0, 16], sizes = [8, 16], strides = [1, 1]} : vector<8x128xbf16> to vector<8x16xbf16>
    %cst_22 = arith.constant dense<0.000000e+00> : vector<8x16xf32>
    %54 = tpu.matmul %52, %53, %cst_22 {dimension_numbers = #tpu.dot_dimension_numbers<[1], [0], [0], [1], [0, 0, 1, 1], [], []>} : vector<8x8xbf16>, vector<8x16xbf16>, vector<8x16xf32> -> vector<8x16xf32>
    %55 = vector.extract_strided_slice %19 {offsets = [0, 32], sizes = [8, 16], strides = [1, 1]} : vector<8x128xbf16> to vector<8x16xbf16>
    %56 = vector.extract_strided_slice %22 {offsets = [32, 0], sizes = [16, 8], strides = [1, 1]} : vector<128x8xbf16> to vector<16x8xbf16>
    %cst_23 = arith.constant dense<0.000000e+00> : vector<8x8xf32>
    %57 = tpu.matmul %55, %56, %cst_23 {dimension_numbers = #tpu.dot_dimension_numbers<[1], [0], [0], [1], [0, 0, 1, 1], [], []>} : vector<8x16xbf16>, vector<16x8xbf16>, vector<8x8xf32> -> vector<8x8xf32>
    %cst_24 = arith.constant dense<0xFF800000> : vector<8xf32>
    %58 = vector.multi_reduction <maximumf>, %57, %cst_24 [1] : vector<8x8xf32> to vector<8xf32>
    %59 = vector.shape_cast %58 : vector<8xf32> to vector<8x1xf32>
    %60 = vector.broadcast %59 : vector<8x1xf32> to vector<8x8xf32>
    %61 = arith.subf %57, %60 : vector<8x8xf32>
    %62 = math.exp %61 : vector<8x8xf32>
    %cst_25 = arith.constant dense<0.000000e+00> : vector<8xf32>
    %63 = vector.multi_reduction <add>, %62, %cst_25 [1] : vector<8x8xf32> to vector<8xf32>
    %64 = vector.shape_cast %63 : vector<8xf32> to vector<8x1xf32>
    %65 = tpu.reciprocal %64 {approx = true} : vector<8x1xf32> -> vector<8x1xf32>
    %66 = vector.broadcast %65 : vector<8x1xf32> to vector<8x8xf32>
    %67 = arith.mulf %62, %66 : vector<8x8xf32>
    %68 = arith.truncf %67 : vector<8x8xf32> to vector<8x8xbf16>
    %69 = vector.extract_strided_slice %20 {offsets = [0, 32], sizes = [8, 16], strides = [1, 1]} : vector<8x128xbf16> to vector<8x16xbf16>
    %cst_26 = arith.constant dense<0.000000e+00> : vector<8x16xf32>
    %70 = tpu.matmul %68, %69, %cst_26 {dimension_numbers = #tpu.dot_dimension_numbers<[1], [0], [0], [1], [0, 0, 1, 1], [], []>} : vector<8x8xbf16>, vector<8x16xbf16>, vector<8x16xf32> -> vector<8x16xf32>
    %71 = vector.extract_strided_slice %19 {offsets = [0, 48], sizes = [8, 16], strides = [1, 1]} : vector<8x128xbf16> to vector<8x16xbf16>
    %72 = vector.extract_strided_slice %22 {offsets = [48, 0], sizes = [16, 8], strides = [1, 1]} : vector<128x8xbf16> to vector<16x8xbf16>
    %cst_27 = arith.constant dense<0.000000e+00> : vector<8x8xf32>
    %73 = tpu.matmul %71, %72, %cst_27 {dimension_numbers = #tpu.dot_dimension_numbers<[1], [0], [0], [1], [0, 0, 1, 1], [], []>} : vector<8x16xbf16>, vector<16x8xbf16>, vector<8x8xf32> -> vector<8x8xf32>
    %cst_28 = arith.constant dense<0xFF800000> : vector<8xf32>
    %74 = vector.multi_reduction <maximumf>, %73, %cst_28 [1] : vector<8x8xf32> to vector<8xf32>
    %75 = vector.shape_cast %74 : vector<8xf32> to vector<8x1xf32>
    %76 = vector.broadcast %75 : vector<8x1xf32> to vector<8x8xf32>
    %77 = arith.subf %73, %76 : vector<8x8xf32>
    %78 = math.exp %77 : vector<8x8xf32>
    %cst_29 = arith.constant dense<0.000000e+00> : vector<8xf32>
    %79 = vector.multi_reduction <add>, %78, %cst_29 [1] : vector<8x8xf32> to vector<8xf32>
    %80 = vector.shape_cast %79 : vector<8xf32> to vector<8x1xf32>
    %81 = tpu.reciprocal %80 {approx = true} : vector<8x1xf32> -> vector<8x1xf32>
    %82 = vector.broadcast %81 : vector<8x1xf32> to vector<8x8xf32>
    %83 = arith.mulf %78, %82 : vector<8x8xf32>
    %84 = arith.truncf %83 : vector<8x8xf32> to vector<8x8xbf16>
    %85 = vector.extract_strided_slice %20 {offsets = [0, 48], sizes = [8, 16], strides = [1, 1]} : vector<8x128xbf16> to vector<8x16xbf16>
    %cst_30 = arith.constant dense<0.000000e+00> : vector<8x16xf32>
    %86 = tpu.matmul %84, %85, %cst_30 {dimension_numbers = #tpu.dot_dimension_numbers<[1], [0], [0], [1], [0, 0, 1, 1], [], []>} : vector<8x8xbf16>, vector<8x16xbf16>, vector<8x16xf32> -> vector<8x16xf32>
    %87 = vector.extract_strided_slice %19 {offsets = [0, 64], sizes = [8, 16], strides = [1, 1]} : vector<8x128xbf16> to vector<8x16xbf16>
    %88 = vector.extract_strided_slice %22 {offsets = [64, 0], sizes = [16, 8], strides = [1, 1]} : vector<128x8xbf16> to vector<16x8xbf16>
    %cst_31 = arith.constant dense<0.000000e+00> : vector<8x8xf32>
    %89 = tpu.matmul %87, %88, %cst_31 {dimension_numbers = #tpu.dot_dimension_numbers<[1], [0], [0], [1], [0, 0, 1, 1], [], []>} : vector<8x16xbf16>, vector<16x8xbf16>, vector<8x8xf32> -> vector<8x8xf32>
    %cst_32 = arith.constant dense<0xFF800000> : vector<8xf32>
    %90 = vector.multi_reduction <maximumf>, %89, %cst_32 [1] : vector<8x8xf32> to vector<8xf32>
    %91 = vector.shape_cast %90 : vector<8xf32> to vector<8x1xf32>
    %92 = vector.broadcast %91 : vector<8x1xf32> to vector<8x8xf32>
    %93 = arith.subf %89, %92 : vector<8x8xf32>
    %94 = math.exp %93 : vector<8x8xf32>
    %cst_33 = arith.constant dense<0.000000e+00> : vector<8xf32>
    %95 = vector.multi_reduction <add>, %94, %cst_33 [1] : vector<8x8xf32> to vector<8xf32>
    %96 = vector.shape_cast %95 : vector<8xf32> to vector<8x1xf32>
    %97 = tpu.reciprocal %96 {approx = true} : vector<8x1xf32> -> vector<8x1xf32>
    %98 = vector.broadcast %97 : vector<8x1xf32> to vector<8x8xf32>
    %99 = arith.mulf %94, %98 : vector<8x8xf32>
    %100 = arith.truncf %99 : vector<8x8xf32> to vector<8x8xbf16>
    %101 = vector.extract_strided_slice %20 {offsets = [0, 64], sizes = [8, 16], strides = [1, 1]} : vector<8x128xbf16> to vector<8x16xbf16>
    %cst_34 = arith.constant dense<0.000000e+00> : vector<8x16xf32>
    %102 = tpu.matmul %100, %101, %cst_34 {dimension_numbers = #tpu.dot_dimension_numbers<[1], [0], [0], [1], [0, 0, 1, 1], [], []>} : vector<8x8xbf16>, vector<8x16xbf16>, vector<8x16xf32> -> vector<8x16xf32>
    %103 = vector.extract_strided_slice %19 {offsets = [0, 80], sizes = [8, 16], strides = [1, 1]} : vector<8x128xbf16> to vector<8x16xbf16>
    %104 = vector.extract_strided_slice %22 {offsets = [80, 0], sizes = [16, 8], strides = [1, 1]} : vector<128x8xbf16> to vector<16x8xbf16>
    %cst_35 = arith.constant dense<0.000000e+00> : vector<8x8xf32>
    %105 = tpu.matmul %103, %104, %cst_35 {dimension_numbers = #tpu.dot_dimension_numbers<[1], [0], [0], [1], [0, 0, 1, 1], [], []>} : vector<8x16xbf16>, vector<16x8xbf16>, vector<8x8xf32> -> vector<8x8xf32>
    %cst_36 = arith.constant dense<0xFF800000> : vector<8xf32>
    %106 = vector.multi_reduction <maximumf>, %105, %cst_36 [1] : vector<8x8xf32> to vector<8xf32>
    %107 = vector.shape_cast %106 : vector<8xf32> to vector<8x1xf32>
    %108 = vector.broadcast %107 : vector<8x1xf32> to vector<8x8xf32>
    %109 = arith.subf %105, %108 : vector<8x8xf32>
    %110 = math.exp %109 : vector<8x8xf32>
    %cst_37 = arith.constant dense<0.000000e+00> : vector<8xf32>
    %111 = vector.multi_reduction <add>, %110, %cst_37 [1] : vector<8x8xf32> to vector<8xf32>
    %112 = vector.shape_cast %111 : vector<8xf32> to vector<8x1xf32>
    %113 = tpu.reciprocal %112 {approx = true} : vector<8x1xf32> -> vector<8x1xf32>
    %114 = vector.broadcast %113 : vector<8x1xf32> to vector<8x8xf32>
    %115 = arith.mulf %110, %114 : vector<8x8xf32>
    %116 = arith.truncf %115 : vector<8x8xf32> to vector<8x8xbf16>
    %117 = vector.extract_strided_slice %20 {offsets = [0, 80], sizes = [8, 16], strides = [1, 1]} : vector<8x128xbf16> to vector<8x16xbf16>
    %cst_38 = arith.constant dense<0.000000e+00> : vector<8x16xf32>
    %118 = tpu.matmul %116, %117, %cst_38 {dimension_numbers = #tpu.dot_dimension_numbers<[1], [0], [0], [1], [0, 0, 1, 1], [], []>} : vector<8x8xbf16>, vector<8x16xbf16>, vector<8x16xf32> -> vector<8x16xf32>
    %119 = vector.extract_strided_slice %19 {offsets = [0, 96], sizes = [8, 16], strides = [1, 1]} : vector<8x128xbf16> to vector<8x16xbf16>
    %120 = vector.extract_strided_slice %22 {offsets = [96, 0], sizes = [16, 8], strides = [1, 1]} : vector<128x8xbf16> to vector<16x8xbf16>
    %cst_39 = arith.constant dense<0.000000e+00> : vector<8x8xf32>
    %121 = tpu.matmul %119, %120, %cst_39 {dimension_numbers = #tpu.dot_dimension_numbers<[1], [0], [0], [1], [0, 0, 1, 1], [], []>} : vector<8x16xbf16>, vector<16x8xbf16>, vector<8x8xf32> -> vector<8x8xf32>
    %cst_40 = arith.constant dense<0xFF800000> : vector<8xf32>
    %122 = vector.multi_reduction <maximumf>, %121, %cst_40 [1] : vector<8x8xf32> to vector<8xf32>
    %123 = vector.shape_cast %122 : vector<8xf32> to vector<8x1xf32>
    %124 = vector.broadcast %123 : vector<8x1xf32> to vector<8x8xf32>
    %125 = arith.subf %121, %124 : vector<8x8xf32>
    %126 = math.exp %125 : vector<8x8xf32>
    %cst_41 = arith.constant dense<0.000000e+00> : vector<8xf32>
    %127 = vector.multi_reduction <add>, %126, %cst_41 [1] : vector<8x8xf32> to vector<8xf32>
    %128 = vector.shape_cast %127 : vector<8xf32> to vector<8x1xf32>
    %129 = tpu.reciprocal %128 {approx = true} : vector<8x1xf32> -> vector<8x1xf32>
    %130 = vector.broadcast %129 : vector<8x1xf32> to vector<8x8xf32>
    %131 = arith.mulf %126, %130 : vector<8x8xf32>
    %132 = arith.truncf %131 : vector<8x8xf32> to vector<8x8xbf16>
    %133 = vector.extract_strided_slice %20 {offsets = [0, 96], sizes = [8, 16], strides = [1, 1]} : vector<8x128xbf16> to vector<8x16xbf16>
    %cst_42 = arith.constant dense<0.000000e+00> : vector<8x16xf32>
    %134 = tpu.matmul %132, %133, %cst_42 {dimension_numbers = #tpu.dot_dimension_numbers<[1], [0], [0], [1], [0, 0, 1, 1], [], []>} : vector<8x8xbf16>, vector<8x16xbf16>, vector<8x16xf32> -> vector<8x16xf32>
    %135 = vector.extract_strided_slice %19 {offsets = [0, 112], sizes = [8, 16], strides = [1, 1]} : vector<8x128xbf16> to vector<8x16xbf16>
    %136 = vector.extract_strided_slice %22 {offsets = [112, 0], sizes = [16, 8], strides = [1, 1]} : vector<128x8xbf16> to vector<16x8xbf16>
    %cst_43 = arith.constant dense<0.000000e+00> : vector<8x8xf32>
    %137 = tpu.matmul %135, %136, %cst_43 {dimension_numbers = #tpu.dot_dimension_numbers<[1], [0], [0], [1], [0, 0, 1, 1], [], []>} : vector<8x16xbf16>, vector<16x8xbf16>, vector<8x8xf32> -> vector<8x8xf32>
    %cst_44 = arith.constant dense<0xFF800000> : vector<8xf32>
    %138 = vector.multi_reduction <maximumf>, %137, %cst_44 [1] : vector<8x8xf32> to vector<8xf32>
    %139 = vector.shape_cast %138 : vector<8xf32> to vector<8x1xf32>
    %140 = vector.broadcast %139 : vector<8x1xf32> to vector<8x8xf32>
    %141 = arith.subf %137, %140 : vector<8x8xf32>
    %142 = math.exp %141 : vector<8x8xf32>
    %cst_45 = arith.constant dense<0.000000e+00> : vector<8xf32>
    %143 = vector.multi_reduction <add>, %142, %cst_45 [1] : vector<8x8xf32> to vector<8xf32>
    %144 = vector.shape_cast %143 : vector<8xf32> to vector<8x1xf32>
    %145 = tpu.reciprocal %144 {approx = true} : vector<8x1xf32> -> vector<8x1xf32>
    %146 = vector.broadcast %145 : vector<8x1xf32> to vector<8x8xf32>
    %147 = arith.mulf %142, %146 : vector<8x8xf32>
    %148 = arith.truncf %147 : vector<8x8xf32> to vector<8x8xbf16>
    %149 = vector.extract_strided_slice %20 {offsets = [0, 112], sizes = [8, 16], strides = [1, 1]} : vector<8x128xbf16> to vector<8x16xbf16>
    %cst_46 = arith.constant dense<0.000000e+00> : vector<8x16xf32>
    %150 = tpu.matmul %148, %149, %cst_46 {dimension_numbers = #tpu.dot_dimension_numbers<[1], [0], [0], [1], [0, 0, 1, 1], [], []>} : vector<8x8xbf16>, vector<8x16xbf16>, vector<8x16xf32> -> vector<8x16xf32>
    %151 = tpu.concatenate %38, %54, %70, %86, %102, %118, %134, %150 in 1 : vector<8x16xf32>, vector<8x16xf32>, vector<8x16xf32>, vector<8x16xf32>, vector<8x16xf32>, vector<8x16xf32>, vector<8x16xf32>, vector<8x16xf32> -> vector<8x128xf32>
    %152 = arith.truncf %151 : vector<8x128xf32> to vector<8x128xbf16>
    %c0_47 = arith.constant 0 : index
    %c0_48 = arith.constant 0 : index
    %153 = vector.load %arg5[%c0_47, %c0_48] : memref<128x128xbf16, #tpu.memory_space<vmem>>, vector<128x128xbf16>
    %cst_49 = arith.constant dense<0.000000e+00> : vector<8x128xf32>
    %154 = tpu.matmul %152, %153, %cst_49 {dimension_numbers = #tpu.dot_dimension_numbers<[1], [0], [0], [1], [0, 0, 1, 1], [], []>} : vector<8x128xbf16>, vector<128x128xbf16>, vector<8x128xf32> -> vector<8x128xf32>
    %c0_50 = arith.constant 0 : index
    %c0_51 = arith.constant 0 : index
    %155 = vector.load %arg6[%c0_50, %c0_51] : memref<1x128xf32, #tpu.memory_space<vmem>>, vector<1x128xf32>
    %156 = vector.broadcast %155 : vector<1x128xf32> to vector<8x128xf32>
    %157 = arith.addf %154, %156 : vector<8x128xf32>
    %158 = arith.addf %0, %157 : vector<8x128xf32>
    %cst_52 = arith.constant dense<0.000000e+00> : vector<8xf32>
    %159 = vector.multi_reduction <add>, %158, %cst_52 [1] : vector<8x128xf32> to vector<8xf32>
    %160 = vector.shape_cast %159 : vector<8xf32> to vector<8x1xf32>
    %cst_53 = arith.constant 1.280000e+02 : f32
    %161 = vector.broadcast %cst_53 : f32 to vector<8x1xf32>
    %162 = arith.divf %160, %161 : vector<8x1xf32>
    %163 = vector.broadcast %162 : vector<8x1xf32> to vector<8x128xf32>
    %164 = arith.subf %158, %163 : vector<8x128xf32>
    %165 = arith.mulf %164, %164 : vector<8x128xf32>
    %cst_54 = arith.constant dense<0.000000e+00> : vector<8xf32>
    %166 = vector.multi_reduction <add>, %165, %cst_54 [1] : vector<8x128xf32> to vector<8xf32>
    %167 = vector.shape_cast %166 : vector<8xf32> to vector<8x1xf32>
    %cst_55 = arith.constant 1.280000e+02 : f32
    %168 = vector.broadcast %cst_55 : f32 to vector<8x1xf32>
    %169 = arith.divf %167, %168 : vector<8x1xf32>
    %170 = vector.broadcast %162 : vector<8x1xf32> to vector<8x128xf32>
    %171 = arith.subf %158, %170 : vector<8x128xf32>
    %cst_56 = arith.constant 9.99999974E-6 : f32
    %172 = vector.broadcast %cst_56 : f32 to vector<8x1xf32>
    %173 = arith.addf %169, %172 : vector<8x1xf32>
    %174 = math.rsqrt %173 : vector<8x1xf32>
    %175 = vector.broadcast %174 : vector<8x1xf32> to vector<8x128xf32>
    %176 = arith.mulf %171, %175 : vector<8x128xf32>
    %c0_57 = arith.constant 0 : index
    %c0_58 = arith.constant 0 : index
    %177 = vector.load %arg7[%c0_57, %c0_58] : memref<1x128xf32, #tpu.memory_space<vmem>>, vector<1x128xf32>
    %178 = vector.broadcast %177 : vector<1x128xf32> to vector<8x128xf32>
    %179 = arith.mulf %176, %178 : vector<8x128xf32>
    %c0_59 = arith.constant 0 : index
    %c0_60 = arith.constant 0 : index
    %180 = vector.load %arg8[%c0_59, %c0_60] : memref<1x128xf32, #tpu.memory_space<vmem>>, vector<1x128xf32>
    %181 = vector.broadcast %180 : vector<1x128xf32> to vector<8x128xf32>
    %182 = arith.addf %179, %181 : vector<8x128xf32>
    %183 = arith.truncf %182 : vector<8x128xf32> to vector<8x128xbf16>
    %c0_61 = arith.constant 0 : index
    %c0_62 = arith.constant 0 : index
    %184 = vector.load %arg9[%c0_61, %c0_62] : memref<128x512xbf16, #tpu.memory_space<vmem>>, vector<128x512xbf16>
    %cst_63 = arith.constant dense<0.000000e+00> : vector<8x512xf32>
    %185 = tpu.matmul %183, %184, %cst_63 {dimension_numbers = #tpu.dot_dimension_numbers<[1], [0], [0], [1], [0, 0, 1, 1], [], []>} : vector<8x128xbf16>, vector<128x512xbf16>, vector<8x512xf32> -> vector<8x512xf32>
    %c0_64 = arith.constant 0 : index
    %c0_65 = arith.constant 0 : index
    %186 = vector.load %arg10[%c0_64, %c0_65] : memref<1x512xf32, #tpu.memory_space<vmem>>, vector<1x512xf32>
    %187 = vector.broadcast %186 : vector<1x512xf32> to vector<8x512xf32>
    %188 = arith.addf %185, %187 : vector<8x512xf32>
    %cst_66 = arith.constant 5.000000e-01 : f32
    %189 = vector.broadcast %cst_66 : f32 to vector<8x512xf32>
    %190 = arith.mulf %189, %188 : vector<8x512xf32>
    %cst_67 = arith.constant 0.707106769 : f32
    %191 = vector.broadcast %cst_67 : f32 to vector<8x512xf32>
    %192 = arith.mulf %188, %191 : vector<8x512xf32>
    %193 = math.absf %192 : vector<8x512xf32>
    %cst_68 = arith.constant 0.327591091 : f32
    %194 = vector.broadcast %cst_68 : f32 to vector<8x512xf32>
    %195 = arith.mulf %194, %193 : vector<8x512xf32>
    %cst_69 = arith.constant 1.000000e+00 : f32
    %196 = vector.broadcast %cst_69 : f32 to vector<8x512xf32>
    %197 = arith.addf %196, %195 : vector<8x512xf32>
    %cst_70 = arith.constant 1.000000e+00 : f32
    %198 = vector.broadcast %cst_70 : f32 to vector<8x512xf32>
    %199 = arith.divf %198, %197 : vector<8x512xf32>
    %cst_71 = arith.constant 1.06140542 : f32
    %200 = vector.broadcast %cst_71 : f32 to vector<8x512xf32>
    %201 = arith.mulf %200, %199 : vector<8x512xf32>
    %cst_72 = arith.constant -1.45315206 : f32
    %202 = vector.broadcast %cst_72 : f32 to vector<8x512xf32>
    %203 = arith.addf %201, %202 : vector<8x512xf32>
    %204 = arith.mulf %203, %199 : vector<8x512xf32>
    %cst_73 = arith.constant 1.42141378 : f32
    %205 = vector.broadcast %cst_73 : f32 to vector<8x512xf32>
    %206 = arith.addf %204, %205 : vector<8x512xf32>
    %207 = arith.mulf %206, %199 : vector<8x512xf32>
    %cst_74 = arith.constant -0.284496725 : f32
    %208 = vector.broadcast %cst_74 : f32 to vector<8x512xf32>
    %209 = arith.addf %207, %208 : vector<8x512xf32>
    %210 = arith.mulf %209, %199 : vector<8x512xf32>
    %cst_75 = arith.constant 0.254829586 : f32
    %211 = vector.broadcast %cst_75 : f32 to vector<8x512xf32>
    %212 = arith.addf %210, %211 : vector<8x512xf32>
    %213 = arith.mulf %212, %199 : vector<8x512xf32>
    %cst_76 = arith.constant 0.000000e+00 : f32
    %214 = vector.broadcast %cst_76 : f32 to vector<8x512xf32>
    %215 = arith.subf %214, %193 : vector<8x512xf32>
    %216 = arith.mulf %215, %193 : vector<8x512xf32>
    %217 = math.exp %216 : vector<8x512xf32>
    %218 = arith.mulf %213, %217 : vector<8x512xf32>
    %cst_77 = arith.constant 1.000000e+00 : f32
    %219 = vector.broadcast %cst_77 : f32 to vector<8x512xf32>
    %220 = arith.subf %219, %218 : vector<8x512xf32>
    %cst_78 = arith.constant 0.000000e+00 : f32
    %221 = vector.broadcast %cst_78 : f32 to vector<8x512xf32>
    %222 = arith.cmpf oge, %192, %221 : vector<8x512xf32>
    %cst_79 = arith.constant 0.000000e+00 : f32
    %223 = vector.broadcast %cst_79 : f32 to vector<8x512xf32>
    %224 = arith.subf %223, %220 : vector<8x512xf32>
    %225 = arith.select %222, %220, %224 : vector<8x512xi1>, vector<8x512xf32>
    %cst_80 = arith.constant 1.000000e+00 : f32
    %226 = vector.broadcast %cst_80 : f32 to vector<8x512xf32>
    %227 = arith.addf %226, %225 : vector<8x512xf32>
    %228 = arith.mulf %190, %227 : vector<8x512xf32>
    %229 = arith.truncf %228 : vector<8x512xf32> to vector<8x512xbf16>
    %c0_81 = arith.constant 0 : index
    %c0_82 = arith.constant 0 : index
    %230 = vector.load %arg11[%c0_81, %c0_82] : memref<512x128xbf16, #tpu.memory_space<vmem>>, vector<512x128xbf16>
    %cst_83 = arith.constant dense<0.000000e+00> : vector<8x128xf32>
    %231 = tpu.matmul %229, %230, %cst_83 {dimension_numbers = #tpu.dot_dimension_numbers<[1], [0], [0], [1], [0, 0, 1, 1], [], []>} : vector<8x512xbf16>, vector<512x128xbf16>, vector<8x128xf32> -> vector<8x128xf32>
    %232 = arith.addf %182, %231 : vector<8x128xf32>
    %c0_84 = arith.constant 0 : index
    %c0_85 = arith.constant 0 : index
    %233 = vector.load %arg12[%c0_84, %c0_85] : memref<1x128xf32, #tpu.memory_space<vmem>>, vector<1x128xf32>
    %234 = vector.broadcast %233 : vector<1x128xf32> to vector<8x128xf32>
    %235 = arith.addf %232, %234 : vector<8x128xf32>
    %236 = arith.truncf %1 : vector<8x128xf32> to vector<8x128xbf16>
    %237 = arith.truncf %235 : vector<8x128xf32> to vector<8x128xbf16>
    %c0_86 = arith.constant 0 : index
    %c0_87 = arith.constant 0 : index
    %238 = vector.load %arg13[%c0_86, %c0_87] : memref<128x384xbf16, #tpu.memory_space<vmem>>, vector<128x128xbf16>
    %cst_88 = arith.constant dense<0.000000e+00> : vector<8x128xf32>
    %239 = tpu.matmul %236, %238, %cst_88 {dimension_numbers = #tpu.dot_dimension_numbers<[1], [0], [0], [1], [0, 0, 1, 1], [], []>} : vector<8x128xbf16>, vector<128x128xbf16>, vector<8x128xf32> -> vector<8x128xf32>
    %c0_89 = arith.constant 0 : index
    %c0_90 = arith.constant 0 : index
    %240 = vector.load %arg14[%c0_89, %c0_90] : memref<1x384xf32, #tpu.memory_space<vmem>>, vector<1x128xf32>
    %241 = vector.broadcast %240 : vector<1x128xf32> to vector<8x128xf32>
    %242 = arith.addf %239, %241 : vector<8x128xf32>
    %c0_91 = arith.constant 0 : index
    %c128_92 = arith.constant 128 : index
    %243 = vector.load %arg13[%c0_91, %c128_92] : memref<128x384xbf16, #tpu.memory_space<vmem>>, vector<128x128xbf16>
    %cst_93 = arith.constant dense<0.000000e+00> : vector<8x128xf32>
    %244 = tpu.matmul %237, %243, %cst_93 {dimension_numbers = #tpu.dot_dimension_numbers<[1], [0], [0], [1], [0, 0, 1, 1], [], []>} : vector<8x128xbf16>, vector<128x128xbf16>, vector<8x128xf32> -> vector<8x128xf32>
    %c0_94 = arith.constant 0 : index
    %c128_95 = arith.constant 128 : index
    %245 = vector.load %arg14[%c0_94, %c128_95] : memref<1x384xf32, #tpu.memory_space<vmem>>, vector<1x128xf32>
    %246 = vector.broadcast %245 : vector<1x128xf32> to vector<8x128xf32>
    %247 = arith.addf %244, %246 : vector<8x128xf32>
    %c0_96 = arith.constant 0 : index
    %c256_97 = arith.constant 256 : index
    %248 = vector.load %arg13[%c0_96, %c256_97] : memref<128x384xbf16, #tpu.memory_space<vmem>>, vector<128x128xbf16>
    %cst_98 = arith.constant dense<0.000000e+00> : vector<8x128xf32>
    %249 = tpu.matmul %237, %248, %cst_98 {dimension_numbers = #tpu.dot_dimension_numbers<[1], [0], [0], [1], [0, 0, 1, 1], [], []>} : vector<8x128xbf16>, vector<128x128xbf16>, vector<8x128xf32> -> vector<8x128xf32>
    %c0_99 = arith.constant 0 : index
    %c256_100 = arith.constant 256 : index
    %250 = vector.load %arg14[%c0_99, %c256_100] : memref<1x384xf32, #tpu.memory_space<vmem>>, vector<1x128xf32>
    %251 = vector.broadcast %250 : vector<1x128xf32> to vector<8x128xf32>
    %252 = arith.addf %249, %251 : vector<8x128xf32>
    %253 = arith.truncf %242 : vector<8x128xf32> to vector<8x128xbf16>
    %254 = arith.truncf %252 : vector<8x128xf32> to vector<8x128xbf16>
    %255 = tpu.transpose %247, [1, 0] : vector<8x128xf32> -> vector<128x8xf32>
    %256 = arith.truncf %255 : vector<128x8xf32> to vector<128x8xbf16>
    %257 = vector.extract_strided_slice %253 {offsets = [0, 0], sizes = [8, 16], strides = [1, 1]} : vector<8x128xbf16> to vector<8x16xbf16>
    %258 = vector.extract_strided_slice %256 {offsets = [0, 0], sizes = [16, 8], strides = [1, 1]} : vector<128x8xbf16> to vector<16x8xbf16>
    %cst_101 = arith.constant dense<0.000000e+00> : vector<8x8xf32>
    %259 = tpu.matmul %257, %258, %cst_101 {dimension_numbers = #tpu.dot_dimension_numbers<[1], [0], [0], [1], [0, 0, 1, 1], [], []>} : vector<8x16xbf16>, vector<16x8xbf16>, vector<8x8xf32> -> vector<8x8xf32>
    %cst_102 = arith.constant dense<0xFF800000> : vector<8xf32>
    %260 = vector.multi_reduction <maximumf>, %259, %cst_102 [1] : vector<8x8xf32> to vector<8xf32>
    %261 = vector.shape_cast %260 : vector<8xf32> to vector<8x1xf32>
    %262 = vector.broadcast %261 : vector<8x1xf32> to vector<8x8xf32>
    %263 = arith.subf %259, %262 : vector<8x8xf32>
    %264 = math.exp %263 : vector<8x8xf32>
    %cst_103 = arith.constant dense<0.000000e+00> : vector<8xf32>
    %265 = vector.multi_reduction <add>, %264, %cst_103 [1] : vector<8x8xf32> to vector<8xf32>
    %266 = vector.shape_cast %265 : vector<8xf32> to vector<8x1xf32>
    %267 = tpu.reciprocal %266 {approx = true} : vector<8x1xf32> -> vector<8x1xf32>
    %268 = vector.broadcast %267 : vector<8x1xf32> to vector<8x8xf32>
    %269 = arith.mulf %264, %268 : vector<8x8xf32>
    %270 = arith.truncf %269 : vector<8x8xf32> to vector<8x8xbf16>
    %271 = vector.extract_strided_slice %254 {offsets = [0, 0], sizes = [8, 16], strides = [1, 1]} : vector<8x128xbf16> to vector<8x16xbf16>
    %cst_104 = arith.constant dense<0.000000e+00> : vector<8x16xf32>
    %272 = tpu.matmul %270, %271, %cst_104 {dimension_numbers = #tpu.dot_dimension_numbers<[1], [0], [0], [1], [0, 0, 1, 1], [], []>} : vector<8x8xbf16>, vector<8x16xbf16>, vector<8x16xf32> -> vector<8x16xf32>
    %273 = vector.extract_strided_slice %253 {offsets = [0, 16], sizes = [8, 16], strides = [1, 1]} : vector<8x128xbf16> to vector<8x16xbf16>
    %274 = vector.extract_strided_slice %256 {offsets = [16, 0], sizes = [16, 8], strides = [1, 1]} : vector<128x8xbf16> to vector<16x8xbf16>
    %cst_105 = arith.constant dense<0.000000e+00> : vector<8x8xf32>
    %275 = tpu.matmul %273, %274, %cst_105 {dimension_numbers = #tpu.dot_dimension_numbers<[1], [0], [0], [1], [0, 0, 1, 1], [], []>} : vector<8x16xbf16>, vector<16x8xbf16>, vector<8x8xf32> -> vector<8x8xf32>
    %cst_106 = arith.constant dense<0xFF800000> : vector<8xf32>
    %276 = vector.multi_reduction <maximumf>, %275, %cst_106 [1] : vector<8x8xf32> to vector<8xf32>
    %277 = vector.shape_cast %276 : vector<8xf32> to vector<8x1xf32>
    %278 = vector.broadcast %277 : vector<8x1xf32> to vector<8x8xf32>
    %279 = arith.subf %275, %278 : vector<8x8xf32>
    %280 = math.exp %279 : vector<8x8xf32>
    %cst_107 = arith.constant dense<0.000000e+00> : vector<8xf32>
    %281 = vector.multi_reduction <add>, %280, %cst_107 [1] : vector<8x8xf32> to vector<8xf32>
    %282 = vector.shape_cast %281 : vector<8xf32> to vector<8x1xf32>
    %283 = tpu.reciprocal %282 {approx = true} : vector<8x1xf32> -> vector<8x1xf32>
    %284 = vector.broadcast %283 : vector<8x1xf32> to vector<8x8xf32>
    %285 = arith.mulf %280, %284 : vector<8x8xf32>
    %286 = arith.truncf %285 : vector<8x8xf32> to vector<8x8xbf16>
    %287 = vector.extract_strided_slice %254 {offsets = [0, 16], sizes = [8, 16], strides = [1, 1]} : vector<8x128xbf16> to vector<8x16xbf16>
    %cst_108 = arith.constant dense<0.000000e+00> : vector<8x16xf32>
    %288 = tpu.matmul %286, %287, %cst_108 {dimension_numbers = #tpu.dot_dimension_numbers<[1], [0], [0], [1], [0, 0, 1, 1], [], []>} : vector<8x8xbf16>, vector<8x16xbf16>, vector<8x16xf32> -> vector<8x16xf32>
    %289 = vector.extract_strided_slice %253 {offsets = [0, 32], sizes = [8, 16], strides = [1, 1]} : vector<8x128xbf16> to vector<8x16xbf16>
    %290 = vector.extract_strided_slice %256 {offsets = [32, 0], sizes = [16, 8], strides = [1, 1]} : vector<128x8xbf16> to vector<16x8xbf16>
    %cst_109 = arith.constant dense<0.000000e+00> : vector<8x8xf32>
    %291 = tpu.matmul %289, %290, %cst_109 {dimension_numbers = #tpu.dot_dimension_numbers<[1], [0], [0], [1], [0, 0, 1, 1], [], []>} : vector<8x16xbf16>, vector<16x8xbf16>, vector<8x8xf32> -> vector<8x8xf32>
    %cst_110 = arith.constant dense<0xFF800000> : vector<8xf32>
    %292 = vector.multi_reduction <maximumf>, %291, %cst_110 [1] : vector<8x8xf32> to vector<8xf32>
    %293 = vector.shape_cast %292 : vector<8xf32> to vector<8x1xf32>
    %294 = vector.broadcast %293 : vector<8x1xf32> to vector<8x8xf32>
    %295 = arith.subf %291, %294 : vector<8x8xf32>
    %296 = math.exp %295 : vector<8x8xf32>
    %cst_111 = arith.constant dense<0.000000e+00> : vector<8xf32>
    %297 = vector.multi_reduction <add>, %296, %cst_111 [1] : vector<8x8xf32> to vector<8xf32>
    %298 = vector.shape_cast %297 : vector<8xf32> to vector<8x1xf32>
    %299 = tpu.reciprocal %298 {approx = true} : vector<8x1xf32> -> vector<8x1xf32>
    %300 = vector.broadcast %299 : vector<8x1xf32> to vector<8x8xf32>
    %301 = arith.mulf %296, %300 : vector<8x8xf32>
    %302 = arith.truncf %301 : vector<8x8xf32> to vector<8x8xbf16>
    %303 = vector.extract_strided_slice %254 {offsets = [0, 32], sizes = [8, 16], strides = [1, 1]} : vector<8x128xbf16> to vector<8x16xbf16>
    %cst_112 = arith.constant dense<0.000000e+00> : vector<8x16xf32>
    %304 = tpu.matmul %302, %303, %cst_112 {dimension_numbers = #tpu.dot_dimension_numbers<[1], [0], [0], [1], [0, 0, 1, 1], [], []>} : vector<8x8xbf16>, vector<8x16xbf16>, vector<8x16xf32> -> vector<8x16xf32>
    %305 = vector.extract_strided_slice %253 {offsets = [0, 48], sizes = [8, 16], strides = [1, 1]} : vector<8x128xbf16> to vector<8x16xbf16>
    %306 = vector.extract_strided_slice %256 {offsets = [48, 0], sizes = [16, 8], strides = [1, 1]} : vector<128x8xbf16> to vector<16x8xbf16>
    %cst_113 = arith.constant dense<0.000000e+00> : vector<8x8xf32>
    %307 = tpu.matmul %305, %306, %cst_113 {dimension_numbers = #tpu.dot_dimension_numbers<[1], [0], [0], [1], [0, 0, 1, 1], [], []>} : vector<8x16xbf16>, vector<16x8xbf16>, vector<8x8xf32> -> vector<8x8xf32>
    %cst_114 = arith.constant dense<0xFF800000> : vector<8xf32>
    %308 = vector.multi_reduction <maximumf>, %307, %cst_114 [1] : vector<8x8xf32> to vector<8xf32>
    %309 = vector.shape_cast %308 : vector<8xf32> to vector<8x1xf32>
    %310 = vector.broadcast %309 : vector<8x1xf32> to vector<8x8xf32>
    %311 = arith.subf %307, %310 : vector<8x8xf32>
    %312 = math.exp %311 : vector<8x8xf32>
    %cst_115 = arith.constant dense<0.000000e+00> : vector<8xf32>
    %313 = vector.multi_reduction <add>, %312, %cst_115 [1] : vector<8x8xf32> to vector<8xf32>
    %314 = vector.shape_cast %313 : vector<8xf32> to vector<8x1xf32>
    %315 = tpu.reciprocal %314 {approx = true} : vector<8x1xf32> -> vector<8x1xf32>
    %316 = vector.broadcast %315 : vector<8x1xf32> to vector<8x8xf32>
    %317 = arith.mulf %312, %316 : vector<8x8xf32>
    %318 = arith.truncf %317 : vector<8x8xf32> to vector<8x8xbf16>
    %319 = vector.extract_strided_slice %254 {offsets = [0, 48], sizes = [8, 16], strides = [1, 1]} : vector<8x128xbf16> to vector<8x16xbf16>
    %cst_116 = arith.constant dense<0.000000e+00> : vector<8x16xf32>
    %320 = tpu.matmul %318, %319, %cst_116 {dimension_numbers = #tpu.dot_dimension_numbers<[1], [0], [0], [1], [0, 0, 1, 1], [], []>} : vector<8x8xbf16>, vector<8x16xbf16>, vector<8x16xf32> -> vector<8x16xf32>
    %321 = vector.extract_strided_slice %253 {offsets = [0, 64], sizes = [8, 16], strides = [1, 1]} : vector<8x128xbf16> to vector<8x16xbf16>
    %322 = vector.extract_strided_slice %256 {offsets = [64, 0], sizes = [16, 8], strides = [1, 1]} : vector<128x8xbf16> to vector<16x8xbf16>
    %cst_117 = arith.constant dense<0.000000e+00> : vector<8x8xf32>
    %323 = tpu.matmul %321, %322, %cst_117 {dimension_numbers = #tpu.dot_dimension_numbers<[1], [0], [0], [1], [0, 0, 1, 1], [], []>} : vector<8x16xbf16>, vector<16x8xbf16>, vector<8x8xf32> -> vector<8x8xf32>
    %cst_118 = arith.constant dense<0xFF800000> : vector<8xf32>
    %324 = vector.multi_reduction <maximumf>, %323, %cst_118 [1] : vector<8x8xf32> to vector<8xf32>
    %325 = vector.shape_cast %324 : vector<8xf32> to vector<8x1xf32>
    %326 = vector.broadcast %325 : vector<8x1xf32> to vector<8x8xf32>
    %327 = arith.subf %323, %326 : vector<8x8xf32>
    %328 = math.exp %327 : vector<8x8xf32>
    %cst_119 = arith.constant dense<0.000000e+00> : vector<8xf32>
    %329 = vector.multi_reduction <add>, %328, %cst_119 [1] : vector<8x8xf32> to vector<8xf32>
    %330 = vector.shape_cast %329 : vector<8xf32> to vector<8x1xf32>
    %331 = tpu.reciprocal %330 {approx = true} : vector<8x1xf32> -> vector<8x1xf32>
    %332 = vector.broadcast %331 : vector<8x1xf32> to vector<8x8xf32>
    %333 = arith.mulf %328, %332 : vector<8x8xf32>
    %334 = arith.truncf %333 : vector<8x8xf32> to vector<8x8xbf16>
    %335 = vector.extract_strided_slice %254 {offsets = [0, 64], sizes = [8, 16], strides = [1, 1]} : vector<8x128xbf16> to vector<8x16xbf16>
    %cst_120 = arith.constant dense<0.000000e+00> : vector<8x16xf32>
    %336 = tpu.matmul %334, %335, %cst_120 {dimension_numbers = #tpu.dot_dimension_numbers<[1], [0], [0], [1], [0, 0, 1, 1], [], []>} : vector<8x8xbf16>, vector<8x16xbf16>, vector<8x16xf32> -> vector<8x16xf32>
    %337 = vector.extract_strided_slice %253 {offsets = [0, 80], sizes = [8, 16], strides = [1, 1]} : vector<8x128xbf16> to vector<8x16xbf16>
    %338 = vector.extract_strided_slice %256 {offsets = [80, 0], sizes = [16, 8], strides = [1, 1]} : vector<128x8xbf16> to vector<16x8xbf16>
    %cst_121 = arith.constant dense<0.000000e+00> : vector<8x8xf32>
    %339 = tpu.matmul %337, %338, %cst_121 {dimension_numbers = #tpu.dot_dimension_numbers<[1], [0], [0], [1], [0, 0, 1, 1], [], []>} : vector<8x16xbf16>, vector<16x8xbf16>, vector<8x8xf32> -> vector<8x8xf32>
    %cst_122 = arith.constant dense<0xFF800000> : vector<8xf32>
    %340 = vector.multi_reduction <maximumf>, %339, %cst_122 [1] : vector<8x8xf32> to vector<8xf32>
    %341 = vector.shape_cast %340 : vector<8xf32> to vector<8x1xf32>
    %342 = vector.broadcast %341 : vector<8x1xf32> to vector<8x8xf32>
    %343 = arith.subf %339, %342 : vector<8x8xf32>
    %344 = math.exp %343 : vector<8x8xf32>
    %cst_123 = arith.constant dense<0.000000e+00> : vector<8xf32>
    %345 = vector.multi_reduction <add>, %344, %cst_123 [1] : vector<8x8xf32> to vector<8xf32>
    %346 = vector.shape_cast %345 : vector<8xf32> to vector<8x1xf32>
    %347 = tpu.reciprocal %346 {approx = true} : vector<8x1xf32> -> vector<8x1xf32>
    %348 = vector.broadcast %347 : vector<8x1xf32> to vector<8x8xf32>
    %349 = arith.mulf %344, %348 : vector<8x8xf32>
    %350 = arith.truncf %349 : vector<8x8xf32> to vector<8x8xbf16>
    %351 = vector.extract_strided_slice %254 {offsets = [0, 80], sizes = [8, 16], strides = [1, 1]} : vector<8x128xbf16> to vector<8x16xbf16>
    %cst_124 = arith.constant dense<0.000000e+00> : vector<8x16xf32>
    %352 = tpu.matmul %350, %351, %cst_124 {dimension_numbers = #tpu.dot_dimension_numbers<[1], [0], [0], [1], [0, 0, 1, 1], [], []>} : vector<8x8xbf16>, vector<8x16xbf16>, vector<8x16xf32> -> vector<8x16xf32>
    %353 = vector.extract_strided_slice %253 {offsets = [0, 96], sizes = [8, 16], strides = [1, 1]} : vector<8x128xbf16> to vector<8x16xbf16>
    %354 = vector.extract_strided_slice %256 {offsets = [96, 0], sizes = [16, 8], strides = [1, 1]} : vector<128x8xbf16> to vector<16x8xbf16>
    %cst_125 = arith.constant dense<0.000000e+00> : vector<8x8xf32>
    %355 = tpu.matmul %353, %354, %cst_125 {dimension_numbers = #tpu.dot_dimension_numbers<[1], [0], [0], [1], [0, 0, 1, 1], [], []>} : vector<8x16xbf16>, vector<16x8xbf16>, vector<8x8xf32> -> vector<8x8xf32>
    %cst_126 = arith.constant dense<0xFF800000> : vector<8xf32>
    %356 = vector.multi_reduction <maximumf>, %355, %cst_126 [1] : vector<8x8xf32> to vector<8xf32>
    %357 = vector.shape_cast %356 : vector<8xf32> to vector<8x1xf32>
    %358 = vector.broadcast %357 : vector<8x1xf32> to vector<8x8xf32>
    %359 = arith.subf %355, %358 : vector<8x8xf32>
    %360 = math.exp %359 : vector<8x8xf32>
    %cst_127 = arith.constant dense<0.000000e+00> : vector<8xf32>
    %361 = vector.multi_reduction <add>, %360, %cst_127 [1] : vector<8x8xf32> to vector<8xf32>
    %362 = vector.shape_cast %361 : vector<8xf32> to vector<8x1xf32>
    %363 = tpu.reciprocal %362 {approx = true} : vector<8x1xf32> -> vector<8x1xf32>
    %364 = vector.broadcast %363 : vector<8x1xf32> to vector<8x8xf32>
    %365 = arith.mulf %360, %364 : vector<8x8xf32>
    %366 = arith.truncf %365 : vector<8x8xf32> to vector<8x8xbf16>
    %367 = vector.extract_strided_slice %254 {offsets = [0, 96], sizes = [8, 16], strides = [1, 1]} : vector<8x128xbf16> to vector<8x16xbf16>
    %cst_128 = arith.constant dense<0.000000e+00> : vector<8x16xf32>
    %368 = tpu.matmul %366, %367, %cst_128 {dimension_numbers = #tpu.dot_dimension_numbers<[1], [0], [0], [1], [0, 0, 1, 1], [], []>} : vector<8x8xbf16>, vector<8x16xbf16>, vector<8x16xf32> -> vector<8x16xf32>
    %369 = vector.extract_strided_slice %253 {offsets = [0, 112], sizes = [8, 16], strides = [1, 1]} : vector<8x128xbf16> to vector<8x16xbf16>
    %370 = vector.extract_strided_slice %256 {offsets = [112, 0], sizes = [16, 8], strides = [1, 1]} : vector<128x8xbf16> to vector<16x8xbf16>
    %cst_129 = arith.constant dense<0.000000e+00> : vector<8x8xf32>
    %371 = tpu.matmul %369, %370, %cst_129 {dimension_numbers = #tpu.dot_dimension_numbers<[1], [0], [0], [1], [0, 0, 1, 1], [], []>} : vector<8x16xbf16>, vector<16x8xbf16>, vector<8x8xf32> -> vector<8x8xf32>
    %cst_130 = arith.constant dense<0xFF800000> : vector<8xf32>
    %372 = vector.multi_reduction <maximumf>, %371, %cst_130 [1] : vector<8x8xf32> to vector<8xf32>
    %373 = vector.shape_cast %372 : vector<8xf32> to vector<8x1xf32>
    %374 = vector.broadcast %373 : vector<8x1xf32> to vector<8x8xf32>
    %375 = arith.subf %371, %374 : vector<8x8xf32>
    %376 = math.exp %375 : vector<8x8xf32>
    %cst_131 = arith.constant dense<0.000000e+00> : vector<8xf32>
    %377 = vector.multi_reduction <add>, %376, %cst_131 [1] : vector<8x8xf32> to vector<8xf32>
    %378 = vector.shape_cast %377 : vector<8xf32> to vector<8x1xf32>
    %379 = tpu.reciprocal %378 {approx = true} : vector<8x1xf32> -> vector<8x1xf32>
    %380 = vector.broadcast %379 : vector<8x1xf32> to vector<8x8xf32>
    %381 = arith.mulf %376, %380 : vector<8x8xf32>
    %382 = arith.truncf %381 : vector<8x8xf32> to vector<8x8xbf16>
    %383 = vector.extract_strided_slice %254 {offsets = [0, 112], sizes = [8, 16], strides = [1, 1]} : vector<8x128xbf16> to vector<8x16xbf16>
    %cst_132 = arith.constant dense<0.000000e+00> : vector<8x16xf32>
    %384 = tpu.matmul %382, %383, %cst_132 {dimension_numbers = #tpu.dot_dimension_numbers<[1], [0], [0], [1], [0, 0, 1, 1], [], []>} : vector<8x8xbf16>, vector<8x16xbf16>, vector<8x16xf32> -> vector<8x16xf32>
    %385 = tpu.concatenate %272, %288, %304, %320, %336, %352, %368, %384 in 1 : vector<8x16xf32>, vector<8x16xf32>, vector<8x16xf32>, vector<8x16xf32>, vector<8x16xf32>, vector<8x16xf32>, vector<8x16xf32>, vector<8x16xf32> -> vector<8x128xf32>
    %386 = arith.truncf %385 : vector<8x128xf32> to vector<8x128xbf16>
    %c0_133 = arith.constant 0 : index
    %c0_134 = arith.constant 0 : index
    %387 = vector.load %arg15[%c0_133, %c0_134] : memref<128x128xbf16, #tpu.memory_space<vmem>>, vector<128x128xbf16>
    %cst_135 = arith.constant dense<0.000000e+00> : vector<8x128xf32>
    %388 = tpu.matmul %386, %387, %cst_135 {dimension_numbers = #tpu.dot_dimension_numbers<[1], [0], [0], [1], [0, 0, 1, 1], [], []>} : vector<8x128xbf16>, vector<128x128xbf16>, vector<8x128xf32> -> vector<8x128xf32>
    %c0_136 = arith.constant 0 : index
    %c0_137 = arith.constant 0 : index
    %389 = vector.load %arg16[%c0_136, %c0_137] : memref<1x128xf32, #tpu.memory_space<vmem>>, vector<1x128xf32>
    %390 = vector.broadcast %389 : vector<1x128xf32> to vector<8x128xf32>
    %391 = arith.addf %388, %390 : vector<8x128xf32>
    %392 = arith.addf %1, %391 : vector<8x128xf32>
    %cst_138 = arith.constant dense<0.000000e+00> : vector<8xf32>
    %393 = vector.multi_reduction <add>, %392, %cst_138 [1] : vector<8x128xf32> to vector<8xf32>
    %394 = vector.shape_cast %393 : vector<8xf32> to vector<8x1xf32>
    %cst_139 = arith.constant 1.280000e+02 : f32
    %395 = vector.broadcast %cst_139 : f32 to vector<8x1xf32>
    %396 = arith.divf %394, %395 : vector<8x1xf32>
    %397 = vector.broadcast %396 : vector<8x1xf32> to vector<8x128xf32>
    %398 = arith.subf %392, %397 : vector<8x128xf32>
    %399 = arith.mulf %398, %398 : vector<8x128xf32>
    %cst_140 = arith.constant dense<0.000000e+00> : vector<8xf32>
    %400 = vector.multi_reduction <add>, %399, %cst_140 [1] : vector<8x128xf32> to vector<8xf32>
    %401 = vector.shape_cast %400 : vector<8xf32> to vector<8x1xf32>
    %cst_141 = arith.constant 1.280000e+02 : f32
    %402 = vector.broadcast %cst_141 : f32 to vector<8x1xf32>
    %403 = arith.divf %401, %402 : vector<8x1xf32>
    %404 = vector.broadcast %396 : vector<8x1xf32> to vector<8x128xf32>
    %405 = arith.subf %392, %404 : vector<8x128xf32>
    %cst_142 = arith.constant 9.99999974E-6 : f32
    %406 = vector.broadcast %cst_142 : f32 to vector<8x1xf32>
    %407 = arith.addf %403, %406 : vector<8x1xf32>
    %408 = math.rsqrt %407 : vector<8x1xf32>
    %409 = vector.broadcast %408 : vector<8x1xf32> to vector<8x128xf32>
    %410 = arith.mulf %405, %409 : vector<8x128xf32>
    %c0_143 = arith.constant 0 : index
    %c0_144 = arith.constant 0 : index
    %411 = vector.load %arg17[%c0_143, %c0_144] : memref<1x128xf32, #tpu.memory_space<vmem>>, vector<1x128xf32>
    %412 = vector.broadcast %411 : vector<1x128xf32> to vector<8x128xf32>
    %413 = arith.mulf %410, %412 : vector<8x128xf32>
    %c0_145 = arith.constant 0 : index
    %c0_146 = arith.constant 0 : index
    %414 = vector.load %arg18[%c0_145, %c0_146] : memref<1x128xf32, #tpu.memory_space<vmem>>, vector<1x128xf32>
    %415 = vector.broadcast %414 : vector<1x128xf32> to vector<8x128xf32>
    %416 = arith.addf %413, %415 : vector<8x128xf32>
    %417 = arith.truncf %416 : vector<8x128xf32> to vector<8x128xbf16>
    %c0_147 = arith.constant 0 : index
    %c0_148 = arith.constant 0 : index
    %418 = vector.load %arg19[%c0_147, %c0_148] : memref<128x512xbf16, #tpu.memory_space<vmem>>, vector<128x512xbf16>
    %cst_149 = arith.constant dense<0.000000e+00> : vector<8x512xf32>
    %419 = tpu.matmul %417, %418, %cst_149 {dimension_numbers = #tpu.dot_dimension_numbers<[1], [0], [0], [1], [0, 0, 1, 1], [], []>} : vector<8x128xbf16>, vector<128x512xbf16>, vector<8x512xf32> -> vector<8x512xf32>
    %c0_150 = arith.constant 0 : index
    %c0_151 = arith.constant 0 : index
    %420 = vector.load %arg20[%c0_150, %c0_151] : memref<1x512xf32, #tpu.memory_space<vmem>>, vector<1x512xf32>
    %421 = vector.broadcast %420 : vector<1x512xf32> to vector<8x512xf32>
    %422 = arith.addf %419, %421 : vector<8x512xf32>
    %cst_152 = arith.constant 5.000000e-01 : f32
    %423 = vector.broadcast %cst_152 : f32 to vector<8x512xf32>
    %424 = arith.mulf %423, %422 : vector<8x512xf32>
    %cst_153 = arith.constant 0.707106769 : f32
    %425 = vector.broadcast %cst_153 : f32 to vector<8x512xf32>
    %426 = arith.mulf %422, %425 : vector<8x512xf32>
    %427 = math.absf %426 : vector<8x512xf32>
    %cst_154 = arith.constant 0.327591091 : f32
    %428 = vector.broadcast %cst_154 : f32 to vector<8x512xf32>
    %429 = arith.mulf %428, %427 : vector<8x512xf32>
    %cst_155 = arith.constant 1.000000e+00 : f32
    %430 = vector.broadcast %cst_155 : f32 to vector<8x512xf32>
    %431 = arith.addf %430, %429 : vector<8x512xf32>
    %cst_156 = arith.constant 1.000000e+00 : f32
    %432 = vector.broadcast %cst_156 : f32 to vector<8x512xf32>
    %433 = arith.divf %432, %431 : vector<8x512xf32>
    %cst_157 = arith.constant 1.06140542 : f32
    %434 = vector.broadcast %cst_157 : f32 to vector<8x512xf32>
    %435 = arith.mulf %434, %433 : vector<8x512xf32>
    %cst_158 = arith.constant -1.45315206 : f32
    %436 = vector.broadcast %cst_158 : f32 to vector<8x512xf32>
    %437 = arith.addf %435, %436 : vector<8x512xf32>
    %438 = arith.mulf %437, %433 : vector<8x512xf32>
    %cst_159 = arith.constant 1.42141378 : f32
    %439 = vector.broadcast %cst_159 : f32 to vector<8x512xf32>
    %440 = arith.addf %438, %439 : vector<8x512xf32>
    %441 = arith.mulf %440, %433 : vector<8x512xf32>
    %cst_160 = arith.constant -0.284496725 : f32
    %442 = vector.broadcast %cst_160 : f32 to vector<8x512xf32>
    %443 = arith.addf %441, %442 : vector<8x512xf32>
    %444 = arith.mulf %443, %433 : vector<8x512xf32>
    %cst_161 = arith.constant 0.254829586 : f32
    %445 = vector.broadcast %cst_161 : f32 to vector<8x512xf32>
    %446 = arith.addf %444, %445 : vector<8x512xf32>
    %447 = arith.mulf %446, %433 : vector<8x512xf32>
    %cst_162 = arith.constant 0.000000e+00 : f32
    %448 = vector.broadcast %cst_162 : f32 to vector<8x512xf32>
    %449 = arith.subf %448, %427 : vector<8x512xf32>
    %450 = arith.mulf %449, %427 : vector<8x512xf32>
    %451 = math.exp %450 : vector<8x512xf32>
    %452 = arith.mulf %447, %451 : vector<8x512xf32>
    %cst_163 = arith.constant 1.000000e+00 : f32
    %453 = vector.broadcast %cst_163 : f32 to vector<8x512xf32>
    %454 = arith.subf %453, %452 : vector<8x512xf32>
    %cst_164 = arith.constant 0.000000e+00 : f32
    %455 = vector.broadcast %cst_164 : f32 to vector<8x512xf32>
    %456 = arith.cmpf oge, %426, %455 : vector<8x512xf32>
    %cst_165 = arith.constant 0.000000e+00 : f32
    %457 = vector.broadcast %cst_165 : f32 to vector<8x512xf32>
    %458 = arith.subf %457, %454 : vector<8x512xf32>
    %459 = arith.select %456, %454, %458 : vector<8x512xi1>, vector<8x512xf32>
    %cst_166 = arith.constant 1.000000e+00 : f32
    %460 = vector.broadcast %cst_166 : f32 to vector<8x512xf32>
    %461 = arith.addf %460, %459 : vector<8x512xf32>
    %462 = arith.mulf %424, %461 : vector<8x512xf32>
    %463 = arith.truncf %462 : vector<8x512xf32> to vector<8x512xbf16>
    %c0_167 = arith.constant 0 : index
    %c0_168 = arith.constant 0 : index
    %464 = vector.load %arg21[%c0_167, %c0_168] : memref<512x128xbf16, #tpu.memory_space<vmem>>, vector<512x128xbf16>
    %cst_169 = arith.constant dense<0.000000e+00> : vector<8x128xf32>
    %465 = tpu.matmul %463, %464, %cst_169 {dimension_numbers = #tpu.dot_dimension_numbers<[1], [0], [0], [1], [0, 0, 1, 1], [], []>} : vector<8x512xbf16>, vector<512x128xbf16>, vector<8x128xf32> -> vector<8x128xf32>
    %466 = arith.addf %416, %465 : vector<8x128xf32>
    %c0_170 = arith.constant 0 : index
    %c0_171 = arith.constant 0 : index
    %467 = vector.load %arg22[%c0_170, %c0_171] : memref<1x128xf32, #tpu.memory_space<vmem>>, vector<1x128xf32>
    %468 = vector.broadcast %467 : vector<1x128xf32> to vector<8x128xf32>
    %469 = arith.addf %466, %468 : vector<8x128xf32>
    %c0_172 = arith.constant 0 : index
    %c0_173 = arith.constant 0 : index
    %470 = vector.load %arg23[%c0_172, %c0_173] : memref<8x128xf32, #tpu.memory_space<vmem>>, vector<8x128xf32>
    tpu.vector_store %arg23[%c0_172, %c0_173], %235 {strides = array<i32>} : memref<8x128xf32, #tpu.memory_space<vmem>>, vector<8x128xf32>,
    %c0_174 = arith.constant 0 : index
    %c0_175 = arith.constant 0 : index
    %471 = vector.load %arg24[%c0_174, %c0_175] : memref<8x128xf32, #tpu.memory_space<vmem>>, vector<8x128xf32>
    tpu.vector_store %arg24[%c0_174, %c0_175], %469 {strides = array<i32>} : memref<8x128xf32, #tpu.memory_space<vmem>>, vector<8x128xf32>,
    return
  }
  func.func @transform_0(%arg0: i32) -> (i32, i32) {
    %c0_i32 = arith.constant 0 : i32
    %c0_i32_0 = arith.constant 0 : i32
    return %arg0, %c0_i32 : i32, i32
  }
  func.func @transform_1(%arg0: i32) -> (i32, i32) {
    %c0_i32 = arith.constant 0 : i32
    %c0_i32_0 = arith.constant 0 : i32
    return %arg0, %c0_i32 : i32, i32
  }
  func.func @transform_2(%arg0: i32) -> (i32, i32) {
    %c0_i32 = arith.constant 0 : i32
    %c0_i32_0 = arith.constant 0 : i32
    %c0_i32_1 = arith.constant 0 : i32
    return %c0_i32, %c0_i32_0 : i32, i32
  }
  func.func @transform_3(%arg0: i32) -> (i32, i32) {
    %c0_i32 = arith.constant 0 : i32
    %c0_i32_0 = arith.constant 0 : i32
    %c0_i32_1 = arith.constant 0 : i32
    return %c0_i32, %c0_i32_0 : i32, i32
  }
  func.func @transform_4(%arg0: i32) -> (i32, i32) {
    %c0_i32 = arith.constant 0 : i32
    %c0_i32_0 = arith.constant 0 : i32
    %c0_i32_1 = arith.constant 0 : i32
    return %c0_i32, %c0_i32_0 : i32, i32
  }
  func.func @transform_5(%arg0: i32) -> (i32, i32) {
    %c0_i32 = arith.constant 0 : i32
    %c0_i32_0 = arith.constant 0 : i32
    %c0_i32_1 = arith.constant 0 : i32
    return %c0_i32, %c0_i32_0 : i32, i32
  }
  func.func @transform_6(%arg0: i32) -> (i32, i32) {
    %c0_i32 = arith.constant 0 : i32
    %c0_i32_0 = arith.constant 0 : i32
    %c0_i32_1 = arith.constant 0 : i32
    return %c0_i32, %c0_i32_0 : i32, i32
  }
  func.func @transform_7(%arg0: i32) -> (i32, i32) {
    %c0_i32 = arith.constant 0 : i32
    %c0_i32_0 = arith.constant 0 : i32
    %c0_i32_1 = arith.constant 0 : i32
    return %c0_i32, %c0_i32_0 : i32, i32
  }
  func.func @transform_8(%arg0: i32) -> (i32, i32) {
    %c0_i32 = arith.constant 0 : i32
    %c0_i32_0 = arith.constant 0 : i32
    %c0_i32_1 = arith.constant 0 : i32
    return %c0_i32, %c0_i32_0 : i32, i32
  }
  func.func @transform_9(%arg0: i32) -> (i32, i32) {
    %c0_i32 = arith.constant 0 : i32
    %c0_i32_0 = arith.constant 0 : i32
    %c0_i32_1 = arith.constant 0 : i32
    return %c0_i32, %c0_i32_0 : i32, i32
  }
  func.func @transform_10(%arg0: i32) -> (i32, i32) {
    %c0_i32 = arith.constant 0 : i32
    %c0_i32_0 = arith.constant 0 : i32
    %c0_i32_1 = arith.constant 0 : i32
    return %c0_i32, %c0_i32_0 : i32, i32
  }
  func.func @transform_11(%arg0: i32) -> (i32, i32) {
    %c0_i32 = arith.constant 0 : i32
    %c0_i32_0 = arith.constant 0 : i32
    %c0_i32_1 = arith.constant 0 : i32
    return %c0_i32, %c0_i32_0 : i32, i32
  }
  func.func @transform_12(%arg0: i32) -> (i32, i32) {
    %c0_i32 = arith.constant 0 : i32
    %c0_i32_0 = arith.constant 0 : i32
    %c0_i32_1 = arith.constant 0 : i32
    return %c0_i32, %c0_i32_0 : i32, i32
  }
  func.func @transform_13(%arg0: i32) -> (i32, i32) {
    %c0_i32 = arith.constant 0 : i32
    %c0_i32_0 = arith.constant 0 : i32
    %c0_i32_1 = arith.constant 0 : i32
    return %c0_i32, %c0_i32_0 : i32, i32
  }
  func.func @transform_14(%arg0: i32) -> (i32, i32) {
    %c0_i32 = arith.constant 0 : i32
    %c0_i32_0 = arith.constant 0 : i32
    %c0_i32_1 = arith.constant 0 : i32
    return %c0_i32, %c0_i32_0 : i32, i32
  }
  func.func @transform_15(%arg0: i32) -> (i32, i32) {
    %c0_i32 = arith.constant 0 : i32
    %c0_i32_0 = arith.constant 0 : i32
    %c0_i32_1 = arith.constant 0 : i32
    return %c0_i32, %c0_i32_0 : i32, i32
  }
  func.func @transform_16(%arg0: i32) -> (i32, i32) {
    %c0_i32 = arith.constant 0 : i32
    %c0_i32_0 = arith.constant 0 : i32
    %c0_i32_1 = arith.constant 0 : i32
    return %c0_i32, %c0_i32_0 : i32, i32
  }
  func.func @transform_17(%arg0: i32) -> (i32, i32) {
    %c0_i32 = arith.constant 0 : i32
    %c0_i32_0 = arith.constant 0 : i32
    %c0_i32_1 = arith.constant 0 : i32
    return %c0_i32, %c0_i32_0 : i32, i32
  }
  func.func @transform_18(%arg0: i32) -> (i32, i32) {
    %c0_i32 = arith.constant 0 : i32
    %c0_i32_0 = arith.constant 0 : i32
    %c0_i32_1 = arith.constant 0 : i32
    return %c0_i32, %c0_i32_0 : i32, i32
  }
  func.func @transform_19(%arg0: i32) -> (i32, i32) {
    %c0_i32 = arith.constant 0 : i32
    %c0_i32_0 = arith.constant 0 : i32
    %c0_i32_1 = arith.constant 0 : i32
    return %c0_i32, %c0_i32_0 : i32, i32
  }
  func.func @transform_20(%arg0: i32) -> (i32, i32) {
    %c0_i32 = arith.constant 0 : i32
    %c0_i32_0 = arith.constant 0 : i32
    %c0_i32_1 = arith.constant 0 : i32
    return %c0_i32, %c0_i32_0 : i32, i32
  }
  func.func @transform_21(%arg0: i32) -> (i32, i32) {
    %c0_i32 = arith.constant 0 : i32
    %c0_i32_0 = arith.constant 0 : i32
    %c0_i32_1 = arith.constant 0 : i32
    return %c0_i32, %c0_i32_0 : i32, i32
  }
  func.func @transform_22(%arg0: i32) -> (i32, i32) {
    %c0_i32 = arith.constant 0 : i32
    %c0_i32_0 = arith.constant 0 : i32
    return %arg0, %c0_i32 : i32, i32
  }
  func.func @transform_23(%arg0: i32) -> (i32, i32) {
    %c0_i32 = arith.constant 0 : i32
    %c0_i32_0 = arith.constant 0 : i32
    return %arg0, %c0_i32 : i32, i32
  }
}

</mosaic_0001>

<llo_original>
// kernel: cross_modal_attention.1
$region0: #{cross_modal_attention.1}
  #allocation0 [shape = 'u32[]', space=smem, size = 0x4, offset = 0x4, fixed_abs, tag = 'smem constant byte address 0x4 - core index']
  #allocation1 [shape = 'u32[144,128]{1,0:T(1,128)}', space=vmem, size = 0x12000, scoped, tag = 'internal scratch']
  %s0 = inlined_call_operand.vmem [shape: f32[16,128], index: 0, kind: input, shape index: {}]
  %s1 = inlined_call_operand.vmem [shape: f32[16,128], index: 1, kind: input, shape index: {}]
  %s2 = inlined_call_operand.vmem [shape: bf16[128,384], index: 2, kind: input, shape index: {}]
  %s3 = inlined_call_operand.vmem [shape: f32[1,384], index: 3, kind: input, shape index: {}]
  %s4 = inlined_call_operand.vmem [shape: bf16[128,128], index: 4, kind: input, shape index: {}]
  %s5 = inlined_call_operand.vmem [shape: f32[1,128], index: 5, kind: input, shape index: {}]
  %s6 = inlined_call_operand.vmem [shape: f32[1,128], index: 6, kind: input, shape index: {}]
  %s7 = inlined_call_operand.vmem [shape: f32[1,128], index: 7, kind: input, shape index: {}]
  %s8 = inlined_call_operand.vmem [shape: bf16[128,512], index: 8, kind: input, shape index: {}]
  %s9 = inlined_call_operand.vmem [shape: f32[1,512], index: 9, kind: input, shape index: {}]
  %s10 = inlined_call_operand.vmem [shape: bf16[512,128], index: 10, kind: input, shape index: {}]
  %s11 = inlined_call_operand.vmem [shape: f32[1,128], index: 11, kind: input, shape index: {}]
  %s12 = inlined_call_operand.vmem [shape: bf16[128,384], index: 12, kind: input, shape index: {}]
  %s13 = inlined_call_operand.vmem [shape: f32[1,384], index: 13, kind: input, shape index: {}]
  %s14 = inlined_call_operand.vmem [shape: bf16[128,128], index: 14, kind: input, shape index: {}]
  %s15 = inlined_call_operand.vmem [shape: f32[1,128], index: 15, kind: input, shape index: {}]
  %s16 = inlined_call_operand.vmem [shape: f32[1,128], index: 16, kind: input, shape index: {}]
  %s17 = inlined_call_operand.vmem [shape: f32[1,128], index: 17, kind: input, shape index: {}]
  %s18 = inlined_call_operand.vmem [shape: bf16[128,512], index: 18, kind: input, shape index: {}]
  %s19 = inlined_call_operand.vmem [shape: f32[1,512], index: 19, kind: input, shape index: {}]
  %s20 = inlined_call_operand.vmem [shape: bf16[512,128], index: 20, kind: input, shape index: {}]
  %s21 = inlined_call_operand.vmem [shape: f32[1,128], index: 21, kind: input, shape index: {}]
  %s22 = inlined_call_operand.hbm [shape: f32[16,128], index: 22, kind: output, shape index: {0}]
  %s23 = inlined_call_operand.hbm [shape: f32[16,128], index: 23, kind: output, shape index: {1}]
  %24 = xla_tuple %s22, %s23
  %s25 = sld [smem:[#allocation0]]
  $region129: #{cross_modal_attention.1} parent=0
    _
  %s27 = ssub.s32 1, %s25
  %s28 = scalar_select 0, %s27, %s25
  $region1: #{cross_modal_attention.1} parent=0
    #allocation2 [shape = 'u8[8192]{0}', space=vmem, size = 0x2000, scoped, tag = 'output window, operand 0']
    #allocation3 [shape = 's32[2]{0}', space=sflag, size = 0x8, scoped, tag = 'scoped memory for cross_modal_attention.1']
    #allocation4 [shape = 'u8[8192]{0}', space=vmem, size = 0x2000, scoped, tag = 'output window, operand 1']
    #allocation5 [shape = 's32[2]{0}', space=sflag, size = 0x8, scoped, tag = 'scoped memory for cross_modal_attention.1']
    %29 = vsyncpa [#allocation3], 0
    %s30 = scalar_lea.sflag [#allocation3], 1
    %31 = vsyncpa %s30, 0
    %32 = vsyncpa [#allocation5], 0
    %s33 = scalar_lea.sflag [#allocation5], 1
    %34 = vsyncpa %s33, 0
    loop: start=0, step=1, limit=4
    $region2: #{cross_modal_attention.1} parent=1 // loop_pre_header
      _
    $region3: #{cross_modal_attention.1} parent=1 // loop_header
      %s36 = sphi 0, %s40
      %p37 = scmp.ge.s32.totalorder %s36, 4
      %s46 = sphi 0, %s48
      %s49 = sphi 0, %s46
      %s50 = sphi 0, %s49
      %s66 = sphi 0, %s50
      %s72 = sphi 0, %s74
      %s75 = sphi 0, %s72
      %s76 = sphi 0, %s75
      %s92 = sphi 0, %s76
      %s96 = sphi 0, %s96
      %s98 = sphi 0, %s96
      %s99 = sphi 0, %s98
      %s113 = sphi 0, %s99
      %s117 = sphi 0, %s117
      %s119 = sphi 0, %s117
      %s120 = sphi 0, %s119
      %s134 = sphi 0, %s120
      %s138 = sphi 0, %s138
      %s140 = sphi 0, %s138
      %s141 = sphi 0, %s140
      %s155 = sphi 0, %s141
      %s159 = sphi 0, %s159
      %s161 = sphi 0, %s159
      %s162 = sphi 0, %s161
      %s176 = sphi 0, %s162
      %s180 = sphi 0, %s180
      %s182 = sphi 0, %s180
      %s183 = sphi 0, %s182
      %s197 = sphi 0, %s183
      %s201 = sphi 0, %s201
      %s203 = sphi 0, %s201
      %s204 = sphi 0, %s203
      %s218 = sphi 0, %s204
      %s222 = sphi 0, %s222
      %s224 = sphi 0, %s222
      %s225 = sphi 0, %s224
      %s239 = sphi 0, %s225
      %s243 = sphi 0, %s243
      %s245 = sphi 0, %s243
      %s246 = sphi 0, %s245
      %s260 = sphi 0, %s246
      %s264 = sphi 0, %s264
      %s266 = sphi 0, %s264
      %s267 = sphi 0, %s266
      %s281 = sphi 0, %s267
      %s285 = sphi 0, %s285
      %s287 = sphi 0, %s285
      %s288 = sphi 0, %s287
      %s302 = sphi 0, %s288
      %s306 = sphi 0, %s306
      %s308 = sphi 0, %s306
      %s309 = sphi 0, %s308
      %s323 = sphi 0, %s309
      %s327 = sphi 0, %s327
      %s329 = sphi 0, %s327
      %s330 = sphi 0, %s329
      %s344 = sphi 0, %s330
      %s348 = sphi 0, %s348
      %s350 = sphi 0, %s348
      %s351 = sphi 0, %s350
      %s365 = sphi 0, %s351
      %s369 = sphi 0, %s369
      %s371 = sphi 0, %s369
      %s372 = sphi 0, %s371
      %s386 = sphi 0, %s372
      %s390 = sphi 0, %s390
      %s392 = sphi 0, %s390
      %s393 = sphi 0, %s392
      %s407 = sphi 0, %s393
      %s411 = sphi 0, %s411
      %s413 = sphi 0, %s411
      %s414 = sphi 0, %s413
      %s428 = sphi 0, %s414
      %s432 = sphi 0, %s432
      %s434 = sphi 0, %s432
      %s435 = sphi 0, %s434
      %s449 = sphi 0, %s435
      %s453 = sphi 0, %s453
      %s455 = sphi 0, %s453
      %s456 = sphi 0, %s455
      %s470 = sphi 0, %s456
      %s474 = sphi 0, %s474
      %s476 = sphi 0, %s474
      %s477 = sphi 0, %s476
      %s491 = sphi 0, %s477
      %s495 = sphi 0, %s495
      %s497 = sphi 0, %s495
      %s498 = sphi 0, %s497
      %s512 = sphi 0, %s498
      %s518 = sphi 0, %s520
      %s521 = sphi 0, %s518
      %s522 = sphi 0, %s521
      %s538 = sphi 0, %s522
      %s544 = sphi 0, %s546
      %s547 = sphi 0, %s544
      %s548 = sphi 0, %s547
      %s564 = sphi 0, %s548
    $region4: #{cross_modal_attention.1} parent=1 // loop_header_branch
      %39 = sbr.rel (%p37) target = $region8
    $region5: #{cross_modal_attention.1} parent=1 // loop_body
      %s41 = ssub.s32 %s36, 1
      %s42 = ssub.s32 %s36, 2
      %s43 = sadd.s32 %s36, 1
      %s44 = ssub.s32 %s36, %s43
      %p45 = scmp.eq.s32.totalorder %s44, 0
      %s47 = sadd.s32 %s46, 1
      %s48 = scalar_select %p45, %s46, %s47
      %p51 = pneg %p45
      %p52 = scmp.eq.s32.totalorder %s36, 1
      %p53 = por %p51, %p52
      %p54 = scmp.ne.s32.totalorder %s46, %s49
      %p55 = scmp.eq.s32.totalorder %s36, 0
      %p56 = por %p54, %p55
      %p57 = scmp.ne.s32.totalorder %s46, %s49
      %p58 = scmp.eq.s32.totalorder %s41, 1
      %p59 = por %p57, %p58
      %p60 = scmp.ne.s32.totalorder %s49, %s50
      %p61 = scmp.eq.s32.totalorder %s41, 0
      %p62 = por %p60, %p61
      %p63 = scmp.ne.s32.totalorder %s49, %s50
      %p64 = scmp.eq.s32.totalorder %s42, 1
      %p65 = por %p63, %p64
      %p67 = scmp.ne.s32.totalorder %s50, %s66
      %p68 = scmp.eq.s32.totalorder %s42, 0
      %p69 = por %p67, %p68
      %s70 = ssub.s32 %s36, %s43
      %p71 = scmp.eq.s32.totalorder %s70, 0
      %s73 = sadd.s32 %s72, 1
      %s74 = scalar_select %p71, %s72, %s73
      %p77 = pneg %p71
      %p78 = scmp.eq.s32.totalorder %s36, 1
      %p79 = por %p77, %p78
      %p80 = scmp.ne.s32.totalorder %s72, %s75
      %p81 = scmp.eq.s32.totalorder %s36, 0
      %p82 = por %p80, %p81
      %p83 = scmp.ne.s32.totalorder %s72, %s75
      %p84 = scmp.eq.s32.totalorder %s41, 1
      %p85 = por %p83, %p84
      %p86 = scmp.ne.s32.totalorder %s75, %s76
      %p87 = scmp.eq.s32.totalorder %s41, 0
      %p88 = por %p86, %p87
      %p89 = scmp.ne.s32.totalorder %s75, %s76
      %p90 = scmp.eq.s32.totalorder %s42, 1
      %p91 = por %p89, %p90
      %p93 = scmp.ne.s32.totalorder %s76, %s92
      %p94 = scmp.eq.s32.totalorder %s42, 0
      %p95 = por %p93, %p94
      %s97 = sadd.s32 %s96, 1
      %p100 = scmp.eq.s32.totalorder %s36, 1
      %p101 = scmp.ne.s32.totalorder %s96, %s98
      %p102 = scmp.eq.s32.totalorder %s36, 0
      %p103 = por %p101, %p102
      %p104 = scmp.ne.s32.totalorder %s96, %s98
      %p105 = scmp.eq.s32.totalorder %s41, 1
      %p106 = por %p104, %p105
      %p107 = scmp.ne.s32.totalorder %s98, %s99
      %p108 = scmp.eq.s32.totalorder %s41, 0
      %p109 = por %p107, %p108
      %p110 = scmp.ne.s32.totalorder %s98, %s99
      %p111 = scmp.eq.s32.totalorder %s42, 1
      %p112 = por %p110, %p111
      %p114 = scmp.ne.s32.totalorder %s99, %s113
      %p115 = scmp.eq.s32.totalorder %s42, 0
      %p116 = por %p114, %p115
      %s118 = sadd.s32 %s117, 1
      %p121 = scmp.eq.s32.totalorder %s36, 1
      %p122 = scmp.ne.s32.totalorder %s117, %s119
      %p123 = scmp.eq.s32.totalorder %s36, 0
      %p124 = por %p122, %p123
      %p125 = scmp.ne.s32.totalorder %s117, %s119
      %p126 = scmp.eq.s32.totalorder %s41, 1
      %p127 = por %p125, %p126
      %p128 = scmp.ne.s32.totalorder %s119, %s120
      %p129 = scmp.eq.s32.totalorder %s41, 0
      %p130 = por %p128, %p129
      %p131 = scmp.ne.s32.totalorder %s119, %s120
      %p132 = scmp.eq.s32.totalorder %s42, 1
      %p133 = por %p131, %p132
      %p135 = scmp.ne.s32.totalorder %s120, %s134
      %p136 = scmp.eq.s32.totalorder %s42, 0
      %p137 = por %p135, %p136
      %s139 = sadd.s32 %s138, 1
      %p142 = scmp.eq.s32.totalorder %s36, 1
      %p143 = scmp.ne.s32.totalorder %s138, %s140
      %p144 = scmp.eq.s32.totalorder %s36, 0
      %p145 = por %p143, %p144
      %p146 = scmp.ne.s32.totalorder %s138, %s140
      %p147 = scmp.eq.s32.totalorder %s41, 1
      %p148 = por %p146, %p147
      %p149 = scmp.ne.s32.totalorder %s140, %s141
      %p150 = scmp.eq.s32.totalorder %s41, 0
      %p151 = por %p149, %p150
      %p152 = scmp.ne.s32.totalorder %s140, %s141
      %p153 = scmp.eq.s32.totalorder %s42, 1
      %p154 = por %p152, %p153
      %p156 = scmp.ne.s32.totalorder %s141, %s155
      %p157 = scmp.eq.s32.totalorder %s42, 0
      %p158 = por %p156, %p157
      %s160 = sadd.s32 %s159, 1
      %p163 = scmp.eq.s32.totalorder %s36, 1
      %p164 = scmp.ne.s32.totalorder %s159, %s161
      %p165 = scmp.eq.s32.totalorder %s36, 0
      %p166 = por %p164, %p165
      %p167 = scmp.ne.s32.totalorder %s159, %s161
      %p168 = scmp.eq.s32.totalorder %s41, 1
      %p169 = por %p167, %p168
      %p170 = scmp.ne.s32.totalorder %s161, %s162
      %p171 = scmp.eq.s32.totalorder %s41, 0
      %p172 = por %p170, %p171
      %p173 = scmp.ne.s32.totalorder %s161, %s162
      %p174 = scmp.eq.s32.totalorder %s42, 1
      %p175 = por %p173, %p174
      %p177 = scmp.ne.s32.totalorder %s162, %s176
      %p178 = scmp.eq.s32.totalorder %s42, 0
      %p179 = por %p177, %p178
      %s181 = sadd.s32 %s180, 1
      %p184 = scmp.eq.s32.totalorder %s36, 1
      %p185 = scmp.ne.s32.totalorder %s180, %s182
      %p186 = scmp.eq.s32.totalorder %s36, 0
      %p187 = por %p185, %p186
      %p188 = scmp.ne.s32.totalorder %s180, %s182
      %p189 = scmp.eq.s32.totalorder %s41, 1
      %p190 = por %p188, %p189
      %p191 = scmp.ne.s32.totalorder %s182, %s183
      %p192 = scmp.eq.s32.totalorder %s41, 0
      %p193 = por %p191, %p192
      %p194 = scmp.ne.s32.totalorder %s182, %s183
      %p195 = scmp.eq.s32.totalorder %s42, 1
      %p196 = por %p194, %p195
      %p198 = scmp.ne.s32.totalorder %s183, %s197
      %p199 = scmp.eq.s32.totalorder %s42, 0
      %p200 = por %p198, %p199
      %s202 = sadd.s32 %s201, 1
      %p205 = scmp.eq.s32.totalorder %s36, 1
      %p206 = scmp.ne.s32.totalorder %s201, %s203
      %p207 = scmp.eq.s32.totalorder %s36, 0
      %p208 = por %p206, %p207
      %p209 = scmp.ne.s32.totalorder %s201, %s203
      %p210 = scmp.eq.s32.totalorder %s41, 1
      %p211 = por %p209, %p210
      %p212 = scmp.ne.s32.totalorder %s203, %s204
      %p213 = scmp.eq.s32.totalorder %s41, 0
      %p214 = por %p212, %p213
      %p215 = scmp.ne.s32.totalorder %s203, %s204
      %p216 = scmp.eq.s32.totalorder %s42, 1
      %p217 = por %p215, %p216
      %p219 = scmp.ne.s32.totalorder %s204, %s218
      %p220 = scmp.eq.s32.totalorder %s42, 0
      %p221 = por %p219, %p220
      %s223 = sadd.s32 %s222, 1
      %p226 = scmp.eq.s32.totalorder %s36, 1
      %p227 = scmp.ne.s32.totalorder %s222, %s224
      %p228 = scmp.eq.s32.totalorder %s36, 0
      %p229 = por %p227, %p228
      %p230 = scmp.ne.s32.totalorder %s222, %s224
      %p231 = scmp.eq.s32.totalorder %s41, 1
      %p232 = por %p230, %p231
      %p233 = scmp.ne.s32.totalorder %s224, %s225
      %p234 = scmp.eq.s32.totalorder %s41, 0
      %p235 = por %p233, %p234
      %p236 = scmp.ne.s32.totalorder %s224, %s225
      %p237 = scmp.eq.s32.totalorder %s42, 1
      %p238 = por %p236, %p237
      %p240 = scmp.ne.s32.totalorder %s225, %s239
      %p241 = scmp.eq.s32.totalorder %s42, 0
      %p242 = por %p240, %p241
      %s244 = sadd.s32 %s243, 1
      %p247 = scmp.eq.s32.totalorder %s36, 1
      %p248 = scmp.ne.s32.totalorder %s243, %s245
      %p249 = scmp.eq.s32.totalorder %s36, 0
      %p250 = por %p248, %p249
      %p251 = scmp.ne.s32.totalorder %s243, %s245
      %p252 = scmp.eq.s32.totalorder %s41, 1
      %p253 = por %p251, %p252
      %p254 = scmp.ne.s32.totalorder %s245, %s246
      %p255 = scmp.eq.s32.totalorder %s41, 0
      %p256 = por %p254, %p255
      %p257 = scmp.ne.s32.totalorder %s245, %s246
      %p258 = scmp.eq.s32.totalorder %s42, 1
      %p259 = por %p257, %p258
      %p261 = scmp.ne.s32.totalorder %s246, %s260
      %p262 = scmp.eq.s32.totalorder %s42, 0
      %p263 = por %p261, %p262
      %s265 = sadd.s32 %s264, 1
      %p268 = scmp.eq.s32.totalorder %s36, 1
      %p269 = scmp.ne.s32.totalorder %s264, %s266
      %p270 = scmp.eq.s32.totalorder %s36, 0
      %p271 = por %p269, %p270
      %p272 = scmp.ne.s32.totalorder %s264, %s266
      %p273 = scmp.eq.s32.totalorder %s41, 1
      %p274 = por %p272, %p273
      %p275 = scmp.ne.s32.totalorder %s266, %s267
      %p276 = scmp.eq.s32.totalorder %s41, 0
      %p277 = por %p275, %p276
      %p278 = scmp.ne.s32.totalorder %s266, %s267
      %p279 = scmp.eq.s32.totalorder %s42, 1
      %p280 = por %p278, %p279
      %p282 = scmp.ne.s32.totalorder %s267, %s281
      %p283 = scmp.eq.s32.totalorder %s42, 0
      %p284 = por %p282, %p283
      %s286 = sadd.s32 %s285, 1
      %p289 = scmp.eq.s32.totalorder %s36, 1
      %p290 = scmp.ne.s32.totalorder %s285, %s287
      %p291 = scmp.eq.s32.totalorder %s36, 0
      %p292 = por %p290, %p291
      %p293 = scmp.ne.s32.totalorder %s285, %s287
      %p294 = scmp.eq.s32.totalorder %s41, 1
      %p295 = por %p293, %p294
      %p296 = scmp.ne.s32.totalorder %s287, %s288
      %p297 = scmp.eq.s32.totalorder %s41, 0
      %p298 = por %p296, %p297
      %p299 = scmp.ne.s32.totalorder %s287, %s288
      %p300 = scmp.eq.s32.totalorder %s42, 1
      %p301 = por %p299, %p300
      %p303 = scmp.ne.s32.totalorder %s288, %s302
      %p304 = scmp.eq.s32.totalorder %s42, 0
      %p305 = por %p303, %p304
      %s307 = sadd.s32 %s306, 1
      %p310 = scmp.eq.s32.totalorder %s36, 1
      %p311 = scmp.ne.s32.totalorder %s306, %s308
      %p312 = scmp.eq.s32.totalorder %s36, 0
      %p313 = por %p311, %p312
      %p314 = scmp.ne.s32.totalorder %s306, %s308
      %p315 = scmp.eq.s32.totalorder %s41, 1
      %p316 = por %p314, %p315
      %p317 = scmp.ne.s32.totalorder %s308, %s309
      %p318 = scmp.eq.s32.totalorder %s41, 0
      %p319 = por %p317, %p318
      %p320 = scmp.ne.s32.totalorder %s308, %s309
      %p321 = scmp.eq.s32.totalorder %s42, 1
      %p322 = por %p320, %p321
      %p324 = scmp.ne.s32.totalorder %s309, %s323
      %p325 = scmp.eq.s32.totalorder %s42, 0
      %p326 = por %p324, %p325
      %s328 = sadd.s32 %s327, 1
      %p331 = scmp.eq.s32.totalorder %s36, 1
      %p332 = scmp.ne.s32.totalorder %s327, %s329
      %p333 = scmp.eq.s32.totalorder %s36, 0
      %p334 = por %p332, %p333
      %p335 = scmp.ne.s32.totalorder %s327, %s329
      %p336 = scmp.eq.s32.totalorder %s41, 1
      %p337 = por %p335, %p336
      %p338 = scmp.ne.s32.totalorder %s329, %s330
      %p339 = scmp.eq.s32.totalorder %s41, 0
      %p340 = por %p338, %p339
      %p341 = scmp.ne.s32.totalorder %s329, %s330
      %p342 = scmp.eq.s32.totalorder %s42, 1
      %p343 = por %p341, %p342
      %p345 = scmp.ne.s32.totalorder %s330, %s344
      %p346 = scmp.eq.s32.totalorder %s42, 0
      %p347 = por %p345, %p346
      %s349 = sadd.s32 %s348, 1
      %p352 = scmp.eq.s32.totalorder %s36, 1
      %p353 = scmp.ne.s32.totalorder %s348, %s350
      %p354 = scmp.eq.s32.totalorder %s36, 0
      %p355 = por %p353, %p354
      %p356 = scmp.ne.s32.totalorder %s348, %s350
      %p357 = scmp.eq.s32.totalorder %s41, 1
      %p358 = por %p356, %p357
      %p359 = scmp.ne.s32.totalorder %s350, %s351
      %p360 = scmp.eq.s32.totalorder %s41, 0
      %p361 = por %p359, %p360
      %p362 = scmp.ne.s32.totalorder %s350, %s351
      %p363 = scmp.eq.s32.totalorder %s42, 1
      %p364 = por %p362, %p363
      %p366 = scmp.ne.s32.totalorder %s351, %s365
      %p367 = scmp.eq.s32.totalorder %s42, 0
      %p368 = por %p366, %p367
      %s370 = sadd.s32 %s369, 1
      %p373 = scmp.eq.s32.totalorder %s36, 1
      %p374 = scmp.ne.s32.totalorder %s369, %s371
      %p375 = scmp.eq.s32.totalorder %s36, 0
      %p376 = por %p374, %p375
      %p377 = scmp.ne.s32.totalorder %s369, %s371
      %p378 = scmp.eq.s32.totalorder %s41, 1
      %p379 = por %p377, %p378
      %p380 = scmp.ne.s32.totalorder %s371, %s372
      %p381 = scmp.eq.s32.totalorder %s41, 0
      %p382 = por %p380, %p381
      %p383 = scmp.ne.s32.totalorder %s371, %s372
      %p384 = scmp.eq.s32.totalorder %s42, 1
      %p385 = por %p383, %p384
      %p387 = scmp.ne.s32.totalorder %s372, %s386
      %p388 = scmp.eq.s32.totalorder %s42, 0
      %p389 = por %p387, %p388
      %s391 = sadd.s32 %s390, 1
      %p394 = scmp.eq.s32.totalorder %s36, 1
      %p395 = scmp.ne.s32.totalorder %s390, %s392
      %p396 = scmp.eq.s32.totalorder %s36, 0
      %p397 = por %p395, %p396
      %p398 = scmp.ne.s32.totalorder %s390, %s392
      %p399 = scmp.eq.s32.totalorder %s41, 1
      %p400 = por %p398, %p399
      %p401 = scmp.ne.s32.totalorder %s392, %s393
      %p402 = scmp.eq.s32.totalorder %s41, 0
      %p403 = por %p401, %p402
      %p404 = scmp.ne.s32.totalorder %s392, %s393
      %p405 = scmp.eq.s32.totalorder %s42, 1
      %p406 = por %p404, %p405
      %p408 = scmp.ne.s32.totalorder %s393, %s407
      %p409 = scmp.eq.s32.totalorder %s42, 0
      %p410 = por %p408, %p409
      %s412 = sadd.s32 %s411, 1
      %p415 = scmp.eq.s32.totalorder %s36, 1
      %p416 = scmp.ne.s32.totalorder %s411, %s413
      %p417 = scmp.eq.s32.totalorder %s36, 0
      %p418 = por %p416, %p417
      %p419 = scmp.ne.s32.totalorder %s411, %s413
      %p420 = scmp.eq.s32.totalorder %s41, 1
      %p421 = por %p419, %p420
      %p422 = scmp.ne.s32.totalorder %s413, %s414
      %p423 = scmp.eq.s32.totalorder %s41, 0
      %p424 = por %p422, %p423
      %p425 = scmp.ne.s32.totalorder %s413, %s414
      %p426 = scmp.eq.s32.totalorder %s42, 1
      %p427 = por %p425, %p426
      %p429 = scmp.ne.s32.totalorder %s414, %s428
      %p430 = scmp.eq.s32.totalorder %s42, 0
      %p431 = por %p429, %p430
      %s433 = sadd.s32 %s432, 1
      %p436 = scmp.eq.s32.totalorder %s36, 1
      %p437 = scmp.ne.s32.totalorder %s432, %s434
      %p438 = scmp.eq.s32.totalorder %s36, 0
      %p439 = por %p437, %p438
      %p440 = scmp.ne.s32.totalorder %s432, %s434
      %p441 = scmp.eq.s32.totalorder %s41, 1
      %p442 = por %p440, %p441
      %p443 = scmp.ne.s32.totalorder %s434, %s435
      %p444 = scmp.eq.s32.totalorder %s41, 0
      %p445 = por %p443, %p444
      %p446 = scmp.ne.s32.totalorder %s434, %s435
      %p447 = scmp.eq.s32.totalorder %s42, 1
      %p448 = por %p446, %p447
      %p450 = scmp.ne.s32.totalorder %s435, %s449
      %p451 = scmp.eq.s32.totalorder %s42, 0
      %p452 = por %p450, %p451
      %s454 = sadd.s32 %s453, 1
      %p457 = scmp.eq.s32.totalorder %s36, 1
      %p458 = scmp.ne.s32.totalorder %s453, %s455
      %p459 = scmp.eq.s32.totalorder %s36, 0
      %p460 = por %p458, %p459
      %p461 = scmp.ne.s32.totalorder %s453, %s455
      %p462 = scmp.eq.s32.totalorder %s41, 1
      %p463 = por %p461, %p462
      %p464 = scmp.ne.s32.totalorder %s455, %s456
      %p465 = scmp.eq.s32.totalorder %s41, 0
      %p466 = por %p464, %p465
      %p467 = scmp.ne.s32.totalorder %s455, %s456
      %p468 = scmp.eq.s32.totalorder %s42, 1
      %p469 = por %p467, %p468
      %p471 = scmp.ne.s32.totalorder %s456, %s470
      %p472 = scmp.eq.s32.totalorder %s42, 0
      %p473 = por %p471, %p472
      %s475 = sadd.s32 %s474, 1
      %p478 = scmp.eq.s32.totalorder %s36, 1
      %p479 = scmp.ne.s32.totalorder %s474, %s476
      %p480 = scmp.eq.s32.totalorder %s36, 0
      %p481 = por %p479, %p480
      %p482 = scmp.ne.s32.totalorder %s474, %s476
      %p483 = scmp.eq.s32.totalorder %s41, 1
      %p484 = por %p482, %p483
      %p485 = scmp.ne.s32.totalorder %s476, %s477
      %p486 = scmp.eq.s32.totalorder %s41, 0
      %p487 = por %p485, %p486
      %p488 = scmp.ne.s32.totalorder %s476, %s477
      %p489 = scmp.eq.s32.totalorder %s42, 1
      %p490 = por %p488, %p489
      %p492 = scmp.ne.s32.totalorder %s477, %s491
      %p493 = scmp.eq.s32.totalorder %s42, 0
      %p494 = por %p492, %p493
      %s496 = sadd.s32 %s495, 1
      %p499 = scmp.eq.s32.totalorder %s36, 1
      %p500 = scmp.ne.s32.totalorder %s495, %s497
      %p501 = scmp.eq.s32.totalorder %s36, 0
      %p502 = por %p500, %p501
      %p503 = scmp.ne.s32.totalorder %s495, %s497
      %p504 = scmp.eq.s32.totalorder %s41, 1
      %p505 = por %p503, %p504
      %p506 = scmp.ne.s32.totalorder %s497, %s498
      %p507 = scmp.eq.s32.totalorder %s41, 0
      %p508 = por %p506, %p507
      %p509 = scmp.ne.s32.totalorder %s497, %s498
      %p510 = scmp.eq.s32.totalorder %s42, 1
      %p511 = por %p509, %p510
      %p513 = scmp.ne.s32.totalorder %s498, %s512
      %p514 = scmp.eq.s32.totalorder %s42, 0
      %p515 = por %p513, %p514
      %s516 = ssub.s32 %s36, %s43
      %p517 = scmp.eq.s32.totalorder %s516, 0
      %s519 = sadd.s32 %s518, 1
      %s520 = scalar_select %p517, %s518, %s519
      %p523 = pneg %p517
      %p524 = scmp.eq.s32.totalorder %s36, 1
      %p525 = por %p523, %p524
      %p526 = scmp.ne.s32.totalorder %s518, %s521
      %p527 = scmp.eq.s32.totalorder %s36, 0
      %p528 = por %p526, %p527
      %p529 = scmp.ne.s32.totalorder %s518, %s521
      %p530 = scmp.eq.s32.totalorder %s41, 1
      %p531 = por %p529, %p530
      %p532 = scmp.ne.s32.totalorder %s521, %s522
      %p533 = scmp.eq.s32.totalorder %s41, 0
      %p534 = por %p532, %p533
      %p535 = scmp.ne.s32.totalorder %s521, %s522
      %p536 = scmp.eq.s32.totalorder %s42, 1
      %p537 = por %p535, %p536
      %p539 = scmp.ne.s32.totalorder %s522, %s538
      %p540 = scmp.eq.s32.totalorder %s42, 0
      %p541 = por %p539, %p540
      %s542 = ssub.s32 %s36, %s43
      %p543 = scmp.eq.s32.totalorder %s542, 0
      %s545 = sadd.s32 %s544, 1
      %s546 = scalar_select %p543, %s544, %s545
      %p549 = pneg %p543
      %p550 = scmp.eq.s32.totalorder %s36, 1
      %p551 = por %p549, %p550
      %p552 = scmp.ne.s32.totalorder %s544, %s547
      %p553 = scmp.eq.s32.totalorder %s36, 0
      %p554 = por %p552, %p553
      %p555 = scmp.ne.s32.totalorder %s544, %s547
      %p556 = scmp.eq.s32.totalorder %s41, 1
      %p557 = por %p555, %p556
      %p558 = scmp.ne.s32.totalorder %s547, %s548
      %p559 = scmp.eq.s32.totalorder %s41, 0
      %p560 = por %p558, %p559
      %p561 = scmp.ne.s32.totalorder %s547, %s548
      %p562 = scmp.eq.s32.totalorder %s42, 1
      %p563 = por %p561, %p562
      %p565 = scmp.ne.s32.totalorder %s548, %s564
      %p566 = scmp.eq.s32.totalorder %s42, 0
      %p567 = por %p565, %p566
      %p568 = scmp.le.s32.totalorder 1, %s36
      %p569 = scmp.lt.s32.totalorder %s36, 3
      %p570 = pnand %p568, %p569
      %p571 = pneg %p570
      // Predicated region
      $region9: #{cross_modal_attention.1} parent=5 // pred_check
        _
      $region10: #{cross_modal_attention.1} parent=5 // pred_check_branch
        %573 = sbr.rel (%p570) target = $region12
      $region11: #{cross_modal_attention.1} parent=5 // pred_region
        %s574 = ssub.s32 %s36, 1
        // Predicated region
        $region13: #{cross_modal_attention.1} parent=11 // pred_check
          %p575 = pneg %p109
        $region14: #{cross_modal_attention.1} parent=11 // pred_check_branch
          %577 = sbr.rel (%p575) target = $region16
        $region15: #{cross_modal_attention.1} parent=11 // pred_region
          _
        $region16: #{cross_modal_attention.1} parent=11 // pred_fallthru
          _
        // Predicated region
        $region17: #{cross_modal_attention.1} parent=11 // pred_check
          %p578 = pneg %p130
        $region18: #{cross_modal_attention.1} parent=11 // pred_check_branch
          %580 = sbr.rel (%p578) target = $region20
        $region19: #{cross_modal_attention.1} parent=11 // pred_region
          _
        $region20: #{cross_modal_attention.1} parent=11 // pred_fallthru
          _
        // Predicated region
        $region21: #{cross_modal_attention.1} parent=11 // pred_check
          %p581 = pneg %p151
        $region22: #{cross_modal_attention.1} parent=11 // pred_check_branch
          %583 = sbr.rel (%p581) target = $region24
        $region23: #{cross_modal_attention.1} parent=11 // pred_region
          _
        $region24: #{cross_modal_attention.1} parent=11 // pred_fallthru
          _
        // Predicated region
        $region25: #{cross_modal_attention.1} parent=11 // pred_check
          %p584 = pneg %p172
        $region26: #{cross_modal_attention.1} parent=11 // pred_check_branch
          %586 = sbr.rel (%p584) target = $region28
        $region27: #{cross_modal_attention.1} parent=11 // pred_region
          _
        $region28: #{cross_modal_attention.1} parent=11 // pred_fallthru
          _
        // Predicated region
        $region29: #{cross_modal_attention.1} parent=11 // pred_check
          %p587 = pneg %p193
        $region30: #{cross_modal_attention.1} parent=11 // pred_check_branch
          %589 = sbr.rel (%p587) target = $region32
        $region31: #{cross_modal_attention.1} parent=11 // pred_region
          _
        $region32: #{cross_modal_attention.1} parent=11 // pred_fallthru
          _
        // Predicated region
        $region33: #{cross_modal_attention.1} parent=11 // pred_check
          %p590 = pneg %p214
        $region34: #{cross_modal_attention.1} parent=11 // pred_check_branch
          %592 = sbr.rel (%p590) target = $region36
        $region35: #{cross_modal_attention.1} parent=11 // pred_region
          _
        $region36: #{cross_modal_attention.1} parent=11 // pred_fallthru
          _
        // Predicated region
        $region37: #{cross_modal_attention.1} parent=11 // pred_check
          %p593 = pneg %p235
        $region38: #{cross_modal_attention.1} parent=11 // pred_check_branch
          %595 = sbr.rel (%p593) target = $region40
        $region39: #{cross_modal_attention.1} parent=11 // pred_region
          _
        $region40: #{cross_modal_attention.1} parent=11 // pred_fallthru
          _
        // Predicated region
        $region41: #{cross_modal_attention.1} parent=11 // pred_check
          %p596 = pneg %p256
        $region42: #{cross_modal_attention.1} parent=11 // pred_check_branch
          %598 = sbr.rel (%p596) target = $region44
        $region43: #{cross_modal_attention.1} parent=11 // pred_region
          _
        $region44: #{cross_modal_attention.1} parent=11 // pred_fallthru
          _
        // Predicated region
        $region45: #{cross_modal_attention.1} parent=11 // pred_check
          %p599 = pneg %p277
        $region46: #{cross_modal_attention.1} parent=11 // pred_check_branch
          %601 = sbr.rel (%p599) target = $region48
        $region47: #{cross_modal_attention.1} parent=11 // pred_region
          _
        $region48: #{cross_modal_attention.1} parent=11 // pred_fallthru
          _
        // Predicated region
        $region49: #{cross_modal_attention.1} parent=11 // pred_check
          %p602 = pneg %p298
        $region50: #{cross_modal_attention.1} parent=11 // pred_check_branch
          %604 = sbr.rel (%p602) target = $region52
        $region51: #{cross_modal_attention.1} parent=11 // pred_region
          _
        $region52: #{cross_modal_attention.1} parent=11 // pred_fallthru
          _
        // Predicated region
        $region53: #{cross_modal_attention.1} parent=11 // pred_check
          %p605 = pneg %p319
        $region54: #{cross_modal_attention.1} parent=11 // pred_check_branch
          %607 = sbr.rel (%p605) target = $region56
        $region55: #{cross_modal_attention.1} parent=11 // pred_region
          _
        $region56: #{cross_modal_attention.1} parent=11 // pred_fallthru
          _
        // Predicated region
        $region57: #{cross_modal_attention.1} parent=11 // pred_check
          %p608 = pneg %p340
        $region58: #{cross_modal_attention.1} parent=11 // pred_check_branch
          %610 = sbr.rel (%p608) target = $region60
        $region59: #{cross_modal_attention.1} parent=11 // pred_region
          _
        $region60: #{cross_modal_attention.1} parent=11 // pred_fallthru
          _
        // Predicated region
        $region61: #{cross_modal_attention.1} parent=11 // pred_check
          %p611 = pneg %p361
        $region62: #{cross_modal_attention.1} parent=11 // pred_check_branch
          %613 = sbr.rel (%p611) target = $region64
        $region63: #{cross_modal_attention.1} parent=11 // pred_region
          _
        $region64: #{cross_modal_attention.1} parent=11 // pred_fallthru
          _
        // Predicated region
        $region65: #{cross_modal_attention.1} parent=11 // pred_check
          %p614 = pneg %p382
        $region66: #{cross_modal_attention.1} parent=11 // pred_check_branch
          %616 = sbr.rel (%p614) target = $region68
        $region67: #{cross_modal_attention.1} parent=11 // pred_region
          _
        $region68: #{cross_modal_attention.1} parent=11 // pred_fallthru
          _
        // Predicated region
        $region69: #{cross_modal_attention.1} parent=11 // pred_check
          %p617 = pneg %p403
        $region70: #{cross_modal_attention.1} parent=11 // pred_check_branch
          %619 = sbr.rel (%p617) target = $region72
        $region71: #{cross_modal_attention.1} parent=11 // pred_region
          _
        $region72: #{cross_modal_attention.1} parent=11 // pred_fallthru
          _
        // Predicated region
        $region73: #{cross_modal_attention.1} parent=11 // pred_check
          %p620 = pneg %p424
        $region74: #{cross_modal_attention.1} parent=11 // pred_check_branch
          %622 = sbr.rel (%p620) target = $region76
        $region75: #{cross_modal_attention.1} parent=11 // pred_region
          _
        $region76: #{cross_modal_attention.1} parent=11 // pred_fallthru
          _
        // Predicated region
        $region77: #{cross_modal_attention.1} parent=11 // pred_check
          %p623 = pneg %p445
        $region78: #{cross_modal_attention.1} parent=11 // pred_check_branch
          %625 = sbr.rel (%p623) target = $region80
        $region79: #{cross_modal_attention.1} parent=11 // pred_region
          _
        $region80: #{cross_modal_attention.1} parent=11 // pred_fallthru
          _
        // Predicated region
        $region81: #{cross_modal_attention.1} parent=11 // pred_check
          %p626 = pneg %p466
        $region82: #{cross_modal_attention.1} parent=11 // pred_check_branch
          %628 = sbr.rel (%p626) target = $region84
        $region83: #{cross_modal_attention.1} parent=11 // pred_region
          _
        $region84: #{cross_modal_attention.1} parent=11 // pred_fallthru
          _
        // Predicated region
        $region85: #{cross_modal_attention.1} parent=11 // pred_check
          %p629 = pneg %p487
        $region86: #{cross_modal_attention.1} parent=11 // pred_check_branch
          %631 = sbr.rel (%p629) target = $region88
        $region87: #{cross_modal_attention.1} parent=11 // pred_region
          _
        $region88: #{cross_modal_attention.1} parent=11 // pred_fallthru
          _
        // Predicated region
        $region89: #{cross_modal_attention.1} parent=11 // pred_check
          %p632 = pneg %p508
        $region90: #{cross_modal_attention.1} parent=11 // pred_check_branch
          %634 = sbr.rel (%p632) target = $region92
        $region91: #{cross_modal_attention.1} parent=11 // pred_region
          _
        $region92: #{cross_modal_attention.1} parent=11 // pred_fallthru
          _
      $region12: #{cross_modal_attention.1} parent=5 // pred_fallthru
        _
      %p635 = scmp.lt.s32.totalorder %s36, 2
      // Predicated region
      $region93: #{cross_modal_attention.1} parent=5 // pred_check
        %p636 = pneg %p635
      $region94: #{cross_modal_attention.1} parent=5 // pred_check_branch
        %638 = sbr.rel (%p636) target = $region96
      $region95: #{cross_modal_attention.1} parent=5 // pred_region
        // Predicated region
        $region97: #{cross_modal_attention.1} parent=95 // pred_check
          %p639 = pneg %p56
        $region98: #{cross_modal_attention.1} parent=95 // pred_check_branch
          %641 = sbr.rel (%p639) target = $region100
        $region99: #{cross_modal_attention.1} parent=95 // pred_region
          %p642 = scmp.lt.s32.totalorder %s36, 1
          %s643 = scalar_select %p642, %s36, 1
          %s644 = smul.addr %s643, 8
          %s645 = scalar_lea.vmem %s0, %s644
        $region100: #{cross_modal_attention.1} parent=95 // pred_fallthru
          _
        // Predicated region
        $region101: #{cross_modal_attention.1} parent=95 // pred_check
          %p646 = pneg %p82
        $region102: #{cross_modal_attention.1} parent=95 // pred_check_branch
          %648 = sbr.rel (%p646) target = $region104
        $region103: #{cross_modal_attention.1} parent=95 // pred_region
          %p649 = scmp.lt.s32.totalorder %s36, 1
          %s650 = scalar_select %p649, %s36, 1
          %s651 = smul.addr %s650, 8
          %s652 = scalar_lea.vmem %s1, %s651
        $region104: #{cross_modal_attention.1} parent=95 // pred_fallthru
          _
      $region96: #{cross_modal_attention.1} parent=5 // pred_fallthru
        _
      %p653 = scmp.le.s32.totalorder 1, %s36
      %p654 = scmp.lt.s32.totalorder %s36, 3
      %p655 = pnand %p653, %p654
      %p656 = pneg %p655
      // Predicated region
      $region105: #{cross_modal_attention.1} parent=5 // pred_check
        _
      $region106: #{cross_modal_attention.1} parent=5 // pred_check_branch
        %658 = sbr.rel (%p655) target = $region108
      $region107: #{cross_modal_attention.1} parent=5 // pred_region
        %s659 = ssub.s32 %s36, 1
        %p660 = scmp.lt.s32.totalorder %s41, 1
        %s661 = scalar_select %p660, %s41, 1
        %s662 = smul.addr %s661, 8
        %s663 = scalar_lea.vmem %s0, %s662
        %p664 = pneg %p62
        %p665 = pneg %p59
        %p666 = scmp.lt.s32.totalorder %s41, 1
        %s667 = scalar_select %p666, %s41, 1
        %s668 = smul.addr %s667, 8
        %s669 = scalar_lea.vmem %s1, %s668
        %p670 = pneg %p88
        %p671 = pneg %p85
        %p672 = pneg %p109
        %p673 = pneg %p106
        %p674 = pneg %p130
        %p675 = pneg %p127
        %p676 = pneg %p151
        %p677 = pneg %p148
        %p678 = pneg %p172
        %p679 = pneg %p169
        %p680 = pneg %p193
        %p681 = pneg %p190
        %p682 = pneg %p214
        %p683 = pneg %p211
        %p684 = pneg %p235
        %p685 = pneg %p232
        %p686 = pneg %p256
        %p687 = pneg %p253
        %p688 = pneg %p277
        %p689 = pneg %p274
        %p690 = pneg %p298
        %p691 = pneg %p295
        %p692 = pneg %p319
        %p693 = pneg %p316
        %p694 = pneg %p340
        %p695 = pneg %p337
        %p696 = pneg %p361
        %p697 = pneg %p358
        %p698 = pneg %p382
        %p699 = pneg %p379
        %p700 = pneg %p403
        %p701 = pneg %p400
        %p702 = pneg %p424
        %p703 = pneg %p421
        %p704 = pneg %p445
        %p705 = pneg %p442
        %p706 = pneg %p466
        %p707 = pneg %p463
        %p708 = pneg %p487
        %p709 = pneg %p484
        %p710 = pneg %p508
        %p711 = pneg %p505
        %p712 = pneg %p534
        %p713 = pneg %p531
        %s714 = sand.u32 %s521, 1
        %s715 = scalar_lea.sflag [#allocation3], %s714
        %s716 = sand.u32 %s521, 1
        %s717 = smul.addr %s716, 8
        %s718 = scalar_lea.vmem [#allocation2], %s717
        %p719 = pneg %p560
        %p720 = pneg %p557
        %s721 = sand.u32 %s547, 1
        %s722 = scalar_lea.sflag [#allocation5], %s721
        %s723 = sand.u32 %s547, 1
        %s724 = smul.addr %s723, 8
        %s725 = scalar_lea.vmem [#allocation4], %s724
        %p726 = scmp.lt.s32.totalorder %s41, 1
        %s727 = scalar_select %p726, %s41, 1
        %s728 = smul.addr %s727, 8
        %s729 = scalar_lea.vmem %s0, %s728
        %p730 = scmp.lt.s32.totalorder %s41, 1
        %s731 = scalar_select %p730, %s41, 1
        %s732 = smul.addr %s731, 8
        %s733 = scalar_lea.vmem %s1, %s732
        %v735 = vld [vmem:[%s729] sm:$0xff]
        %v736 = vld [vmem:[%s733] sm:$0xff]
        %v737 = vpack.c.bf16 %v735, %v735
        %v738 = vpack.c.bf16 %v736, %v736
        %v739 = vld [vmem:[%s2] sm:$0xf]
        %v740 = vld [vmem:[%s2 + $0xc] sm:$0xf]
        %v741 = vld [vmem:[%s2 + $0x18] sm:$0xf]
        %v742 = vld [vmem:[%s2 + $0x24] sm:$0xf]
        %v743 = vld [vmem:[%s2 + $0x30] sm:$0xf]
        %v744 = vld [vmem:[%s2 + $0x3c] sm:$0xf]
        %v745 = vld [vmem:[%s2 + $0x48] sm:$0xf]
        %v746 = vld [vmem:[%s2 + $0x54] sm:$0xf]
        %v747 = vld [vmem:[%s2 + $0x60] sm:$0xf]
        %v748 = vld [vmem:[%s2 + $0x6c] sm:$0xf]
        %v749 = vld [vmem:[%s2 + $0x78] sm:$0xf]
        %v750 = vld [vmem:[%s2 + $0x84] sm:$0xf]
        %v751 = vld [vmem:[%s2 + $0x90] sm:$0xf]
        %v752 = vld [vmem:[%s2 + $0x9c] sm:$0xf]
        %v753 = vld [vmem:[%s2 + $0xa8] sm:$0xf]
        %v754 = vld [vmem:[%s2 + $0xb4] sm:$0xf]
        %v755 = vld [vmem:[%s3] sm:$0x1]
        %v757 = vlaneseq
        %v758 = vshrl.u32 %v757, 7
        %v759 = vsub.s32 0, %v758
        %v760 = vrot.slane %v755, %v759
        %v778 = vunpack.c.l.b16 %v739
        %v779 = vunpack.c.l.b16 %v740
        %v780 = vunpack.c.l.b16 %v741
        %v781 = vunpack.c.l.b16 %v742
        %v782 = vunpack.c.l.b16 %v743
        %v783 = vunpack.c.l.b16 %v744
        %v784 = vunpack.c.l.b16 %v745
        %v785 = vunpack.c.l.b16 %v746
        %v786 = vunpack.c.l.b16 %v747
        %v787 = vunpack.c.l.b16 %v748
        %v788 = vunpack.c.l.b16 %v749
        %v789 = vunpack.c.l.b16 %v750
        %v790 = vunpack.c.l.b16 %v751
        %v791 = vunpack.c.l.b16 %v752
        %v792 = vunpack.c.l.b16 %v753
        %v793 = vunpack.c.l.b16 %v754
        %v794 = vpack.c.b16 %v779, %v778
        %v795 = vpack.c.b16 %v781, %v780
        %v796 = vpack.c.b16 %v783, %v782
        %v797 = vpack.c.b16 %v785, %v784
        %v798 = vpack.c.b16 %v787, %v786
        %v799 = vpack.c.b16 %v789, %v788
        %v800 = vpack.c.b16 %v791, %v790
        %v801 = vpack.c.b16 %v793, %v792
        %810 = vmatprep.subr.bf16.mxu0 0
        %811 = vmatpush1.bf16.msra.mxu0 %v794
        %812 = vmatprep.subr.bf16.mxu0 0
        %813 = vmatpush1.bf16.msra.mxu0 %v795
        %814 = vmatprep.subr.bf16.mxu0 0
        %815 = vmatpush1.bf16.msra.mxu0 %v796
        %816 = vmatprep.subr.bf16.mxu0 0
        %817 = vmatpush1.bf16.msra.mxu0 %v797
        %818 = vmatprep.subr.bf16.mxu0 0
        %819 = vmatpush1.bf16.msra.mxu0 %v798
        %820 = vmatprep.subr.bf16.mxu0 0
        %821 = vmatpush1.bf16.msra.mxu0 %v799
        %822 = vmatprep.subr.bf16.mxu0 0
        %823 = vmatpush1.bf16.msra.mxu0 %v800
        %824 = vmatprep.subr.bf16.mxu0 0
        %825 = vmatpush1.bf16.msra.mxu0 %v801
        %826 = vmatprep.subr.bf16.mxu0 0
        %827 = vmatpush1.bf16.msra.mxu0 0
        %828 = vmatprep.subr.bf16.mxu0 0
        %829 = vmatpush1.bf16.msra.mxu0 0
        %830 = vmatprep.subr.bf16.mxu0 0
        %831 = vmatpush1.bf16.msra.mxu0 0
        %832 = vmatprep.subr.bf16.mxu0 0
        %833 = vmatpush1.bf16.msra.mxu0 0
        %834 = vmatprep.subr.bf16.mxu0 0
        %835 = vmatpush1.bf16.msra.mxu0 0
        %836 = vmatprep.subr.bf16.mxu0 0
        %837 = vmatpush1.bf16.msra.mxu0 0
        %838 = vmatprep.subr.bf16.mxu0 0
        %839 = vmatpush1.bf16.msra.mxu0 0
        %840 = vmatprep.subr.bf16.mxu0 0
        %841 = vmatpush1.bf16.msra.mxu0 0
        %842 = vmatprep.mubr.bf16.mxu0 0
        %843 = vmatmul.mubr.bf16.gmra.mrb[0].mxu0 %v737
        %v844 = vpop.f32.mrb[0].mxu0
        %v845 = vadd.f32 %v760, %v844
        %v846 = vpop.f32.mrb[0].mxu0
        %v847 = vpop.f32.mrb[0].mxu0
        %v848 = vpop.f32.mrb[0].mxu0
        %849 = vdwg.mxu0
        %v850 = vld [vmem:[%s2 + $0x4] sm:$0xf]
        %v851 = vld [vmem:[%s2 + $0x10] sm:$0xf]
        %v852 = vld [vmem:[%s2 + $0x1c] sm:$0xf]
        %v853 = vld [vmem:[%s2 + $0x28] sm:$0xf]
        %v854 = vld [vmem:[%s2 + $0x34] sm:$0xf]
        %v855 = vld [vmem:[%s2 + $0x40] sm:$0xf]
        %v856 = vld [vmem:[%s2 + $0x4c] sm:$0xf]
        %v857 = vld [vmem:[%s2 + $0x58] sm:$0xf]
        %v858 = vld [vmem:[%s2 + $0x64] sm:$0xf]
        %v859 = vld [vmem:[%s2 + $0x70] sm:$0xf]
        %v860 = vld [vmem:[%s2 + $0x7c] sm:$0xf]
        %v861 = vld [vmem:[%s2 + $0x88] sm:$0xf]
        %v862 = vld [vmem:[%s2 + $0x94] sm:$0xf]
        %v863 = vld [vmem:[%s2 + $0xa0] sm:$0xf]
        %v864 = vld [vmem:[%s2 + $0xac] sm:$0xf]
        %v865 = vld [vmem:[%s2 + $0xb8] sm:$0xf]
        %v866 = vld [vmem:[%s3 + $0x1] sm:$0x1]
        %v868 = vlaneseq
        %v869 = vshrl.u32 %v868, 7
        %v870 = vsub.s32 0, %v869
        %v871 = vrot.slane %v866, %v870
        %v889 = vunpack.c.l.b16 %v850
        %v890 = vunpack.c.l.b16 %v851
        %v891 = vunpack.c.l.b16 %v852
        %v892 = vunpack.c.l.b16 %v853
        %v893 = vunpack.c.l.b16 %v854
        %v894 = vunpack.c.l.b16 %v855
        %v895 = vunpack.c.l.b16 %v856
        %v896 = vunpack.c.l.b16 %v857
        %v897 = vunpack.c.l.b16 %v858
        %v898 = vunpack.c.l.b16 %v859
        %v899 = vunpack.c.l.b16 %v860
        %v900 = vunpack.c.l.b16 %v861
        %v901 = vunpack.c.l.b16 %v862
        %v902 = vunpack.c.l.b16 %v863
        %v903 = vunpack.c.l.b16 %v864
        %v904 = vunpack.c.l.b16 %v865
        %v905 = vpack.c.b16 %v890, %v889
        %v906 = vpack.c.b16 %v892, %v891
        %v907 = vpack.c.b16 %v894, %v893
        %v908 = vpack.c.b16 %v896, %v895
        %v909 = vpack.c.b16 %v898, %v897
        %v910 = vpack.c.b16 %v900, %v899
        %v911 = vpack.c.b16 %v902, %v901
        %v912 = vpack.c.b16 %v904, %v903
        %921 = vmatprep.subr.bf16.mxu0 0
        %922 = vmatpush1.bf16.msra.mxu0 %v905
        %923 = vmatprep.subr.bf16.mxu0 0
        %924 = vmatpush1.bf16.msra.mxu0 %v906
        %925 = vmatprep.subr.bf16.mxu0 0
        %926 = vmatpush1.bf16.msra.mxu0 %v907
        %927 = vmatprep.subr.bf16.mxu0 0
        %928 = vmatpush1.bf16.msra.mxu0 %v908
        %929 = vmatprep.subr.bf16.mxu0 0
        %930 = vmatpush1.bf16.msra.mxu0 %v909
        %931 = vmatprep.subr.bf16.mxu0 0
        %932 = vmatpush1.bf16.msra.mxu0 %v910
        %933 = vmatprep.subr.bf16.mxu0 0
        %934 = vmatpush1.bf16.msra.mxu0 %v911
        %935 = vmatprep.subr.bf16.mxu0 0
        %936 = vmatpush1.bf16.msra.mxu0 %v912
        %937 = vmatprep.subr.bf16.mxu0 0
        %938 = vmatpush1.bf16.msra.mxu0 0
        %939 = vmatprep.subr.bf16.mxu0 0
        %940 = vmatpush1.bf16.msra.mxu0 0
        %941 = vmatprep.subr.bf16.mxu0 0
        %942 = vmatpush1.bf16.msra.mxu0 0
        %943 = vmatprep.subr.bf16.mxu0 0
        %944 = vmatpush1.bf16.msra.mxu0 0
        %945 = vmatprep.subr.bf16.mxu0 0
        %946 = vmatpush1.bf16.msra.mxu0 0
        %947 = vmatprep.subr.bf16.mxu0 0
        %948 = vmatpush1.bf16.msra.mxu0 0
        %949 = vmatprep.subr.bf16.mxu0 0
        %950 = vmatpush1.bf16.msra.mxu0 0
        %951 = vmatprep.subr.bf16.mxu0 0
        %952 = vmatpush1.bf16.msra.mxu0 0
        %953 = vmatprep.mubr.bf16.mxu0 0
        %954 = vmatmul.mubr.bf16.gmra.mrb[0].mxu0 %v738
        %v955 = vpop.f32.mrb[0].mxu0
        %v956 = vadd.f32 %v871, %v955
        %v957 = vpop.f32.mrb[0].mxu0
        %v958 = vpop.f32.mrb[0].mxu0
        %v959 = vpop.f32.mrb[0].mxu0
        %960 = vdwg.mxu0
        %v961 = vld [vmem:[%s2 + $0x8] sm:$0xf]
        %v962 = vld [vmem:[%s2 + $0x14] sm:$0xf]
        %v963 = vld [vmem:[%s2 + $0x20] sm:$0xf]
        %v964 = vld [vmem:[%s2 + $0x2c] sm:$0xf]
        %v965 = vld [vmem:[%s2 + $0x38] sm:$0xf]
        %v966 = vld [vmem:[%s2 + $0x44] sm:$0xf]
        %v967 = vld [vmem:[%s2 + $0x50] sm:$0xf]
        %v968 = vld [vmem:[%s2 + $0x5c] sm:$0xf]
        %v969 = vld [vmem:[%s2 + $0x68] sm:$0xf]
        %v970 = vld [vmem:[%s2 + $0x74] sm:$0xf]
        %v971 = vld [vmem:[%s2 + $0x80] sm:$0xf]
        %v972 = vld [vmem:[%s2 + $0x8c] sm:$0xf]
        %v973 = vld [vmem:[%s2 + $0x98] sm:$0xf]
        %v974 = vld [vmem:[%s2 + $0xa4] sm:$0xf]
        %v975 = vld [vmem:[%s2 + $0xb0] sm:$0xf]
        %v976 = vld [vmem:[%s2 + $0xbc] sm:$0xf]
        %v977 = vld [vmem:[%s3 + $0x2] sm:$0x1]
        %v979 = vlaneseq
        %v980 = vshrl.u32 %v979, 7
        %v981 = vsub.s32 0, %v980
        %v982 = vrot.slane %v977, %v981
        %v1000 = vunpack.c.l.b16 %v961
        %v1001 = vunpack.c.l.b16 %v962
        %v1002 = vunpack.c.l.b16 %v963
        %v1003 = vunpack.c.l.b16 %v964
        %v1004 = vunpack.c.l.b16 %v965
        %v1005 = vunpack.c.l.b16 %v966
        %v1006 = vunpack.c.l.b16 %v967
        %v1007 = vunpack.c.l.b16 %v968
        %v1008 = vunpack.c.l.b16 %v969
        %v1009 = vunpack.c.l.b16 %v970
        %v1010 = vunpack.c.l.b16 %v971
        %v1011 = vunpack.c.l.b16 %v972
        %v1012 = vunpack.c.l.b16 %v973
        %v1013 = vunpack.c.l.b16 %v974
        %v1014 = vunpack.c.l.b16 %v975
        %v1015 = vunpack.c.l.b16 %v976
        %v1016 = vpack.c.b16 %v1001, %v1000
        %v1017 = vpack.c.b16 %v1003, %v1002
        %v1018 = vpack.c.b16 %v1005, %v1004
        %v1019 = vpack.c.b16 %v1007, %v1006
        %v1020 = vpack.c.b16 %v1009, %v1008
        %v1021 = vpack.c.b16 %v1011, %v1010
        %v1022 = vpack.c.b16 %v1013, %v1012
        %v1023 = vpack.c.b16 %v1015, %v1014
        %1032 = vmatprep.subr.bf16.mxu0 0
        %1033 = vmatpush1.bf16.msra.mxu0 %v1016
        %1034 = vmatprep.subr.bf16.mxu0 0
        %1035 = vmatpush1.bf16.msra.mxu0 %v1017
        %1036 = vmatprep.subr.bf16.mxu0 0
        %1037 = vmatpush1.bf16.msra.mxu0 %v1018
        %1038 = vmatprep.subr.bf16.mxu0 0
        %1039 = vmatpush1.bf16.msra.mxu0 %v1019
        %1040 = vmatprep.subr.bf16.mxu0 0
        %1041 = vmatpush1.bf16.msra.mxu0 %v1020
        %1042 = vmatprep.subr.bf16.mxu0 0
        %1043 = vmatpush1.bf16.msra.mxu0 %v1021
        %1044 = vmatprep.subr.bf16.mxu0 0
        %1045 = vmatpush1.bf16.msra.mxu0 %v1022
        %1046 = vmatprep.subr.bf16.mxu0 0
        %1047 = vmatpush1.bf16.msra.mxu0 %v1023
        %1048 = vmatprep.subr.bf16.mxu0 0
        %1049 = vmatpush1.bf16.msra.mxu0 0
        %1050 = vmatprep.subr.bf16.mxu0 0
        %1051 = vmatpush1.bf16.msra.mxu0 0
        %1052 = vmatprep.subr.bf16.mxu0 0
        %1053 = vmatpush1.bf16.msra.mxu0 0
        %1054 = vmatprep.subr.bf16.mxu0 0
        %1055 = vmatpush1.bf16.msra.mxu0 0
        %1056 = vmatprep.subr.bf16.mxu0 0
        %1057 = vmatpush1.bf16.msra.mxu0 0
        %1058 = vmatprep.subr.bf16.mxu0 0
        %1059 = vmatpush1.bf16.msra.mxu0 0
        %1060 = vmatprep.subr.bf16.mxu0 0
        %1061 = vmatpush1.bf16.msra.mxu0 0
        %1062 = vmatprep.subr.bf16.mxu0 0
        %1063 = vmatpush1.bf16.msra.mxu0 0
        %1064 = vmatprep.mubr.bf16.mxu0 0
        %1065 = vmatmul.mubr.bf16.gmra.mrb[0].mxu0 %v738
        %v1066 = vpop.f32.mrb[0].mxu0
        %v1067 = vadd.f32 %v982, %v1066
        %v1068 = vpop.f32.mrb[0].mxu0
        %v1069 = vpop.f32.mrb[0].mxu0
        %v1070 = vpop.f32.mrb[0].mxu0
        %1071 = vdwg.mxu0
        %v1072 = vpack.c.bf16 %v845, %v845
        %v1073 = vpack.c.bf16 %v1067, %v1067
        %1074 = vxpose.xlu0.b32.start [1/16] %v956, 128
        %1075 = vxpose.xlu0.b32.cont [2/16] 0.0, 128
        %1076 = vxpose.xlu0.b32.cont [3/16] 0.0, 128
        %1077 = vxpose.xlu0.b32.cont [4/16] 0.0, 128
        %1078 = vxpose.xlu0.b32.cont [5/16] 0.0, 128
        %1079 = vxpose.xlu0.b32.cont [6/16] 0.0, 128
        %1080 = vxpose.xlu0.b32.cont [7/16] 0.0, 128
        %1081 = vxpose.xlu0.b32.cont [8/16] 0.0, 128
        %1082 = vxpose.xlu0.b32.cont [9/16] 0.0, 128
        %1083 = vxpose.xlu0.b32.cont [10/16] 0.0, 128
        %1084 = vxpose.xlu0.b32.cont [11/16] 0.0, 128
        %1085 = vxpose.xlu0.b32.cont [12/16] 0.0, 128
        %1086 = vxpose.xlu0.b32.cont [13/16] 0.0, 128
        %1087 = vxpose.xlu0.b32.cont [14/16] 0.0, 128
        %1088 = vxpose.xlu0.b32.cont [15/16] 0.0, 128
        %1089 = vxpose.xlu0.b32.end [16/16] 0.0, 128
        %v1090 = vpop.trf.xlu0
        %v1091 = vpop.trf.xlu0
        %v1092 = vpop.trf.xlu0
        %v1093 = vpop.trf.xlu0
        %v1094 = vpop.trf.xlu0
        %v1095 = vpop.trf.xlu0
        %v1096 = vpop.trf.xlu0
        %v1097 = vpop.trf.xlu0
        %v1098 = vpop.trf.xlu0
        %v1099 = vpop.trf.xlu0
        %v1100 = vpop.trf.xlu0
        %v1101 = vpop.trf.xlu0
        %v1102 = vpop.trf.xlu0
        %v1103 = vpop.trf.xlu0
        %v1104 = vpop.trf.xlu0
        %v1105 = vpop.trf.xlu0
        %v1106 = vpack.c.bf16 %v1091, %v1090
        %v1107 = vpack.c.bf16 %v1093, %v1092
        %v1108 = vpack.c.bf16 %v1095, %v1094
        %v1109 = vpack.c.bf16 %v1097, %v1096
        %v1110 = vpack.c.bf16 %v1099, %v1098
        %v1111 = vpack.c.bf16 %v1101, %v1100
        %v1112 = vpack.c.bf16 %v1103, %v1102
        %v1113 = vpack.c.bf16 %v1105, %v1104
        %vm1114 = vcmask 130048
        %v1116 = vsel %vm1114, %v1072, 0
        %1118 = vmatprep.subr.bf16.mxu0 0
        %1119 = vmatpush1.bf16.msra.mxu0 %v1106
        %1120 = vmatprep.subr.bf16.mxu0 0
        %1121 = vmatpush1.bf16.msra.mxu0 0
        %1122 = vmatprep.subr.bf16.mxu0 0
        %1123 = vmatpush1.bf16.msra.mxu0 0
        %1124 = vmatprep.subr.bf16.mxu0 0
        %1125 = vmatpush1.bf16.msra.mxu0 0
        %1126 = vmatprep.subr.bf16.mxu0 0
        %1127 = vmatpush1.bf16.msra.mxu0 0
        %1128 = vmatprep.subr.bf16.mxu0 0
        %1129 = vmatpush1.bf16.msra.mxu0 0
        %1130 = vmatprep.subr.bf16.mxu0 0
        %1131 = vmatpush1.bf16.msra.mxu0 0
        %1132 = vmatprep.subr.bf16.mxu0 0
        %1133 = vmatpush1.bf16.msra.mxu0 0
        %1134 = vmatprep.subr.bf16.mxu0 0
        %1135 = vmatpush1.bf16.msra.mxu0 0
        %1136 = vmatprep.subr.bf16.mxu0 0
        %1137 = vmatpush1.bf16.msra.mxu0 0
        %1138 = vmatprep.subr.bf16.mxu0 0
        %1139 = vmatpush1.bf16.msra.mxu0 0
        %1140 = vmatprep.subr.bf16.mxu0 0
        %1141 = vmatpush1.bf16.msra.mxu0 0
        %1142 = vmatprep.subr.bf16.mxu0 0
        %1143 = vmatpush1.bf16.msra.mxu0 0
        %1144 = vmatprep.subr.bf16.mxu0 0
        %1145 = vmatpush1.bf16.msra.mxu0 0
        %1146 = vmatprep.subr.bf16.mxu0 0
        %1147 = vmatpush1.bf16.msra.mxu0 0
        %1148 = vmatprep.subr.bf16.mxu0 0
        %1149 = vmatpush1.bf16.msra.mxu0 0
        %1150 = vmatprep.mubr.bf16.mxu0 0
        %1151 = vmatmul.mubr.bf16.gmra.mrb[0].mxu0 %v1116
        %v1152 = vpop.f32.mrb[0].mxu0
        %v1153 = vadd.f32 0.0, %v1152
        %v1154 = vpop.f32.mrb[0].mxu0
        %v1155 = vpop.f32.mrb[0].mxu0
        %v1156 = vpop.f32.mrb[0].mxu0
        %1157 = vdwg.mxu0
        %vm1158 = vcmask 64512
        %v1159 = vsel %vm1158, %v1153, -inf
        %1160 = vmax.xlane.f32.xlu0 %v1159
        %v1161 = vpop.xlane.xlu0 %1160
        %v1162 = vsub.f32 %v1153, %v1161
        %v1163 = vmul.f32 %v1162, 1.442695
        %v1164 = vpow.pop %v1163
        %v1165 = vsel %vm1158, %v1164, 0.0
        %1166 = vadd.xlane.f32.xlu0 %v1165
        %v1167 = vpop.xlane.xlu0 %1166
        %v1168 = vrcp.pop %v1167
        %v1169 = vmul.f32 %v1164, %v1168
        %v1170 = vpack.c.bf16 %v1169, %v1169
        %v1172 = vsel %vm1158, %v1170, 0
        %vm1174 = vcmask 1043456
        %v1176 = vsel %vm1174, %v1073, 0
        %1178 = vmatprep.subr.bf16.mxu0 0
        %1179 = vmatpush1.bf16.msra.mxu0 %v1176
        %1180 = vmatprep.subr.bf16.mxu0 0
        %1181 = vmatpush1.bf16.msra.mxu0 0
        %1182 = vmatprep.subr.bf16.mxu0 0
        %1183 = vmatpush1.bf16.msra.mxu0 0
        %1184 = vmatprep.subr.bf16.mxu0 0
        %1185 = vmatpush1.bf16.msra.mxu0 0
        %1186 = vmatprep.subr.bf16.mxu0 0
        %1187 = vmatpush1.bf16.msra.mxu0 0
        %1188 = vmatprep.subr.bf16.mxu0 0
        %1189 = vmatpush1.bf16.msra.mxu0 0
        %1190 = vmatprep.subr.bf16.mxu0 0
        %1191 = vmatpush1.bf16.msra.mxu0 0
        %1192 = vmatprep.subr.bf16.mxu0 0
        %1193 = vmatpush1.bf16.msra.mxu0 0
        %1194 = vmatprep.subr.bf16.mxu0 0
        %1195 = vmatpush1.bf16.msra.mxu0 0
        %1196 = vmatprep.subr.bf16.mxu0 0
        %1197 = vmatpush1.bf16.msra.mxu0 0
        %1198 = vmatprep.subr.bf16.mxu0 0
        %1199 = vmatpush1.bf16.msra.mxu0 0
        %1200 = vmatprep.subr.bf16.mxu0 0
        %1201 = vmatpush1.bf16.msra.mxu0 0
        %1202 = vmatprep.subr.bf16.mxu0 0
        %1203 = vmatpush1.bf16.msra.mxu0 0
        %1204 = vmatprep.subr.bf16.mxu0 0
        %1205 = vmatpush1.bf16.msra.mxu0 0
        %1206 = vmatprep.subr.bf16.mxu0 0
        %1207 = vmatpush1.bf16.msra.mxu0 0
        %1208 = vmatprep.subr.bf16.mxu0 0
        %1209 = vmatpush1.bf16.msra.mxu0 0
        %1210 = vmatprep.mubr.bf16.mxu0 0
        %1211 = vmatmul.mubr.bf16.gmra.mrb[0].mxu0 %v1172
        %v1212 = vpop.f32.mrb[0].mxu0
        %v1213 = vadd.f32 0.0, %v1212
        %v1214 = vpop.f32.mrb[0].mxu0
        %v1215 = vpop.f32.mrb[0].mxu0
        %v1216 = vpop.f32.mrb[0].mxu0
        %1217 = vdwg.mxu0
        %1219 = vrot.lane.b32.xlu0 %v1072, 112
        %v1220 = vpop.permute.xlu0 %1219
        %v1222 = vsel %vm1114, %v1220, 0
        %1224 = vmatprep.subr.bf16.mxu0 0
        %1225 = vmatpush1.bf16.msra.mxu0 %v1107
        %1226 = vmatprep.subr.bf16.mxu0 0
        %1227 = vmatpush1.bf16.msra.mxu0 0
        %1228 = vmatprep.subr.bf16.mxu0 0
        %1229 = vmatpush1.bf16.msra.mxu0 0
        %1230 = vmatprep.subr.bf16.mxu0 0
        %1231 = vmatpush1.bf16.msra.mxu0 0
        %1232 = vmatprep.subr.bf16.mxu0 0
        %1233 = vmatpush1.bf16.msra.mxu0 0
        %1234 = vmatprep.subr.bf16.mxu0 0
        %1235 = vmatpush1.bf16.msra.mxu0 0
        %1236 = vmatprep.subr.bf16.mxu0 0
        %1237 = vmatpush1.bf16.msra.mxu0 0
        %1238 = vmatprep.subr.bf16.mxu0 0
        %1239 = vmatpush1.bf16.msra.mxu0 0
        %1240 = vmatprep.subr.bf16.mxu0 0
        %1241 = vmatpush1.bf16.msra.mxu0 0
        %1242 = vmatprep.subr.bf16.mxu0 0
        %1243 = vmatpush1.bf16.msra.mxu0 0
        %1244 = vmatprep.subr.bf16.mxu0 0
        %1245 = vmatpush1.bf16.msra.mxu0 0
        %1246 = vmatprep.subr.bf16.mxu0 0
        %1247 = vmatpush1.bf16.msra.mxu0 0
        %1248 = vmatprep.subr.bf16.mxu0 0
        %1249 = vmatpush1.bf16.msra.mxu0 0
        %1250 = vmatprep.subr.bf16.mxu0 0
        %1251 = vmatpush1.bf16.msra.mxu0 0
        %1252 = vmatprep.subr.bf16.mxu0 0
        %1253 = vmatpush1.bf16.msra.mxu0 0
        %1254 = vmatprep.subr.bf16.mxu0 0
        %1255 = vmatpush1.bf16.msra.mxu0 0
        %1256 = vmatprep.mubr.bf16.mxu0 0
        %1257 = vmatmul.mubr.bf16.gmra.mrb[0].mxu0 %v1222
        %v1258 = vpop.f32.mrb[0].mxu0
        %v1259 = vadd.f32 0.0, %v1258
        %v1260 = vpop.f32.mrb[0].mxu0
        %v1261 = vpop.f32.mrb[0].mxu0
        %v1262 = vpop.f32.mrb[0].mxu0
        %1263 = vdwg.mxu0
        %v1264 = vsel %vm1158, %v1259, -inf
        %1265 = vmax.xlane.f32.xlu0 %v1264
        %v1266 = vpop.xlane.xlu0 %1265
        %v1267 = vsub.f32 %v1259, %v1266
        %v1268 = vmul.f32 %v1267, 1.442695
        %v1269 = vpow.pop %v1268
        %v1270 = vsel %vm1158, %v1269, 0.0
        %1271 = vadd.xlane.f32.xlu0 %v1270
        %v1272 = vpop.xlane.xlu0 %1271
        %v1273 = vrcp.pop %v1272
        %v1274 = vmul.f32 %v1269, %v1273
        %v1275 = vpack.c.bf16 %v1274, %v1274
        %1277 = vrot.lane.b32.xlu0 %v1073, 112
        %v1278 = vpop.permute.xlu0 %1277
        %v1280 = vsel %vm1158, %v1275, 0
        %v1283 = vsel %vm1174, %v1278, 0
        %1285 = vmatprep.subr.bf16.mxu0 0
        %1286 = vmatpush1.bf16.msra.mxu0 %v1283
        %1287 = vmatprep.subr.bf16.mxu0 0
        %1288 = vmatpush1.bf16.msra.mxu0 0
        %1289 = vmatprep.subr.bf16.mxu0 0
        %1290 = vmatpush1.bf16.msra.mxu0 0
        %1291 = vmatprep.subr.bf16.mxu0 0
        %1292 = vmatpush1.bf16.msra.mxu0 0
        %1293 = vmatprep.subr.bf16.mxu0 0
        %1294 = vmatpush1.bf16.msra.mxu0 0
        %1295 = vmatprep.subr.bf16.mxu0 0
        %1296 = vmatpush1.bf16.msra.mxu0 0
        %1297 = vmatprep.subr.bf16.mxu0 0
        %1298 = vmatpush1.bf16.msra.mxu0 0
        %1299 = vmatprep.subr.bf16.mxu0 0
        %1300 = vmatpush1.bf16.msra.mxu0 0
        %1301 = vmatprep.subr.bf16.mxu0 0
        %1302 = vmatpush1.bf16.msra.mxu0 0
        %1303 = vmatprep.subr.bf16.mxu0 0
        %1304 = vmatpush1.bf16.msra.mxu0 0
        %1305 = vmatprep.subr.bf16.mxu0 0
        %1306 = vmatpush1.bf16.msra.mxu0 0
        %1307 = vmatprep.subr.bf16.mxu0 0
        %1308 = vmatpush1.bf16.msra.mxu0 0
        %1309 = vmatprep.subr.bf16.mxu0 0
        %1310 = vmatpush1.bf16.msra.mxu0 0
        %1311 = vmatprep.subr.bf16.mxu0 0
        %1312 = vmatpush1.bf16.msra.mxu0 0
        %1313 = vmatprep.subr.bf16.mxu0 0
        %1314 = vmatpush1.bf16.msra.mxu0 0
        %1315 = vmatprep.subr.bf16.mxu0 0
        %1316 = vmatpush1.bf16.msra.mxu0 0
        %1317 = vmatprep.mubr.bf16.mxu0 0
        %1318 = vmatmul.mubr.bf16.gmra.mrb[0].mxu0 %v1280
        %v1319 = vpop.f32.mrb[0].mxu0
        %v1320 = vadd.f32 0.0, %v1319
        %v1321 = vpop.f32.mrb[0].mxu0
        %v1322 = vpop.f32.mrb[0].mxu0
        %v1323 = vpop.f32.mrb[0].mxu0
        %1324 = vdwg.mxu0
        %1325 = vrot.lane.b32.xlu0 %v1072, 96
        %v1326 = vpop.permute.xlu0 %1325
        %v1328 = vsel %vm1114, %v1326, 0
        %1330 = vmatprep.subr.bf16.mxu0 0
        %1331 = vmatpush1.bf16.msra.mxu0 %v1108
        %1332 = vmatprep.subr.bf16.mxu0 0
        %1333 = vmatpush1.bf16.msra.mxu0 0
        %1334 = vmatprep.subr.bf16.mxu0 0
        %1335 = vmatpush1.bf16.msra.mxu0 0
        %1336 = vmatprep.subr.bf16.mxu0 0
        %1337 = vmatpush1.bf16.msra.mxu0 0
        %1338 = vmatprep.subr.bf16.mxu0 0
        %1339 = vmatpush1.bf16.msra.mxu0 0
        %1340 = vmatprep.subr.bf16.mxu0 0
        %1341 = vmatpush1.bf16.msra.mxu0 0
        %1342 = vmatprep.subr.bf16.mxu0 0
        %1343 = vmatpush1.bf16.msra.mxu0 0
        %1344 = vmatprep.subr.bf16.mxu0 0
        %1345 = vmatpush1.bf16.msra.mxu0 0
        %1346 = vmatprep.subr.bf16.mxu0 0
        %1347 = vmatpush1.bf16.msra.mxu0 0
        %1348 = vmatprep.subr.bf16.mxu0 0
        %1349 = vmatpush1.bf16.msra.mxu0 0
        %1350 = vmatprep.subr.bf16.mxu0 0
        %1351 = vmatpush1.bf16.msra.mxu0 0
        %1352 = vmatprep.subr.bf16.mxu0 0
        %1353 = vmatpush1.bf16.msra.mxu0 0
        %1354 = vmatprep.subr.bf16.mxu0 0
        %1355 = vmatpush1.bf16.msra.mxu0 0
        %1356 = vmatprep.subr.bf16.mxu0 0
        %1357 = vmatpush1.bf16.msra.mxu0 0
        %1358 = vmatprep.subr.bf16.mxu0 0
        %1359 = vmatpush1.bf16.msra.mxu0 0
        %1360 = vmatprep.subr.bf16.mxu0 0
        %1361 = vmatpush1.bf16.msra.mxu0 0
        %1362 = vmatprep.mubr.bf16.mxu0 0
        %1363 = vmatmul.mubr.bf16.gmra.mrb[0].mxu0 %v1328
        %v1364 = vpop.f32.mrb[0].mxu0
        %v1365 = vadd.f32 0.0, %v1364
        %v1366 = vpop.f32.mrb[0].mxu0
        %v1367 = vpop.f32.mrb[0].mxu0
        %v1368 = vpop.f32.mrb[0].mxu0
        %1369 = vdwg.mxu0
        %v1370 = vsel %vm1158, %v1365, -inf
        %1371 = vmax.xlane.f32.xlu0 %v1370
        %v1372 = vpop.xlane.xlu0 %1371
        %v1373 = vsub.f32 %v1365, %v1372
        %v1374 = vmul.f32 %v1373, 1.442695
        %v1375 = vpow.pop %v1374
        %v1376 = vsel %vm1158, %v1375, 0.0
        %1377 = vadd.xlane.f32.xlu0 %v1376
        %v1378 = vpop.xlane.xlu0 %1377
        %v1379 = vrcp.pop %v1378
        %v1380 = vmul.f32 %v1375, %v1379
        %v1381 = vpack.c.bf16 %v1380, %v1380
        %1382 = vrot.lane.b32.xlu0 %v1073, 96
        %v1383 = vpop.permute.xlu0 %1382
        %v1385 = vsel %vm1158, %v1381, 0
        %v1388 = vsel %vm1174, %v1383, 0
        %1390 = vmatprep.subr.bf16.mxu0 0
        %1391 = vmatpush1.bf16.msra.mxu0 %v1388
        %1392 = vmatprep.subr.bf16.mxu0 0
        %1393 = vmatpush1.bf16.msra.mxu0 0
        %1394 = vmatprep.subr.bf16.mxu0 0
        %1395 = vmatpush1.bf16.msra.mxu0 0
        %1396 = vmatprep.subr.bf16.mxu0 0
        %1397 = vmatpush1.bf16.msra.mxu0 0
        %1398 = vmatprep.subr.bf16.mxu0 0
        %1399 = vmatpush1.bf16.msra.mxu0 0
        %1400 = vmatprep.subr.bf16.mxu0 0
        %1401 = vmatpush1.bf16.msra.mxu0 0
        %1402 = vmatprep.subr.bf16.mxu0 0
        %1403 = vmatpush1.bf16.msra.mxu0 0
        %1404 = vmatprep.subr.bf16.mxu0 0
        %1405 = vmatpush1.bf16.msra.mxu0 0
        %1406 = vmatprep.subr.bf16.mxu0 0
        %1407 = vmatpush1.bf16.msra.mxu0 0
        %1408 = vmatprep.subr.bf16.mxu0 0
        %1409 = vmatpush1.bf16.msra.mxu0 0
        %1410 = vmatprep.subr.bf16.mxu0 0
        %1411 = vmatpush1.bf16.msra.mxu0 0
        %1412 = vmatprep.subr.bf16.mxu0 0
        %1413 = vmatpush1.bf16.msra.mxu0 0
        %1414 = vmatprep.subr.bf16.mxu0 0
        %1415 = vmatpush1.bf16.msra.mxu0 0
        %1416 = vmatprep.subr.bf16.mxu0 0
        %1417 = vmatpush1.bf16.msra.mxu0 0
        %1418 = vmatprep.subr.bf16.mxu0 0
        %1419 = vmatpush1.bf16.msra.mxu0 0
        %1420 = vmatprep.subr.bf16.mxu0 0
        %1421 = vmatpush1.bf16.msra.mxu0 0
        %1422 = vmatprep.mubr.bf16.mxu0 0
        %1423 = vmatmul.mubr.bf16.gmra.mrb[0].mxu0 %v1385
        %v1424 = vpop.f32.mrb[0].mxu0
        %v1425 = vadd.f32 0.0, %v1424
        %v1426 = vpop.f32.mrb[0].mxu0
        %v1427 = vpop.f32.mrb[0].mxu0
        %v1428 = vpop.f32.mrb[0].mxu0
        %1429 = vdwg.mxu0
        %1430 = vrot.lane.b32.xlu0 %v1072, 80
        %v1431 = vpop.permute.xlu0 %1430
        %v1433 = vsel %vm1114, %v1431, 0
        %1435 = vmatprep.subr.bf16.mxu0 0
        %1436 = vmatpush1.bf16.msra.mxu0 %v1109
        %1437 = vmatprep.subr.bf16.mxu0 0
        %1438 = vmatpush1.bf16.msra.mxu0 0
        %1439 = vmatprep.subr.bf16.mxu0 0
        %1440 = vmatpush1.bf16.msra.mxu0 0
        %1441 = vmatprep.subr.bf16.mxu0 0
        %1442 = vmatpush1.bf16.msra.mxu0 0
        %1443 = vmatprep.subr.bf16.mxu0 0
        %1444 = vmatpush1.bf16.msra.mxu0 0
        %1445 = vmatprep.subr.bf16.mxu0 0
        %1446 = vmatpush1.bf16.msra.mxu0 0
        %1447 = vmatprep.subr.bf16.mxu0 0
        %1448 = vmatpush1.bf16.msra.mxu0 0
        %1449 = vmatprep.subr.bf16.mxu0 0
        %1450 = vmatpush1.bf16.msra.mxu0 0
        %1451 = vmatprep.subr.bf16.mxu0 0
        %1452 = vmatpush1.bf16.msra.mxu0 0
        %1453 = vmatprep.subr.bf16.mxu0 0
        %1454 = vmatpush1.bf16.msra.mxu0 0
        %1455 = vmatprep.subr.bf16.mxu0 0
        %1456 = vmatpush1.bf16.msra.mxu0 0
        %1457 = vmatprep.subr.bf16.mxu0 0
        %1458 = vmatpush1.bf16.msra.mxu0 0
        %1459 = vmatprep.subr.bf16.mxu0 0
        %1460 = vmatpush1.bf16.msra.mxu0 0
        %1461 = vmatprep.subr.bf16.mxu0 0
        %1462 = vmatpush1.bf16.msra.mxu0 0
        %1463 = vmatprep.subr.bf16.mxu0 0
        %1464 = vmatpush1.bf16.msra.mxu0 0
        %1465 = vmatprep.subr.bf16.mxu0 0
        %1466 = vmatpush1.bf16.msra.mxu0 0
        %1467 = vmatprep.mubr.bf16.mxu0 0
        %1468 = vmatmul.mubr.bf16.gmra.mrb[0].mxu0 %v1433
        %v1469 = vpop.f32.mrb[0].mxu0
        %v1470 = vadd.f32 0.0, %v1469
        %v1471 = vpop.f32.mrb[0].mxu0
        %v1472 = vpop.f32.mrb[0].mxu0
        %v1473 = vpop.f32.mrb[0].mxu0
        %1474 = vdwg.mxu0
        %v1475 = vsel %vm1158, %v1470, -inf
        %1476 = vmax.xlane.f32.xlu0 %v1475
        %v1477 = vpop.xlane.xlu0 %1476
        %v1478 = vsub.f32 %v1470, %v1477
        %v1479 = vmul.f32 %v1478, 1.442695
        %v1480 = vpow.pop %v1479
        %v1481 = vsel %vm1158, %v1480, 0.0
        %1482 = vadd.xlane.f32.xlu0 %v1481
        %v1483 = vpop.xlane.xlu0 %1482
        %v1484 = vrcp.pop %v1483
        %v1485 = vmul.f32 %v1480, %v1484
        %v1486 = vpack.c.bf16 %v1485, %v1485
        %1487 = vrot.lane.b32.xlu0 %v1073, 80
        %v1488 = vpop.permute.xlu0 %1487
        %v1490 = vsel %vm1158, %v1486, 0
        %v1493 = vsel %vm1174, %v1488, 0
        %1495 = vmatprep.subr.bf16.mxu0 0
        %1496 = vmatpush1.bf16.msra.mxu0 %v1493
        %1497 = vmatprep.subr.bf16.mxu0 0
        %1498 = vmatpush1.bf16.msra.mxu0 0
        %1499 = vmatprep.subr.bf16.mxu0 0
        %1500 = vmatpush1.bf16.msra.mxu0 0
        %1501 = vmatprep.subr.bf16.mxu0 0
        %1502 = vmatpush1.bf16.msra.mxu0 0
        %1503 = vmatprep.subr.bf16.mxu0 0
        %1504 = vmatpush1.bf16.msra.mxu0 0
        %1505 = vmatprep.subr.bf16.mxu0 0
        %1506 = vmatpush1.bf16.msra.mxu0 0
        %1507 = vmatprep.subr.bf16.mxu0 0
        %1508 = vmatpush1.bf16.msra.mxu0 0
        %1509 = vmatprep.subr.bf16.mxu0 0
        %1510 = vmatpush1.bf16.msra.mxu0 0
        %1511 = vmatprep.subr.bf16.mxu0 0
        %1512 = vmatpush1.bf16.msra.mxu0 0
        %1513 = vmatprep.subr.bf16.mxu0 0
        %1514 = vmatpush1.bf16.msra.mxu0 0
        %1515 = vmatprep.subr.bf16.mxu0 0
        %1516 = vmatpush1.bf16.msra.mxu0 0
        %1517 = vmatprep.subr.bf16.mxu0 0
        %1518 = vmatpush1.bf16.msra.mxu0 0
        %1519 = vmatprep.subr.bf16.mxu0 0
        %1520 = vmatpush1.bf16.msra.mxu0 0
        %1521 = vmatprep.subr.bf16.mxu0 0
        %1522 = vmatpush1.bf16.msra.mxu0 0
        %1523 = vmatprep.subr.bf16.mxu0 0
        %1524 = vmatpush1.bf16.msra.mxu0 0
        %1525 = vmatprep.subr.bf16.mxu0 0
        %1526 = vmatpush1.bf16.msra.mxu0 0
        %1527 = vmatprep.mubr.bf16.mxu0 0
        %1528 = vmatmul.mubr.bf16.gmra.mrb[0].mxu0 %v1490
        %v1529 = vpop.f32.mrb[0].mxu0
        %v1530 = vadd.f32 0.0, %v1529
        %v1531 = vpop.f32.mrb[0].mxu0
        %v1532 = vpop.f32.mrb[0].mxu0
        %v1533 = vpop.f32.mrb[0].mxu0
        %1534 = vdwg.mxu0
        %1535 = vrot.lane.b32.xlu0 %v1072, 64
        %v1536 = vpop.permute.xlu0 %1535
        %v1538 = vsel %vm1114, %v1536, 0
        %1540 = vmatprep.subr.bf16.mxu0 0
        %1541 = vmatpush1.bf16.msra.mxu0 %v1110
        %1542 = vmatprep.subr.bf16.mxu0 0
        %1543 = vmatpush1.bf16.msra.mxu0 0
        %1544 = vmatprep.subr.bf16.mxu0 0
        %1545 = vmatpush1.bf16.msra.mxu0 0
        %1546 = vmatprep.subr.bf16.mxu0 0
        %1547 = vmatpush1.bf16.msra.mxu0 0
        %1548 = vmatprep.subr.bf16.mxu0 0
        %1549 = vmatpush1.bf16.msra.mxu0 0
        %1550 = vmatprep.subr.bf16.mxu0 0
        %1551 = vmatpush1.bf16.msra.mxu0 0
        %1552 = vmatprep.subr.bf16.mxu0 0
        %1553 = vmatpush1.bf16.msra.mxu0 0
        %1554 = vmatprep.subr.bf16.mxu0 0
        %1555 = vmatpush1.bf16.msra.mxu0 0
        %1556 = vmatprep.subr.bf16.mxu0 0
        %1557 = vmatpush1.bf16.msra.mxu0 0
        %1558 = vmatprep.subr.bf16.mxu0 0
        %1559 = vmatpush1.bf16.msra.mxu0 0
        %1560 = vmatprep.subr.bf16.mxu0 0
        %1561 = vmatpush1.bf16.msra.mxu0 0
        %1562 = vmatprep.subr.bf16.mxu0 0
        %1563 = vmatpush1.bf16.msra.mxu0 0
        %1564 = vmatprep.subr.bf16.mxu0 0
        %1565 = vmatpush1.bf16.msra.mxu0 0
        %1566 = vmatprep.subr.bf16.mxu0 0
        %1567 = vmatpush1.bf16.msra.mxu0 0
        %1568 = vmatprep.subr.bf16.mxu0 0
        %1569 = vmatpush1.bf16.msra.mxu0 0
        %1570 = vmatprep.subr.bf16.mxu0 0
        %1571 = vmatpush1.bf16.msra.mxu0 0
        %1572 = vmatprep.mubr.bf16.mxu0 0
        %1573 = vmatmul.mubr.bf16.gmra.mrb[0].mxu0 %v1538
        %v1574 = vpop.f32.mrb[0].mxu0
        %v1575 = vadd.f32 0.0, %v1574
        %v1576 = vpop.f32.mrb[0].mxu0
        %v1577 = vpop.f32.mrb[0].mxu0
        %v1578 = vpop.f32.mrb[0].mxu0
        %1579 = vdwg.mxu0
        %v1580 = vsel %vm1158, %v1575, -inf
        %1581 = vmax.xlane.f32.xlu0 %v1580
        %v1582 = vpop.xlane.xlu0 %1581
        %v1583 = vsub.f32 %v1575, %v1582
        %v1584 = vmul.f32 %v1583, 1.442695
        %v1585 = vpow.pop %v1584
        %v1586 = vsel %vm1158, %v1585, 0.0
        %1587 = vadd.xlane.f32.xlu0 %v1586
        %v1588 = vpop.xlane.xlu0 %1587
        %v1589 = vrcp.pop %v1588
        %v1590 = vmul.f32 %v1585, %v1589
        %v1591 = vpack.c.bf16 %v1590, %v1590
        %1592 = vrot.lane.b32.xlu0 %v1073, 64
        %v1593 = vpop.permute.xlu0 %1592
        %v1595 = vsel %vm1158, %v1591, 0
        %v1598 = vsel %vm1174, %v1593, 0
        %1600 = vmatprep.subr.bf16.mxu0 0
        %1601 = vmatpush1.bf16.msra.mxu0 %v1598
        %1602 = vmatprep.subr.bf16.mxu0 0
        %1603 = vmatpush1.bf16.msra.mxu0 0
        %1604 = vmatprep.subr.bf16.mxu0 0
        %1605 = vmatpush1.bf16.msra.mxu0 0
        %1606 = vmatprep.subr.bf16.mxu0 0
        %1607 = vmatpush1.bf16.msra.mxu0 0
        %1608 = vmatprep.subr.bf16.mxu0 0
        %1609 = vmatpush1.bf16.msra.mxu0 0
        %1610 = vmatprep.subr.bf16.mxu0 0
        %1611 = vmatpush1.bf16.msra.mxu0 0
        %1612 = vmatprep.subr.bf16.mxu0 0
        %1613 = vmatpush1.bf16.msra.mxu0 0
        %1614 = vmatprep.subr.bf16.mxu0 0
        %1615 = vmatpush1.bf16.msra.mxu0 0
        %1616 = vmatprep.subr.bf16.mxu0 0
        %1617 = vmatpush1.bf16.msra.mxu0 0
        %1618 = vmatprep.subr.bf16.mxu0 0
        %1619 = vmatpush1.bf16.msra.mxu0 0
        %1620 = vmatprep.subr.bf16.mxu0 0
        %1621 = vmatpush1.bf16.msra.mxu0 0
        %1622 = vmatprep.subr.bf16.mxu0 0
        %1623 = vmatpush1.bf16.msra.mxu0 0
        %1624 = vmatprep.subr.bf16.mxu0 0
        %1625 = vmatpush1.bf16.msra.mxu0 0
        %1626 = vmatprep.subr.bf16.mxu0 0
        %1627 = vmatpush1.bf16.msra.mxu0 0
        %1628 = vmatprep.subr.bf16.mxu0 0
        %1629 = vmatpush1.bf16.msra.mxu0 0
        %1630 = vmatprep.subr.bf16.mxu0 0
        %1631 = vmatpush1.bf16.msra.mxu0 0
        %1632 = vmatprep.mubr.bf16.mxu0 0
        %1633 = vmatmul.mubr.bf16.gmra.mrb[0].mxu0 %v1595
        %v1634 = vpop.f32.mrb[0].mxu0
        %v1635 = vadd.f32 0.0, %v1634
        %v1636 = vpop.f32.mrb[0].mxu0
        %v1637 = vpop.f32.mrb[0].mxu0
        %v1638 = vpop.f32.mrb[0].mxu0
        %1639 = vdwg.mxu0
        %1640 = vrot.lane.b32.xlu0 %v1072, 48
        %v1641 = vpop.permute.xlu0 %1640
        %v1643 = vsel %vm1114, %v1641, 0
        %1645 = vmatprep.subr.bf16.mxu0 0
        %1646 = vmatpush1.bf16.msra.mxu0 %v1111
        %1647 = vmatprep.subr.bf16.mxu0 0
        %1648 = vmatpush1.bf16.msra.mxu0 0
        %1649 = vmatprep.subr.bf16.mxu0 0
        %1650 = vmatpush1.bf16.msra.mxu0 0
        %1651 = vmatprep.subr.bf16.mxu0 0
        %1652 = vmatpush1.bf16.msra.mxu0 0
        %1653 = vmatprep.subr.bf16.mxu0 0
        %1654 = vmatpush1.bf16.msra.mxu0 0
        %1655 = vmatprep.subr.bf16.mxu0 0
        %1656 = vmatpush1.bf16.msra.mxu0 0
        %1657 = vmatprep.subr.bf16.mxu0 0
        %1658 = vmatpush1.bf16.msra.mxu0 0
        %1659 = vmatprep.subr.bf16.mxu0 0
        %1660 = vmatpush1.bf16.msra.mxu0 0
        %1661 = vmatprep.subr.bf16.mxu0 0
        %1662 = vmatpush1.bf16.msra.mxu0 0
        %1663 = vmatprep.subr.bf16.mxu0 0
        %1664 = vmatpush1.bf16.msra.mxu0 0
        %1665 = vmatprep.subr.bf16.mxu0 0
        %1666 = vmatpush1.bf16.msra.mxu0 0
        %1667 = vmatprep.subr.bf16.mxu0 0
        %1668 = vmatpush1.bf16.msra.mxu0 0
        %1669 = vmatprep.subr.bf16.mxu0 0
        %1670 = vmatpush1.bf16.msra.mxu0 0
        %1671 = vmatprep.subr.bf16.mxu0 0
        %1672 = vmatpush1.bf16.msra.mxu0 0
        %1673 = vmatprep.subr.bf16.mxu0 0
        %1674 = vmatpush1.bf16.msra.mxu0 0
        %1675 = vmatprep.subr.bf16.mxu0 0
        %1676 = vmatpush1.bf16.msra.mxu0 0
        %1677 = vmatprep.mubr.bf16.mxu0 0
        %1678 = vmatmul.mubr.bf16.gmra.mrb[0].mxu0 %v1643
        %v1679 = vpop.f32.mrb[0].mxu0
        %v1680 = vadd.f32 0.0, %v1679
        %v1681 = vpop.f32.mrb[0].mxu0
        %v1682 = vpop.f32.mrb[0].mxu0
        %v1683 = vpop.f32.mrb[0].mxu0
        %1684 = vdwg.mxu0
        %v1685 = vsel %vm1158, %v1680, -inf
        %1686 = vmax.xlane.f32.xlu0 %v1685
        %v1687 = vpop.xlane.xlu0 %1686
        %v1688 = vsub.f32 %v1680, %v1687
        %v1689 = vmul.f32 %v1688, 1.442695
        %v1690 = vpow.pop %v1689
        %v1691 = vsel %vm1158, %v1690, 0.0
        %1692 = vadd.xlane.f32.xlu0 %v1691
        %v1693 = vpop.xlane.xlu0 %1692
        %v1694 = vrcp.pop %v1693
        %v1695 = vmul.f32 %v1690, %v1694
        %v1696 = vpack.c.bf16 %v1695, %v1695
        %1697 = vrot.lane.b32.xlu0 %v1073, 48
        %v1698 = vpop.permute.xlu0 %1697
        %v1700 = vsel %vm1158, %v1696, 0
        %v1703 = vsel %vm1174, %v1698, 0
        %1705 = vmatprep.subr.bf16.mxu0 0
        %1706 = vmatpush1.bf16.msra.mxu0 %v1703
        %1707 = vmatprep.subr.bf16.mxu0 0
        %1708 = vmatpush1.bf16.msra.mxu0 0
        %1709 = vmatprep.subr.bf16.mxu0 0
        %1710 = vmatpush1.bf16.msra.mxu0 0
        %1711 = vmatprep.subr.bf16.mxu0 0
        %1712 = vmatpush1.bf16.msra.mxu0 0
        %1713 = vmatprep.subr.bf16.mxu0 0
        %1714 = vmatpush1.bf16.msra.mxu0 0
        %1715 = vmatprep.subr.bf16.mxu0 0
        %1716 = vmatpush1.bf16.msra.mxu0 0
        %1717 = vmatprep.subr.bf16.mxu0 0
        %1718 = vmatpush1.bf16.msra.mxu0 0
        %1719 = vmatprep.subr.bf16.mxu0 0
        %1720 = vmatpush1.bf16.msra.mxu0 0
        %1721 = vmatprep.subr.bf16.mxu0 0
        %1722 = vmatpush1.bf16.msra.mxu0 0
        %1723 = vmatprep.subr.bf16.mxu0 0
        %1724 = vmatpush1.bf16.msra.mxu0 0
        %1725 = vmatprep.subr.bf16.mxu0 0
        %1726 = vmatpush1.bf16.msra.mxu0 0
        %1727 = vmatprep.subr.bf16.mxu0 0
        %1728 = vmatpush1.bf16.msra.mxu0 0
        %1729 = vmatprep.subr.bf16.mxu0 0
        %1730 = vmatpush1.bf16.msra.mxu0 0
        %1731 = vmatprep.subr.bf16.mxu0 0
        %1732 = vmatpush1.bf16.msra.mxu0 0
        %1733 = vmatprep.subr.bf16.mxu0 0
        %1734 = vmatpush1.bf16.msra.mxu0 0
        %1735 = vmatprep.subr.bf16.mxu0 0
        %1736 = vmatpush1.bf16.msra.mxu0 0
        %1737 = vmatprep.mubr.bf16.mxu0 0
        %1738 = vmatmul.mubr.bf16.gmra.mrb[0].mxu0 %v1700
        %v1739 = vpop.f32.mrb[0].mxu0
        %v1740 = vadd.f32 0.0, %v1739
        %v1741 = vpop.f32.mrb[0].mxu0
        %v1742 = vpop.f32.mrb[0].mxu0
        %v1743 = vpop.f32.mrb[0].mxu0
        %1744 = vdwg.mxu0
        %1745 = vrot.lane.b32.xlu0 %v1072, 32
        %v1746 = vpop.permute.xlu0 %1745
        %v1748 = vsel %vm1114, %v1746, 0
        %1750 = vmatprep.subr.bf16.mxu0 0
        %1751 = vmatpush1.bf16.msra.mxu0 %v1112
        %1752 = vmatprep.subr.bf16.mxu0 0
        %1753 = vmatpush1.bf16.msra.mxu0 0
        %1754 = vmatprep.subr.bf16.mxu0 0
        %1755 = vmatpush1.bf16.msra.mxu0 0
        %1756 = vmatprep.subr.bf16.mxu0 0
        %1757 = vmatpush1.bf16.msra.mxu0 0
        %1758 = vmatprep.subr.bf16.mxu0 0
        %1759 = vmatpush1.bf16.msra.mxu0 0
        %1760 = vmatprep.subr.bf16.mxu0 0
        %1761 = vmatpush1.bf16.msra.mxu0 0
        %1762 = vmatprep.subr.bf16.mxu0 0
        %1763 = vmatpush1.bf16.msra.mxu0 0
        %1764 = vmatprep.subr.bf16.mxu0 0
        %1765 = vmatpush1.bf16.msra.mxu0 0
        %1766 = vmatprep.subr.bf16.mxu0 0
        %1767 = vmatpush1.bf16.msra.mxu0 0
        %1768 = vmatprep.subr.bf16.mxu0 0
        %1769 = vmatpush1.bf16.msra.mxu0 0
        %1770 = vmatprep.subr.bf16.mxu0 0
        %1771 = vmatpush1.bf16.msra.mxu0 0
        %1772 = vmatprep.subr.bf16.mxu0 0
        %1773 = vmatpush1.bf16.msra.mxu0 0
        %1774 = vmatprep.subr.bf16.mxu0 0
        %1775 = vmatpush1.bf16.msra.mxu0 0
        %1776 = vmatprep.subr.bf16.mxu0 0
        %1777 = vmatpush1.bf16.msra.mxu0 0
        %1778 = vmatprep.subr.bf16.mxu0 0
        %1779 = vmatpush1.bf16.msra.mxu0 0
        %1780 = vmatprep.subr.bf16.mxu0 0
        %1781 = vmatpush1.bf16.msra.mxu0 0
        %1782 = vmatprep.mubr.bf16.mxu0 0
        %1783 = vmatmul.mubr.bf16.gmra.mrb[0].mxu0 %v1748
        %v1784 = vpop.f32.mrb[0].mxu0
        %v1785 = vadd.f32 0.0, %v1784
        %v1786 = vpop.f32.mrb[0].mxu0
        %v1787 = vpop.f32.mrb[0].mxu0
        %v1788 = vpop.f32.mrb[0].mxu0
        %1789 = vdwg.mxu0
        %v1790 = vsel %vm1158, %v1785, -inf
        %1791 = vmax.xlane.f32.xlu0 %v1790
        %v1792 = vpop.xlane.xlu0 %1791
        %v1793 = vsub.f32 %v1785, %v1792
        %v1794 = vmul.f32 %v1793, 1.442695
        %v1795 = vpow.pop %v1794
        %v1796 = vsel %vm1158, %v1795, 0.0
        %1797 = vadd.xlane.f32.xlu0 %v1796
        %v1798 = vpop.xlane.xlu0 %1797
        %v1799 = vrcp.pop %v1798
        %v1800 = vmul.f32 %v1795, %v1799
        %v1801 = vpack.c.bf16 %v1800, %v1800
        %1802 = vrot.lane.b32.xlu0 %v1073, 32
        %v1803 = vpop.permute.xlu0 %1802
        %v1805 = vsel %vm1158, %v1801, 0
        %v1808 = vsel %vm1174, %v1803, 0
        %1810 = vmatprep.subr.bf16.mxu0 0
        %1811 = vmatpush1.bf16.msra.mxu0 %v1808
        %1812 = vmatprep.subr.bf16.mxu0 0
        %1813 = vmatpush1.bf16.msra.mxu0 0
        %1814 = vmatprep.subr.bf16.mxu0 0
        %1815 = vmatpush1.bf16.msra.mxu0 0
        %1816 = vmatprep.subr.bf16.mxu0 0
        %1817 = vmatpush1.bf16.msra.mxu0 0
        %1818 = vmatprep.subr.bf16.mxu0 0
        %1819 = vmatpush1.bf16.msra.mxu0 0
        %1820 = vmatprep.subr.bf16.mxu0 0
        %1821 = vmatpush1.bf16.msra.mxu0 0
        %1822 = vmatprep.subr.bf16.mxu0 0
        %1823 = vmatpush1.bf16.msra.mxu0 0
        %1824 = vmatprep.subr.bf16.mxu0 0
        %1825 = vmatpush1.bf16.msra.mxu0 0
        %1826 = vmatprep.subr.bf16.mxu0 0
        %1827 = vmatpush1.bf16.msra.mxu0 0
        %1828 = vmatprep.subr.bf16.mxu0 0
        %1829 = vmatpush1.bf16.msra.mxu0 0
        %1830 = vmatprep.subr.bf16.mxu0 0
        %1831 = vmatpush1.bf16.msra.mxu0 0
        %1832 = vmatprep.subr.bf16.mxu0 0
        %1833 = vmatpush1.bf16.msra.mxu0 0
        %1834 = vmatprep.subr.bf16.mxu0 0
        %1835 = vmatpush1.bf16.msra.mxu0 0
        %1836 = vmatprep.subr.bf16.mxu0 0
        %1837 = vmatpush1.bf16.msra.mxu0 0
        %1838 = vmatprep.subr.bf16.mxu0 0
        %1839 = vmatpush1.bf16.msra.mxu0 0
        %1840 = vmatprep.subr.bf16.mxu0 0
        %1841 = vmatpush1.bf16.msra.mxu0 0
        %1842 = vmatprep.mubr.bf16.mxu0 0
        %1843 = vmatmul.mubr.bf16.gmra.mrb[0].mxu0 %v1805
        %v1844 = vpop.f32.mrb[0].mxu0
        %v1845 = vadd.f32 0.0, %v1844
        %v1846 = vpop.f32.mrb[0].mxu0
        %v1847 = vpop.f32.mrb[0].mxu0
        %v1848 = vpop.f32.mrb[0].mxu0
        %1849 = vdwg.mxu0
        %1850 = vrot.lane.b32.xlu0 %v1072, 16
        %v1851 = vpop.permute.xlu0 %1850
        %v1853 = vsel %vm1114, %v1851, 0
        %1855 = vmatprep.subr.bf16.mxu0 0
        %1856 = vmatpush1.bf16.msra.mxu0 %v1113
        %1857 = vmatprep.subr.bf16.mxu0 0
        %1858 = vmatpush1.bf16.msra.mxu0 0
        %1859 = vmatprep.subr.bf16.mxu0 0
        %1860 = vmatpush1.bf16.msra.mxu0 0
        %1861 = vmatprep.subr.bf16.mxu0 0
        %1862 = vmatpush1.bf16.msra.mxu0 0
        %1863 = vmatprep.subr.bf16.mxu0 0
        %1864 = vmatpush1.bf16.msra.mxu0 0
        %1865 = vmatprep.subr.bf16.mxu0 0
        %1866 = vmatpush1.bf16.msra.mxu0 0
        %1867 = vmatprep.subr.bf16.mxu0 0
        %1868 = vmatpush1.bf16.msra.mxu0 0
        %1869 = vmatprep.subr.bf16.mxu0 0
        %1870 = vmatpush1.bf16.msra.mxu0 0
        %1871 = vmatprep.subr.bf16.mxu0 0
        %1872 = vmatpush1.bf16.msra.mxu0 0
        %1873 = vmatprep.subr.bf16.mxu0 0
        %1874 = vmatpush1.bf16.msra.mxu0 0
        %1875 = vmatprep.subr.bf16.mxu0 0
        %1876 = vmatpush1.bf16.msra.mxu0 0
        %1877 = vmatprep.subr.bf16.mxu0 0
        %1878 = vmatpush1.bf16.msra.mxu0 0
        %1879 = vmatprep.subr.bf16.mxu0 0
        %1880 = vmatpush1.bf16.msra.mxu0 0
        %1881 = vmatprep.subr.bf16.mxu0 0
        %1882 = vmatpush1.bf16.msra.mxu0 0
        %1883 = vmatprep.subr.bf16.mxu0 0
        %1884 = vmatpush1.bf16.msra.mxu0 0
        %1885 = vmatprep.subr.bf16.mxu0 0
        %1886 = vmatpush1.bf16.msra.mxu0 0
        %1887 = vmatprep.mubr.bf16.mxu0 0
        %1888 = vmatmul.mubr.bf16.gmra.mrb[0].mxu0 %v1853
        %v1889 = vpop.f32.mrb[0].mxu0
        %v1890 = vadd.f32 0.0, %v1889
        %v1891 = vpop.f32.mrb[0].mxu0
        %v1892 = vpop.f32.mrb[0].mxu0
        %v1893 = vpop.f32.mrb[0].mxu0
        %1894 = vdwg.mxu0
        %v1895 = vsel %vm1158, %v1890, -inf
        %1896 = vmax.xlane.f32.xlu0 %v1895
        %v1897 = vpop.xlane.xlu0 %1896
        %v1898 = vsub.f32 %v1890, %v1897
        %v1899 = vmul.f32 %v1898, 1.442695
        %v1900 = vpow.pop %v1899
        %v1901 = vsel %vm1158, %v1900, 0.0
        %1902 = vadd.xlane.f32.xlu0 %v1901
        %v1903 = vpop.xlane.xlu0 %1902
        %v1904 = vrcp.pop %v1903
        %v1905 = vmul.f32 %v1900, %v1904
        %v1906 = vpack.c.bf16 %v1905, %v1905
        %1907 = vrot.lane.b32.xlu0 %v1073, 16
        %v1908 = vpop.permute.xlu0 %1907
        %v1910 = vsel %vm1158, %v1906, 0
        %v1913 = vsel %vm1174, %v1908, 0
        %1915 = vmatprep.subr.bf16.mxu0 0
        %1916 = vmatpush1.bf16.msra.mxu0 %v1913
        %1917 = vmatprep.subr.bf16.mxu0 0
        %1918 = vmatpush1.bf16.msra.mxu0 0
        %1919 = vmatprep.subr.bf16.mxu0 0
        %1920 = vmatpush1.bf16.msra.mxu0 0
        %1921 = vmatprep.subr.bf16.mxu0 0
        %1922 = vmatpush1.bf16.msra.mxu0 0
        %1923 = vmatprep.subr.bf16.mxu0 0
        %1924 = vmatpush1.bf16.msra.mxu0 0
        %1925 = vmatprep.subr.bf16.mxu0 0
        %1926 = vmatpush1.bf16.msra.mxu0 0
        %1927 = vmatprep.subr.bf16.mxu0 0
        %1928 = vmatpush1.bf16.msra.mxu0 0
        %1929 = vmatprep.subr.bf16.mxu0 0
        %1930 = vmatpush1.bf16.msra.mxu0 0
        %1931 = vmatprep.subr.bf16.mxu0 0
        %1932 = vmatpush1.bf16.msra.mxu0 0
        %1933 = vmatprep.subr.bf16.mxu0 0
        %1934 = vmatpush1.bf16.msra.mxu0 0
        %1935 = vmatprep.subr.bf16.mxu0 0
        %1936 = vmatpush1.bf16.msra.mxu0 0
        %1937 = vmatprep.subr.bf16.mxu0 0
        %1938 = vmatpush1.bf16.msra.mxu0 0
        %1939 = vmatprep.subr.bf16.mxu0 0
        %1940 = vmatpush1.bf16.msra.mxu0 0
        %1941 = vmatprep.subr.bf16.mxu0 0
        %1942 = vmatpush1.bf16.msra.mxu0 0
        %1943 = vmatprep.subr.bf16.mxu0 0
        %1944 = vmatpush1.bf16.msra.mxu0 0
        %1945 = vmatprep.subr.bf16.mxu0 0
        %1946 = vmatpush1.bf16.msra.mxu0 0
        %1947 = vmatprep.mubr.bf16.mxu0 0
        %1948 = vmatmul.mubr.bf16.gmra.mrb[0].mxu0 %v1910
        %v1949 = vpop.f32.mrb[0].mxu0
        %v1950 = vadd.f32 0.0, %v1949
        %v1951 = vpop.f32.mrb[0].mxu0
        %v1952 = vpop.f32.mrb[0].mxu0
        %v1953 = vpop.f32.mrb[0].mxu0
        %1954 = vdwg.mxu0
        %1956 = vrot.lane.b32.xlu0 %v1320, 16
        %v1957 = vpop.permute.xlu0 %1956
        %1960 = vrot.lane.b32.xlu0 %v1425, 32
        %v1961 = vpop.permute.xlu0 %1960
        %1964 = vrot.lane.b32.xlu0 %v1530, 48
        %v1965 = vpop.permute.xlu0 %1964
        %1968 = vrot.lane.b32.xlu0 %v1635, 64
        %v1969 = vpop.permute.xlu0 %1968
        %1972 = vrot.lane.b32.xlu0 %v1740, 80
        %v1973 = vpop.permute.xlu0 %1972
        %1976 = vrot.lane.b32.xlu0 %v1845, 96
        %v1977 = vpop.permute.xlu0 %1976
        %1980 = vrot.lane.b32.xlu0 %v1950, 112
        %v1981 = vpop.permute.xlu0 %1980
        %v1983 = vsel %vm1114, %v1213, %v1957
        %vm1984 = vcmask 261120
        %v1985 = vsel %vm1984, %v1983, %v1961
        %vm1986 = vcmask 392192
        %v1987 = vsel %vm1986, %v1985, %v1965
        %vm1988 = vcmask 523264
        %v1989 = vsel %vm1988, %v1987, %v1969
        %vm1990 = vcmask 654336
        %v1991 = vsel %vm1990, %v1989, %v1973
        %vm1992 = vcmask 785408
        %v1993 = vsel %vm1992, %v1991, %v1977
        %vm1994 = vcmask 916480
        %v1995 = vsel %vm1994, %v1993, %v1981
        %v1996 = vpack.c.bf16 %v1995, %v1995
        %v1997 = vld [vmem:[%s4] sm:$0xf]
        %v1998 = vld [vmem:[%s4 + $0x4] sm:$0xf]
        %v1999 = vld [vmem:[%s4 + $0x8] sm:$0xf]
        %v2000 = vld [vmem:[%s4 + $0xc] sm:$0xf]
        %v2001 = vld [vmem:[%s4 + $0x10] sm:$0xf]
        %v2002 = vld [vmem:[%s4 + $0x14] sm:$0xf]
        %v2003 = vld [vmem:[%s4 + $0x18] sm:$0xf]
        %v2004 = vld [vmem:[%s4 + $0x1c] sm:$0xf]
        %v2005 = vld [vmem:[%s4 + $0x20] sm:$0xf]
        %v2006 = vld [vmem:[%s4 + $0x24] sm:$0xf]
        %v2007 = vld [vmem:[%s4 + $0x28] sm:$0xf]
        %v2008 = vld [vmem:[%s4 + $0x2c] sm:$0xf]
        %v2009 = vld [vmem:[%s4 + $0x30] sm:$0xf]
        %v2010 = vld [vmem:[%s4 + $0x34] sm:$0xf]
        %v2011 = vld [vmem:[%s4 + $0x38] sm:$0xf]
        %v2012 = vld [vmem:[%s4 + $0x3c] sm:$0xf]
        %v2013 = vld [vmem:[%s5] sm:$0x1]
        %v2015 = vlaneseq
        %v2016 = vshrl.u32 %v2015, 7
        %v2017 = vsub.s32 0, %v2016
        %v2018 = vrot.slane %v2013, %v2017
        %v2036 = vunpack.c.l.b16 %v1997
        %v2037 = vunpack.c.l.b16 %v1998
        %v2038 = vunpack.c.l.b16 %v1999
        %v2039 = vunpack.c.l.b16 %v2000
        %v2040 = vunpack.c.l.b16 %v2001
        %v2041 = vunpack.c.l.b16 %v2002
        %v2042 = vunpack.c.l.b16 %v2003
        %v2043 = vunpack.c.l.b16 %v2004
        %v2044 = vunpack.c.l.b16 %v2005
        %v2045 = vunpack.c.l.b16 %v2006
        %v2046 = vunpack.c.l.b16 %v2007
        %v2047 = vunpack.c.l.b16 %v2008
        %v2048 = vunpack.c.l.b16 %v2009
        %v2049 = vunpack.c.l.b16 %v2010
        %v2050 = vunpack.c.l.b16 %v2011
        %v2051 = vunpack.c.l.b16 %v2012
        %v2052 = vpack.c.b16 %v2037, %v2036
        %v2053 = vpack.c.b16 %v2039, %v2038
        %v2054 = vpack.c.b16 %v2041, %v2040
        %v2055 = vpack.c.b16 %v2043, %v2042
        %v2056 = vpack.c.b16 %v2045, %v2044
        %v2057 = vpack.c.b16 %v2047, %v2046
        %v2058 = vpack.c.b16 %v2049, %v2048
        %v2059 = vpack.c.b16 %v2051, %v2050
        %2068 = vmatprep.subr.bf16.mxu0 0
        %2069 = vmatpush1.bf16.msra.mxu0 %v2052
        %2070 = vmatprep.subr.bf16.mxu0 0
        %2071 = vmatpush1.bf16.msra.mxu0 %v2053
        %2072 = vmatprep.subr.bf16.mxu0 0
        %2073 = vmatpush1.bf16.msra.mxu0 %v2054
        %2074 = vmatprep.subr.bf16.mxu0 0
        %2075 = vmatpush1.bf16.msra.mxu0 %v2055
        %2076 = vmatprep.subr.bf16.mxu0 0
        %2077 = vmatpush1.bf16.msra.mxu0 %v2056
        %2078 = vmatprep.subr.bf16.mxu0 0
        %2079 = vmatpush1.bf16.msra.mxu0 %v2057
        %2080 = vmatprep.subr.bf16.mxu0 0
        %2081 = vmatpush1.bf16.msra.mxu0 %v2058
        %2082 = vmatprep.subr.bf16.mxu0 0
        %2083 = vmatpush1.bf16.msra.mxu0 %v2059
        %2084 = vmatprep.subr.bf16.mxu0 0
        %2085 = vmatpush1.bf16.msra.mxu0 0
        %2086 = vmatprep.subr.bf16.mxu0 0
        %2087 = vmatpush1.bf16.msra.mxu0 0
        %2088 = vmatprep.subr.bf16.mxu0 0
        %2089 = vmatpush1.bf16.msra.mxu0 0
        %2090 = vmatprep.subr.bf16.mxu0 0
        %2091 = vmatpush1.bf16.msra.mxu0 0
        %2092 = vmatprep.subr.bf16.mxu0 0
        %2093 = vmatpush1.bf16.msra.mxu0 0
        %2094 = vmatprep.subr.bf16.mxu0 0
        %2095 = vmatpush1.bf16.msra.mxu0 0
        %2096 = vmatprep.subr.bf16.mxu0 0
        %2097 = vmatpush1.bf16.msra.mxu0 0
        %2098 = vmatprep.subr.bf16.mxu0 0
        %2099 = vmatpush1.bf16.msra.mxu0 0
        %2100 = vmatprep.mubr.bf16.mxu0 0
        %2101 = vmatmul.mubr.bf16.gmra.mrb[0].mxu0 %v1996
        %v2102 = vpop.f32.mrb[0].mxu0
        %v2103 = vadd.f32 %v2018, %v2102
        %v2104 = vpop.f32.mrb[0].mxu0
        %v2105 = vpop.f32.mrb[0].mxu0
        %v2106 = vpop.f32.mrb[0].mxu0
        %2107 = vdwg.mxu0
        %v2108 = vadd.f32 %v735, %v2103
        %2109 = vadd.xlane.f32.xlu0 %v2108
        %v2110 = vpop.xlane.xlu0 %2109
        %v2111 = vrcp.pop 128.0
        %v2112 = vmul.f32 %v2110, %v2111
        %v2113 = vsub.f32 %v2108, %v2112
        %v2114 = vmul.f32 %v2113, %v2113
        %2115 = vadd.xlane.f32.xlu0 %v2114
        %v2116 = vpop.xlane.xlu0 %2115
        %v2117 = vmul.f32 %v2116, %v2111
        %v2118 = vadd.f32 %v2117, 1e-05
        %v2119 = vrsqrt.pop %v2118
        %v2120 = vmul.f32 %v2113, %v2119
        %v2121 = vld [vmem:[%s6] sm:$0x1]
        %v2123 = vlaneseq
        %v2124 = vshrl.u32 %v2123, 7
        %v2125 = vsub.s32 0, %v2124
        %v2126 = vrot.slane %v2121, %v2125
        %v2128 = vmul.f32 %v2120, %v2126
        %v2129 = vld [vmem:[%s7] sm:$0x1]
        %v2131 = vlaneseq
        %v2132 = vshrl.u32 %v2131, 7
        %v2133 = vsub.s32 0, %v2132
        %v2134 = vrot.slane %v2129, %v2133
        %v2136 = vadd.f32 %v2128, %v2134
        %v2137 = vpack.c.bf16 %v2136, %v2136
        %v2138 = vld [vmem:[%s8] sm:$0xff]
        %v2139 = vld [vmem:[%s8 + $0x8] sm:$0xff]
        %v2140 = vld [vmem:[%s8 + $0x10] sm:$0xff]
        %v2141 = vld [vmem:[%s8 + $0x18] sm:$0xff]
        %v2142 = vld [vmem:[%s8 + $0x20] sm:$0xff]
        %v2143 = vld [vmem:[%s8 + $0x28] sm:$0xff]
        %v2144 = vld [vmem:[%s8 + $0x30] sm:$0xff]
        %v2145 = vld [vmem:[%s8 + $0x38] sm:$0xff]
        %v2146 = vld [vmem:[%s8 + $0x40] sm:$0xff]
        %v2147 = vld [vmem:[%s8 + $0x48] sm:$0xff]
        %v2148 = vld [vmem:[%s8 + $0x50] sm:$0xff]
        %v2149 = vld [vmem:[%s8 + $0x58] sm:$0xff]
        %v2150 = vld [vmem:[%s8 + $0x60] sm:$0xff]
        %v2151 = vld [vmem:[%s8 + $0x68] sm:$0xff]
        %v2152 = vld [vmem:[%s8 + $0x70] sm:$0xff]
        %v2153 = vld [vmem:[%s8 + $0x78] sm:$0xff]
        %v2154 = vld [vmem:[%s8 + $0x80] sm:$0xff]
        %v2155 = vld [vmem:[%s8 + $0x88] sm:$0xff]
        %v2156 = vld [vmem:[%s8 + $0x90] sm:$0xff]
        %v2157 = vld [vmem:[%s8 + $0x98] sm:$0xff]
        %v2158 = vld [vmem:[%s8 + $0xa0] sm:$0xff]
        %v2159 = vld [vmem:[%s8 + $0xa8] sm:$0xff]
        %v2160 = vld [vmem:[%s8 + $0xb0] sm:$0xff]
        %v2161 = vld [vmem:[%s8 + $0xb8] sm:$0xff]
        %v2162 = vld [vmem:[%s8 + $0xc0] sm:$0xff]
        %v2163 = vld [vmem:[%s8 + $0xc8] sm:$0xff]
        %v2164 = vld [vmem:[%s8 + $0xd0] sm:$0xff]
        %v2165 = vld [vmem:[%s8 + $0xd8] sm:$0xff]
        %v2166 = vld [vmem:[%s8 + $0xe0] sm:$0xff]
        %v2167 = vld [vmem:[%s8 + $0xe8] sm:$0xff]
        %v2168 = vld [vmem:[%s8 + $0xf0] sm:$0xff]
        %v2169 = vld [vmem:[%s8 + $0xf8] sm:$0xff]
        %v2170 = vld [vmem:[%s9] sm:$0xf]
        %v2172 = vlaneseq
        %v2173 = vshrl.u32 %v2172, 7
        %v2174 = vsub.s32 0, %v2173
        %v2175 = vrot.slane %v2170, %v2174
        %v2176 = vlaneseq
        %v2177 = vshrl.u32 %v2176, 7
        %v2178 = vsub.s32 1, %v2177
        %v2179 = vrot.slane %v2170, %v2178
        %v2180 = vlaneseq
        %v2181 = vshrl.u32 %v2180, 7
        %v2182 = vsub.s32 2, %v2181
        %v2183 = vrot.slane %v2170, %v2182
        %v2184 = vlaneseq
        %v2185 = vshrl.u32 %v2184, 7
        %v2186 = vsub.s32 3, %v2185
        %v2187 = vrot.slane %v2170, %v2186
        %v2224 = vunpack.c.l.b16 %v2138
        %v2225 = vunpack.c.h.b16 %v2138
        %v2226 = vunpack.c.l.b16 %v2139
        %v2227 = vunpack.c.h.b16 %v2139
        %v2228 = vunpack.c.l.b16 %v2140
        %v2229 = vunpack.c.h.b16 %v2140
        %v2230 = vunpack.c.l.b16 %v2141
        %v2231 = vunpack.c.h.b16 %v2141
        %v2232 = vunpack.c.l.b16 %v2142
        %v2233 = vunpack.c.h.b16 %v2142
        %v2234 = vunpack.c.l.b16 %v2143
        %v2235 = vunpack.c.h.b16 %v2143
        %v2236 = vunpack.c.l.b16 %v2144
        %v2237 = vunpack.c.h.b16 %v2144
        %v2238 = vunpack.c.l.b16 %v2145
        %v2239 = vunpack.c.h.b16 %v2145
        %v2240 = vunpack.c.l.b16 %v2146
        %v2241 = vunpack.c.h.b16 %v2146
        %v2242 = vunpack.c.l.b16 %v2147
        %v2243 = vunpack.c.h.b16 %v2147
        %v2244 = vunpack.c.l.b16 %v2148
        %v2245 = vunpack.c.h.b16 %v2148
        %v2246 = vunpack.c.l.b16 %v2149
        %v2247 = vunpack.c.h.b16 %v2149
        %v2248 = vunpack.c.l.b16 %v2150
        %v2249 = vunpack.c.h.b16 %v2150
        %v2250 = vunpack.c.l.b16 %v2151
        %v2251 = vunpack.c.h.b16 %v2151
        %v2252 = vunpack.c.l.b16 %v2152
        %v2253 = vunpack.c.h.b16 %v2152
        %v2254 = vunpack.c.l.b16 %v2153
        %v2255 = vunpack.c.h.b16 %v2153
        %v2256 = vunpack.c.l.b16 %v2154
        %v2257 = vunpack.c.h.b16 %v2154
        %v2258 = vunpack.c.l.b16 %v2155
        %v2259 = vunpack.c.h.b16 %v2155
        %v2260 = vunpack.c.l.b16 %v2156
        %v2261 = vunpack.c.h.b16 %v2156
        %v2262 = vunpack.c.l.b16 %v2157
        %v2263 = vunpack.c.h.b16 %v2157
        %v2264 = vunpack.c.l.b16 %v2158
        %v2265 = vunpack.c.h.b16 %v2158
        %v2266 = vunpack.c.l.b16 %v2159
        %v2267 = vunpack.c.h.b16 %v2159
        %v2268 = vunpack.c.l.b16 %v2160
        %v2269 = vunpack.c.h.b16 %v2160
        %v2270 = vunpack.c.l.b16 %v2161
        %v2271 = vunpack.c.h.b16 %v2161
        %v2272 = vunpack.c.l.b16 %v2162
        %v2273 = vunpack.c.h.b16 %v2162
        %v2274 = vunpack.c.l.b16 %v2163
        %v2275 = vunpack.c.h.b16 %v2163
        %v2276 = vunpack.c.l.b16 %v2164
        %v2277 = vunpack.c.h.b16 %v2164
        %v2278 = vunpack.c.l.b16 %v2165
        %v2279 = vunpack.c.h.b16 %v2165
        %v2280 = vunpack.c.l.b16 %v2166
        %v2281 = vunpack.c.h.b16 %v2166
        %v2282 = vunpack.c.l.b16 %v2167
        %v2283 = vunpack.c.h.b16 %v2167
        %v2284 = vunpack.c.l.b16 %v2168
        %v2285 = vunpack.c.h.b16 %v2168
        %v2286 = vunpack.c.l.b16 %v2169
        %v2287 = vunpack.c.h.b16 %v2169
        %v2288 = vpack.c.b16 %v2228, %v2224
        %v2289 = vpack.c.b16 %v2229, %v2225
        %v2290 = vpack.c.b16 %v2230, %v2226
        %v2291 = vpack.c.b16 %v2231, %v2227
        %v2292 = vpack.c.b16 %v2236, %v2232
        %v2293 = vpack.c.b16 %v2237, %v2233
        %v2294 = vpack.c.b16 %v2238, %v2234
        %v2295 = vpack.c.b16 %v2239, %v2235
        %v2296 = vpack.c.b16 %v2244, %v2240
        %v2297 = vpack.c.b16 %v2245, %v2241
        %v2298 = vpack.c.b16 %v2246, %v2242
        %v2299 = vpack.c.b16 %v2247, %v2243
        %v2300 = vpack.c.b16 %v2252, %v2248
        %v2301 = vpack.c.b16 %v2253, %v2249
        %v2302 = vpack.c.b16 %v2254, %v2250
        %v2303 = vpack.c.b16 %v2255, %v2251
        %v2304 = vpack.c.b16 %v2260, %v2256
        %v2305 = vpack.c.b16 %v2261, %v2257
        %v2306 = vpack.c.b16 %v2262, %v2258
        %v2307 = vpack.c.b16 %v2263, %v2259
        %v2308 = vpack.c.b16 %v2268, %v2264
        %v2309 = vpack.c.b16 %v2269, %v2265
        %v2310 = vpack.c.b16 %v2270, %v2266
        %v2311 = vpack.c.b16 %v2271, %v2267
        %v2312 = vpack.c.b16 %v2276, %v2272
        %v2313 = vpack.c.b16 %v2277, %v2273
        %v2314 = vpack.c.b16 %v2278, %v2274
        %v2315 = vpack.c.b16 %v2279, %v2275
        %v2316 = vpack.c.b16 %v2284, %v2280
        %v2317 = vpack.c.b16 %v2285, %v2281
        %v2318 = vpack.c.b16 %v2286, %v2282
        %v2319 = vpack.c.b16 %v2287, %v2283
        %2352 = vmatprep.subr.bf16.mxu0 %v2289
        %2353 = vmatpush1.bf16.msra.mxu0 %v2288
        %2354 = vmatprep.subr.bf16.mxu0 %v2293
        %2355 = vmatpush1.bf16.msra.mxu0 %v2292
        %2356 = vmatprep.subr.bf16.mxu0 %v2297
        %2357 = vmatpush1.bf16.msra.mxu0 %v2296
        %2358 = vmatprep.subr.bf16.mxu0 %v2301
        %2359 = vmatpush1.bf16.msra.mxu0 %v2300
        %2360 = vmatprep.subr.bf16.mxu0 %v2305
        %2361 = vmatpush1.bf16.msra.mxu0 %v2304
        %2362 = vmatprep.subr.bf16.mxu0 %v2309
        %2363 = vmatpush1.bf16.msra.mxu0 %v2308
        %2364 = vmatprep.subr.bf16.mxu0 %v2313
        %2365 = vmatpush1.bf16.msra.mxu0 %v2312
        %2366 = vmatprep.subr.bf16.mxu0 %v2317
        %2367 = vmatpush1.bf16.msra.mxu0 %v2316
        %2368 = vmatprep.subr.bf16.mxu0 0
        %2369 = vmatpush1.bf16.msra.mxu0 0
        %2370 = vmatprep.subr.bf16.mxu0 0
        %2371 = vmatpush1.bf16.msra.mxu0 0
        %2372 = vmatprep.subr.bf16.mxu0 0
        %2373 = vmatpush1.bf16.msra.mxu0 0
        %2374 = vmatprep.subr.bf16.mxu0 0
        %2375 = vmatpush1.bf16.msra.mxu0 0
        %2376 = vmatprep.subr.bf16.mxu0 0
        %2377 = vmatpush1.bf16.msra.mxu0 0
        %2378 = vmatprep.subr.bf16.mxu0 0
        %2379 = vmatpush1.bf16.msra.mxu0 0
        %2380 = vmatprep.subr.bf16.mxu0 0
        %2381 = vmatpush1.bf16.msra.mxu0 0
        %2382 = vmatprep.subr.bf16.mxu0 0
        %2383 = vmatpush1.bf16.msra.mxu0 0
        %2384 = vmatprep.mubr.bf16.mxu0 0
        %2385 = vmatmul.mubr.bf16.gmra.mrb[0].mxu0 %v2137
        %v2386 = vpop.f32.mrb[0].mxu0
        %v2387 = vadd.f32 %v2175, %v2386
        %v2388 = vpop.f32.mrb[0].mxu0
        %v2389 = vadd.f32 %v2179, %v2388
        %v2390 = vpop.f32.mrb[0].mxu0
        %v2391 = vpop.f32.mrb[0].mxu0
        %2392 = vdwg.mxu0
        %2393 = vmatprep.subr.bf16.mxu0 %v2291
        %2394 = vmatpush1.bf16.msra.mxu0 %v2290
        %2395 = vmatprep.subr.bf16.mxu0 %v2295
        %2396 = vmatpush1.bf16.msra.mxu0 %v2294
        %2397 = vmatprep.subr.bf16.mxu0 %v2299
        %2398 = vmatpush1.bf16.msra.mxu0 %v2298
        %2399 = vmatprep.subr.bf16.mxu0 %v2303
        %2400 = vmatpush1.bf16.msra.mxu0 %v2302
        %2401 = vmatprep.subr.bf16.mxu0 %v2307
        %2402 = vmatpush1.bf16.msra.mxu0 %v2306
        %2403 = vmatprep.subr.bf16.mxu0 %v2311
        %2404 = vmatpush1.bf16.msra.mxu0 %v2310
        %2405 = vmatprep.subr.bf16.mxu0 %v2315
        %2406 = vmatpush1.bf16.msra.mxu0 %v2314
        %2407 = vmatprep.subr.bf16.mxu0 %v2319
        %2408 = vmatpush1.bf16.msra.mxu0 %v2318
        %2409 = vmatprep.subr.bf16.mxu0 0
        %2410 = vmatpush1.bf16.msra.mxu0 0
        %2411 = vmatprep.subr.bf16.mxu0 0
        %2412 = vmatpush1.bf16.msra.mxu0 0
        %2413 = vmatprep.subr.bf16.mxu0 0
        %2414 = vmatpush1.bf16.msra.mxu0 0
        %2415 = vmatprep.subr.bf16.mxu0 0
        %2416 = vmatpush1.bf16.msra.mxu0 0
        %2417 = vmatprep.subr.bf16.mxu0 0
        %2418 = vmatpush1.bf16.msra.mxu0 0
        %2419 = vmatprep.subr.bf16.mxu0 0
        %2420 = vmatpush1.bf16.msra.mxu0 0
        %2421 = vmatprep.subr.bf16.mxu0 0
        %2422 = vmatpush1.bf16.msra.mxu0 0
        %2423 = vmatprep.subr.bf16.mxu0 0
        %2424 = vmatpush1.bf16.msra.mxu0 0
        %2425 = vmatprep.mubr.bf16.mxu0 0
        %2426 = vmatmul.mubr.bf16.gmra.mrb[0].mxu0 %v2137
        %v2427 = vpop.f32.mrb[0].mxu0
        %v2428 = vadd.f32 %v2183, %v2427
        %v2429 = vpop.f32.mrb[0].mxu0
        %v2430 = vadd.f32 %v2187, %v2429
        %v2431 = vpop.f32.mrb[0].mxu0
        %v2432 = vpop.f32.mrb[0].mxu0
        %2433 = vdwg.mxu0
        %v2434 = vmul.f32 %v2387, 0.5
        %v2435 = vmul.f32 %v2389, 0.5
        %v2436 = vmul.f32 %v2428, 0.5
        %v2437 = vmul.f32 %v2430, 0.5
        %v2438 = vmul.f32 %v2387, 0.70710677
        %v2439 = vmul.f32 %v2389, 0.70710677
        %v2440 = vmul.f32 %v2428, 0.70710677
        %v2441 = vmul.f32 %v2430, 0.70710677
        %v2442 = vand.u32 2147483647, %v2438
        %v2443 = vand.u32 2147483647, %v2439
        %v2444 = vand.u32 2147483647, %v2440
        %v2445 = vand.u32 2147483647, %v2441
        %v2446 = vmul.f32 %v2442, 0.3275911
        %v2447 = vmul.f32 %v2443, 0.3275911
        %v2448 = vmul.f32 %v2444, 0.3275911
        %v2449 = vmul.f32 %v2445, 0.3275911
        %v2450 = vadd.f32 %v2446, 1.0
        %v2451 = vadd.f32 %v2447, 1.0
        %v2452 = vadd.f32 %v2448, 1.0
        %v2453 = vadd.f32 %v2449, 1.0
        %v2454 = vrcp.pop %v2450
        %v2455 = vmul.f32 1.0, %v2454
        %v2456 = vrcp.pop %v2451
        %v2457 = vmul.f32 1.0, %v2456
        %v2458 = vrcp.pop %v2452
        %v2459 = vmul.f32 1.0, %v2458
        %v2460 = vrcp.pop %v2453
        %v2461 = vmul.f32 1.0, %v2460
        %v2462 = vmul.f32 %v2455, 1.0614054
        %v2463 = vmul.f32 %v2457, 1.0614054
        %v2464 = vmul.f32 %v2459, 1.0614054
        %v2465 = vmul.f32 %v2461, 1.0614054
        %v2466 = vadd.f32 %v2462, -1.4531521
        %v2467 = vadd.f32 %v2463, -1.4531521
        %v2468 = vadd.f32 %v2464, -1.4531521
        %v2469 = vadd.f32 %v2465, -1.4531521
        %v2470 = vmul.f32 %v2466, %v2455
        %v2471 = vmul.f32 %v2467, %v2457
        %v2472 = vmul.f32 %v2468, %v2459
        %v2473 = vmul.f32 %v2469, %v2461
        %v2474 = vadd.f32 %v2470, 1.4214138
        %v2475 = vadd.f32 %v2471, 1.4214138
        %v2476 = vadd.f32 %v2472, 1.4214138
        %v2477 = vadd.f32 %v2473, 1.4214138
        %v2478 = vmul.f32 %v2474, %v2455
        %v2479 = vmul.f32 %v2475, %v2457
        %v2480 = vmul.f32 %v2476, %v2459
        %v2481 = vmul.f32 %v2477, %v2461
        %v2482 = vadd.f32 %v2478, -0.28449672
        %v2483 = vadd.f32 %v2479, -0.28449672
        %v2484 = vadd.f32 %v2480, -0.28449672
        %v2485 = vadd.f32 %v2481, -0.28449672
        %v2486 = vmul.f32 %v2482, %v2455
        %v2487 = vmul.f32 %v2483, %v2457
        %v2488 = vmul.f32 %v2484, %v2459
        %v2489 = vmul.f32 %v2485, %v2461
        %v2490 = vadd.f32 %v2486, 0.2548296
        %v2491 = vadd.f32 %v2487, 0.2548296
        %v2492 = vadd.f32 %v2488, 0.2548296
        %v2493 = vadd.f32 %v2489, 0.2548296
        %v2494 = vmul.f32 %v2490, %v2455
        %v2495 = vmul.f32 %v2491, %v2457
        %v2496 = vmul.f32 %v2492, %v2459
        %v2497 = vmul.f32 %v2493, %v2461
        %v2498 = vsub.f32 0.0, %v2442
        %v2499 = vsub.f32 0.0, %v2443
        %v2500 = vsub.f32 0.0, %v2444
        %v2501 = vsub.f32 0.0, %v2445
        %v2502 = vmul.f32 %v2498, %v2442
        %v2503 = vmul.f32 %v2499, %v2443
        %v2504 = vmul.f32 %v2500, %v2444
        %v2505 = vmul.f32 %v2501, %v2445
        %v2506 = vmul.f32 %v2502, 1.442695
        %v2507 = vpow.pop %v2506
        %v2508 = vmul.f32 %v2503, 1.442695
        %v2509 = vpow.pop %v2508
        %v2510 = vmul.f32 %v2504, 1.442695
        %v2511 = vpow.pop %v2510
        %v2512 = vmul.f32 %v2505, 1.442695
        %v2513 = vpow.pop %v2512
        %v2514 = vmul.f32 %v2494, %v2507
        %v2515 = vmul.f32 %v2495, %v2509
        %v2516 = vmul.f32 %v2496, %v2511
        %v2517 = vmul.f32 %v2497, %v2513
        %v2518 = vsub.f32 1.0, %v2514
        %v2519 = vsub.f32 1.0, %v2515
        %v2520 = vsub.f32 1.0, %v2516
        %v2521 = vsub.f32 1.0, %v2517
        %vm2522 = vcmp.ge.f32.partialorder %v2438, 0.0
        %vm2523 = vcmp.ge.f32.partialorder %v2439, 0.0
        %vm2524 = vcmp.ge.f32.partialorder %v2440, 0.0
        %vm2525 = vcmp.ge.f32.partialorder %v2441, 0.0
        %v2526 = vsub.f32 0.0, %v2518
        %v2527 = vsub.f32 0.0, %v2519
        %v2528 = vsub.f32 0.0, %v2520
        %v2529 = vsub.f32 0.0, %v2521
        %v2530 = vsel %vm2522, %v2518, %v2526
        %v2531 = vsel %vm2523, %v2519, %v2527
        %v2532 = vsel %vm2524, %v2520, %v2528
        %v2533 = vsel %vm2525, %v2521, %v2529
        %v2534 = vadd.f32 %v2530, 1.0
        %v2535 = vadd.f32 %v2531, 1.0
        %v2536 = vadd.f32 %v2532, 1.0
        %v2537 = vadd.f32 %v2533, 1.0
        %v2538 = vmul.f32 %v2434, %v2534
        %v2539 = vmul.f32 %v2435, %v2535
        %v2540 = vmul.f32 %v2436, %v2536
        %v2541 = vmul.f32 %v2437, %v2537
        %v2542 = vpack.c.bf16 %v2538, %v2538
        %v2543 = vpack.c.bf16 %v2539, %v2539
        %v2544 = vpack.c.bf16 %v2540, %v2540
        %v2545 = vpack.c.bf16 %v2541, %v2541
        %v2546 = vld [vmem:[%s10] sm:$0xf]
        %v2547 = vld [vmem:[%s10 + $0x4] sm:$0xf]
        %v2548 = vld [vmem:[%s10 + $0x8] sm:$0xf]
        %v2549 = vld [vmem:[%s10 + $0xc] sm:$0xf]
        %v2550 = vld [vmem:[%s10 + $0x10] sm:$0xf]
        %v2551 = vld [vmem:[%s10 + $0x14] sm:$0xf]
        %v2552 = vld [vmem:[%s10 + $0x18] sm:$0xf]
        %v2553 = vld [vmem:[%s10 + $0x1c] sm:$0xf]
        %v2554 = vld [vmem:[%s10 + $0x20] sm:$0xf]
        %v2555 = vld [vmem:[%s10 + $0x24] sm:$0xf]
        %v2556 = vld [vmem:[%s10 + $0x28] sm:$0xf]
        %v2557 = vld [vmem:[%s10 + $0x2c] sm:$0xf]
        %v2558 = vld [vmem:[%s10 + $0x30] sm:$0xf]
        %v2559 = vld [vmem:[%s10 + $0x34] sm:$0xf]
        %v2560 = vld [vmem:[%s10 + $0x38] sm:$0xf]
        %v2561 = vld [vmem:[%s10 + $0x3c] sm:$0xf]
        %v2562 = vld [vmem:[%s10 + $0x40] sm:$0xf]
        %v2563 = vld [vmem:[%s10 + $0x44] sm:$0xf]
        %v2564 = vld [vmem:[%s10 + $0x48] sm:$0xf]
        %v2565 = vld [vmem:[%s10 + $0x4c] sm:$0xf]
        %v2566 = vld [vmem:[%s10 + $0x50] sm:$0xf]
        %v2567 = vld [vmem:[%s10 + $0x54] sm:$0xf]
        %v2568 = vld [vmem:[%s10 + $0x58] sm:$0xf]
        %v2569 = vld [vmem:[%s10 + $0x5c] sm:$0xf]
        %v2570 = vld [vmem:[%s10 + $0x60] sm:$0xf]
        %v2571 = vld [vmem:[%s10 + $0x64] sm:$0xf]
        %v2572 = vld [vmem:[%s10 + $0x68] sm:$0xf]
        %v2573 = vld [vmem:[%s10 + $0x6c] sm:$0xf]
        %v2574 = vld [vmem:[%s10 + $0x70] sm:$0xf]
        %v2575 = vld [vmem:[%s10 + $0x74] sm:$0xf]
        %v2576 = vld [vmem:[%s10 + $0x78] sm:$0xf]
        %v2577 = vld [vmem:[%s10 + $0x7c] sm:$0xf]
        %v2578 = vld [vmem:[%s10 + $0x80] sm:$0xf]
        %v2579 = vld [vmem:[%s10 + $0x84] sm:$0xf]
        %v2580 = vld [vmem:[%s10 + $0x88] sm:$0xf]
        %v2581 = vld [vmem:[%s10 + $0x8c] sm:$0xf]
        %v2582 = vld [vmem:[%s10 + $0x90] sm:$0xf]
        %v2583 = vld [vmem:[%s10 + $0x94] sm:$0xf]
        %v2584 = vld [vmem:[%s10 + $0x98] sm:$0xf]
        %v2585 = vld [vmem:[%s10 + $0x9c] sm:$0xf]
        %v2586 = vld [vmem:[%s10 + $0xa0] sm:$0xf]
        %v2587 = vld [vmem:[%s10 + $0xa4] sm:$0xf]
        %v2588 = vld [vmem:[%s10 + $0xa8] sm:$0xf]
        %v2589 = vld [vmem:[%s10 + $0xac] sm:$0xf]
        %v2590 = vld [vmem:[%s10 + $0xb0] sm:$0xf]
        %v2591 = vld [vmem:[%s10 + $0xb4] sm:$0xf]
        %v2592 = vld [vmem:[%s10 + $0xb8] sm:$0xf]
        %v2593 = vld [vmem:[%s10 + $0xbc] sm:$0xf]
        %v2594 = vld [vmem:[%s10 + $0xc0] sm:$0xf]
        %v2595 = vld [vmem:[%s10 + $0xc4] sm:$0xf]
        %v2596 = vld [vmem:[%s10 + $0xc8] sm:$0xf]
        %v2597 = vld [vmem:[%s10 + $0xcc] sm:$0xf]
        %v2598 = vld [vmem:[%s10 + $0xd0] sm:$0xf]
        %v2599 = vld [vmem:[%s10 + $0xd4] sm:$0xf]
        %v2600 = vld [vmem:[%s10 + $0xd8] sm:$0xf]
        %v2601 = vld [vmem:[%s10 + $0xdc] sm:$0xf]
        %v2602 = vld [vmem:[%s10 + $0xe0] sm:$0xf]
        %v2603 = vld [vmem:[%s10 + $0xe4] sm:$0xf]
        %v2604 = vld [vmem:[%s10 + $0xe8] sm:$0xf]
        %v2605 = vld [vmem:[%s10 + $0xec] sm:$0xf]
        %v2606 = vld [vmem:[%s10 + $0xf0] sm:$0xf]
        %v2607 = vld [vmem:[%s10 + $0xf4] sm:$0xf]
        %v2608 = vld [vmem:[%s10 + $0xf8] sm:$0xf]
        %v2609 = vld [vmem:[%s10 + $0xfc] sm:$0xf]
        %v2674 = vunpack.c.l.b16 %v2546
        %v2675 = vunpack.c.l.b16 %v2547
        %v2676 = vunpack.c.l.b16 %v2548
        %v2677 = vunpack.c.l.b16 %v2549
        %v2678 = vunpack.c.l.b16 %v2550
        %v2679 = vunpack.c.l.b16 %v2551
        %v2680 = vunpack.c.l.b16 %v2552
        %v2681 = vunpack.c.l.b16 %v2553
        %v2682 = vunpack.c.l.b16 %v2554
        %v2683 = vunpack.c.l.b16 %v2555
        %v2684 = vunpack.c.l.b16 %v2556
        %v2685 = vunpack.c.l.b16 %v2557
        %v2686 = vunpack.c.l.b16 %v2558
        %v2687 = vunpack.c.l.b16 %v2559
        %v2688 = vunpack.c.l.b16 %v2560
        %v2689 = vunpack.c.l.b16 %v2561
        %v2690 = vunpack.c.l.b16 %v2562
        %v2691 = vunpack.c.l.b16 %v2563
        %v2692 = vunpack.c.l.b16 %v2564
        %v2693 = vunpack.c.l.b16 %v2565
        %v2694 = vunpack.c.l.b16 %v2566
        %v2695 = vunpack.c.l.b16 %v2567
        %v2696 = vunpack.c.l.b16 %v2568
        %v2697 = vunpack.c.l.b16 %v2569
        %v2698 = vunpack.c.l.b16 %v2570
        %v2699 = vunpack.c.l.b16 %v2571
        %v2700 = vunpack.c.l.b16 %v2572
        %v2701 = vunpack.c.l.b16 %v2573
        %v2702 = vunpack.c.l.b16 %v2574
        %v2703 = vunpack.c.l.b16 %v2575
        %v2704 = vunpack.c.l.b16 %v2576
        %v2705 = vunpack.c.l.b16 %v2577
        %v2706 = vunpack.c.l.b16 %v2578
        %v2707 = vunpack.c.l.b16 %v2579
        %v2708 = vunpack.c.l.b16 %v2580
        %v2709 = vunpack.c.l.b16 %v2581
        %v2710 = vunpack.c.l.b16 %v2582
        %v2711 = vunpack.c.l.b16 %v2583
        %v2712 = vunpack.c.l.b16 %v2584
        %v2713 = vunpack.c.l.b16 %v2585
        %v2714 = vunpack.c.l.b16 %v2586
        %v2715 = vunpack.c.l.b16 %v2587
        %v2716 = vunpack.c.l.b16 %v2588
        %v2717 = vunpack.c.l.b16 %v2589
        %v2718 = vunpack.c.l.b16 %v2590
        %v2719 = vunpack.c.l.b16 %v2591
        %v2720 = vunpack.c.l.b16 %v2592
        %v2721 = vunpack.c.l.b16 %v2593
        %v2722 = vunpack.c.l.b16 %v2594
        %v2723 = vunpack.c.l.b16 %v2595
        %v2724 = vunpack.c.l.b16 %v2596
        %v2725 = vunpack.c.l.b16 %v2597
        %v2726 = vunpack.c.l.b16 %v2598
        %v2727 = vunpack.c.l.b16 %v2599
        %v2728 = vunpack.c.l.b16 %v2600
        %v2729 = vunpack.c.l.b16 %v2601
        %v2730 = vunpack.c.l.b16 %v2602
        %v2731 = vunpack.c.l.b16 %v2603
        %v2732 = vunpack.c.l.b16 %v2604
        %v2733 = vunpack.c.l.b16 %v2605
        %v2734 = vunpack.c.l.b16 %v2606
        %v2735 = vunpack.c.l.b16 %v2607
        %v2736 = vunpack.c.l.b16 %v2608
        %v2737 = vunpack.c.l.b16 %v2609
        %v2738 = vpack.c.b16 %v2675, %v2674
        %v2739 = vpack.c.b16 %v2677, %v2676
        %v2740 = vpack.c.b16 %v2679, %v2678
        %v2741 = vpack.c.b16 %v2681, %v2680
        %v2742 = vpack.c.b16 %v2683, %v2682
        %v2743 = vpack.c.b16 %v2685, %v2684
        %v2744 = vpack.c.b16 %v2687, %v2686
        %v2745 = vpack.c.b16 %v2689, %v2688
        %v2746 = vpack.c.b16 %v2691, %v2690
        %v2747 = vpack.c.b16 %v2693, %v2692
        %v2748 = vpack.c.b16 %v2695, %v2694
        %v2749 = vpack.c.b16 %v2697, %v2696
        %v2750 = vpack.c.b16 %v2699, %v2698
        %v2751 = vpack.c.b16 %v2701, %v2700
        %v2752 = vpack.c.b16 %v2703, %v2702
        %v2753 = vpack.c.b16 %v2705, %v2704
        %v2754 = vpack.c.b16 %v2707, %v2706
        %v2755 = vpack.c.b16 %v2709, %v2708
        %v2756 = vpack.c.b16 %v2711, %v2710
        %v2757 = vpack.c.b16 %v2713, %v2712
        %v2758 = vpack.c.b16 %v2715, %v2714
        %v2759 = vpack.c.b16 %v2717, %v2716
        %v2760 = vpack.c.b16 %v2719, %v2718
        %v2761 = vpack.c.b16 %v2721, %v2720
        %v2762 = vpack.c.b16 %v2723, %v2722
        %v2763 = vpack.c.b16 %v2725, %v2724
        %v2764 = vpack.c.b16 %v2727, %v2726
        %v2765 = vpack.c.b16 %v2729, %v2728
        %v2766 = vpack.c.b16 %v2731, %v2730
        %v2767 = vpack.c.b16 %v2733, %v2732
        %v2768 = vpack.c.b16 %v2735, %v2734
        %v2769 = vpack.c.b16 %v2737, %v2736
        %2802 = vmatprep.subr.bf16.mxu0 0
        %2803 = vmatpush1.bf16.msra.mxu0 %v2738
        %2804 = vmatprep.subr.bf16.mxu0 0
        %2805 = vmatpush1.bf16.msra.mxu0 %v2739
        %2806 = vmatprep.subr.bf16.mxu0 0
        %2807 = vmatpush1.bf16.msra.mxu0 %v2740
        %2808 = vmatprep.subr.bf16.mxu0 0
        %2809 = vmatpush1.bf16.msra.mxu0 %v2741
        %2810 = vmatprep.subr.bf16.mxu0 0
        %2811 = vmatpush1.bf16.msra.mxu0 %v2742
        %2812 = vmatprep.subr.bf16.mxu0 0
        %2813 = vmatpush1.bf16.msra.mxu0 %v2743
        %2814 = vmatprep.subr.bf16.mxu0 0
        %2815 = vmatpush1.bf16.msra.mxu0 %v2744
        %2816 = vmatprep.subr.bf16.mxu0 0
        %2817 = vmatpush1.bf16.msra.mxu0 %v2745
        %2818 = vmatprep.subr.bf16.mxu0 0
        %2819 = vmatpush1.bf16.msra.mxu0 %v2746
        %2820 = vmatprep.subr.bf16.mxu0 0
        %2821 = vmatpush1.bf16.msra.mxu0 %v2747
        %2822 = vmatprep.subr.bf16.mxu0 0
        %2823 = vmatpush1.bf16.msra.mxu0 %v2748
        %2824 = vmatprep.subr.bf16.mxu0 0
        %2825 = vmatpush1.bf16.msra.mxu0 %v2749
        %2826 = vmatprep.subr.bf16.mxu0 0
        %2827 = vmatpush1.bf16.msra.mxu0 %v2750
        %2828 = vmatprep.subr.bf16.mxu0 0
        %2829 = vmatpush1.bf16.msra.mxu0 %v2751
        %2830 = vmatprep.subr.bf16.mxu0 0
        %2831 = vmatpush1.bf16.msra.mxu0 %v2752
        %2832 = vmatprep.subr.bf16.mxu0 0
        %2833 = vmatpush1.bf16.msra.mxu0 %v2753
        %2834 = vmatprep.mubr.bf16.mxu0 %v2543
        %2835 = vmatmul.mubr.bf16.gmra.mrb[0].mxu0 %v2542
        %v2836 = vpop.f32.mrb[0].mxu0
        %v2837 = vadd.f32 0.0, %v2836
        %v2838 = vpop.f32.mrb[0].mxu0
        %v2839 = vpop.f32.mrb[0].mxu0
        %v2840 = vpop.f32.mrb[0].mxu0
        %2841 = vdwg.mxu0
        %2842 = vmatprep.subr.bf16.mxu0 0
        %2843 = vmatpush1.bf16.msra.mxu0 %v2754
        %2844 = vmatprep.subr.bf16.mxu0 0
        %2845 = vmatpush1.bf16.msra.mxu0 %v2755
        %2846 = vmatprep.subr.bf16.mxu0 0
        %2847 = vmatpush1.bf16.msra.mxu0 %v2756
        %2848 = vmatprep.subr.bf16.mxu0 0
        %2849 = vmatpush1.bf16.msra.mxu0 %v2757
        %2850 = vmatprep.subr.bf16.mxu0 0
        %2851 = vmatpush1.bf16.msra.mxu0 %v2758
        %2852 = vmatprep.subr.bf16.mxu0 0
        %2853 = vmatpush1.bf16.msra.mxu0 %v2759
        %2854 = vmatprep.subr.bf16.mxu0 0
        %2855 = vmatpush1.bf16.msra.mxu0 %v2760
        %2856 = vmatprep.subr.bf16.mxu0 0
        %2857 = vmatpush1.bf16.msra.mxu0 %v2761
        %2858 = vmatprep.subr.bf16.mxu0 0
        %2859 = vmatpush1.bf16.msra.mxu0 %v2762
        %2860 = vmatprep.subr.bf16.mxu0 0
        %2861 = vmatpush1.bf16.msra.mxu0 %v2763
        %2862 = vmatprep.subr.bf16.mxu0 0
        %2863 = vmatpush1.bf16.msra.mxu0 %v2764
        %2864 = vmatprep.subr.bf16.mxu0 0
        %2865 = vmatpush1.bf16.msra.mxu0 %v2765
        %2866 = vmatprep.subr.bf16.mxu0 0
        %2867 = vmatpush1.bf16.msra.mxu0 %v2766
        %2868 = vmatprep.subr.bf16.mxu0 0
        %2869 = vmatpush1.bf16.msra.mxu0 %v2767
        %2870 = vmatprep.subr.bf16.mxu0 0
        %2871 = vmatpush1.bf16.msra.mxu0 %v2768
        %2872 = vmatprep.subr.bf16.mxu0 0
        %2873 = vmatpush1.bf16.msra.mxu0 %v2769
        %2874 = vmatprep.mubr.bf16.mxu0 %v2545
        %2875 = vmatmul.mubr.bf16.gmra.mrb[0].mxu0 %v2544
        %v2876 = vpop.f32.mrb[0].mxu0
        %v2877 = vadd.f32 %v2837, %v2876
        %v2878 = vpop.f32.mrb[0].mxu0
        %v2879 = vpop.f32.mrb[0].mxu0
        %v2880 = vpop.f32.mrb[0].mxu0
        %2881 = vdwg.mxu0
        %v2882 = vadd.f32 %v2136, %v2877
        %v2883 = vld [vmem:[%s11] sm:$0x1]
        %v2885 = vlaneseq
        %v2886 = vshrl.u32 %v2885, 7
        %v2887 = vsub.s32 0, %v2886
        %v2888 = vrot.slane %v2883, %v2887
        %v2890 = vadd.f32 %v2882, %v2888
        %v2891 = vpack.c.bf16 %v2890, %v2890
        %v2892 = vld [vmem:[%s12] sm:$0xf]
        %v2893 = vld [vmem:[%s12 + $0xc] sm:$0xf]
        %v2894 = vld [vmem:[%s12 + $0x18] sm:$0xf]
        %v2895 = vld [vmem:[%s12 + $0x24] sm:$0xf]
        %v2896 = vld [vmem:[%s12 + $0x30] sm:$0xf]
        %v2897 = vld [vmem:[%s12 + $0x3c] sm:$0xf]
        %v2898 = vld [vmem:[%s12 + $0x48] sm:$0xf]
        %v2899 = vld [vmem:[%s12 + $0x54] sm:$0xf]
        %v2900 = vld [vmem:[%s12 + $0x60] sm:$0xf]
        %v2901 = vld [vmem:[%s12 + $0x6c] sm:$0xf]
        %v2902 = vld [vmem:[%s12 + $0x78] sm:$0xf]
        %v2903 = vld [vmem:[%s12 + $0x84] sm:$0xf]
        %v2904 = vld [vmem:[%s12 + $0x90] sm:$0xf]
        %v2905 = vld [vmem:[%s12 + $0x9c] sm:$0xf]
        %v2906 = vld [vmem:[%s12 + $0xa8] sm:$0xf]
        %v2907 = vld [vmem:[%s12 + $0xb4] sm:$0xf]
        %v2908 = vld [vmem:[%s13] sm:$0x1]
        %v2910 = vlaneseq
        %v2911 = vshrl.u32 %v2910, 7
        %v2912 = vsub.s32 0, %v2911
        %v2913 = vrot.slane %v2908, %v2912
        %v2931 = vunpack.c.l.b16 %v2892
        %v2932 = vunpack.c.l.b16 %v2893
        %v2933 = vunpack.c.l.b16 %v2894
        %v2934 = vunpack.c.l.b16 %v2895
        %v2935 = vunpack.c.l.b16 %v2896
        %v2936 = vunpack.c.l.b16 %v2897
        %v2937 = vunpack.c.l.b16 %v2898
        %v2938 = vunpack.c.l.b16 %v2899
        %v2939 = vunpack.c.l.b16 %v2900
        %v2940 = vunpack.c.l.b16 %v2901
        %v2941 = vunpack.c.l.b16 %v2902
        %v2942 = vunpack.c.l.b16 %v2903
        %v2943 = vunpack.c.l.b16 %v2904
        %v2944 = vunpack.c.l.b16 %v2905
        %v2945 = vunpack.c.l.b16 %v2906
        %v2946 = vunpack.c.l.b16 %v2907
        %v2947 = vpack.c.b16 %v2932, %v2931
        %v2948 = vpack.c.b16 %v2934, %v2933
        %v2949 = vpack.c.b16 %v2936, %v2935
        %v2950 = vpack.c.b16 %v2938, %v2937
        %v2951 = vpack.c.b16 %v2940, %v2939
        %v2952 = vpack.c.b16 %v2942, %v2941
        %v2953 = vpack.c.b16 %v2944, %v2943
        %v2954 = vpack.c.b16 %v2946, %v2945
        %2963 = vmatprep.subr.bf16.mxu0 0
        %2964 = vmatpush1.bf16.msra.mxu0 %v2947
        %2965 = vmatprep.subr.bf16.mxu0 0
        %2966 = vmatpush1.bf16.msra.mxu0 %v2948
        %2967 = vmatprep.subr.bf16.mxu0 0
        %2968 = vmatpush1.bf16.msra.mxu0 %v2949
        %2969 = vmatprep.subr.bf16.mxu0 0
        %2970 = vmatpush1.bf16.msra.mxu0 %v2950
        %2971 = vmatprep.subr.bf16.mxu0 0
        %2972 = vmatpush1.bf16.msra.mxu0 %v2951
        %2973 = vmatprep.subr.bf16.mxu0 0
        %2974 = vmatpush1.bf16.msra.mxu0 %v2952
        %2975 = vmatprep.subr.bf16.mxu0 0
        %2976 = vmatpush1.bf16.msra.mxu0 %v2953
        %2977 = vmatprep.subr.bf16.mxu0 0
        %2978 = vmatpush1.bf16.msra.mxu0 %v2954
        %2979 = vmatprep.subr.bf16.mxu0 0
        %2980 = vmatpush1.bf16.msra.mxu0 0
        %2981 = vmatprep.subr.bf16.mxu0 0
        %2982 = vmatpush1.bf16.msra.mxu0 0
        %2983 = vmatprep.subr.bf16.mxu0 0
        %2984 = vmatpush1.bf16.msra.mxu0 0
        %2985 = vmatprep.subr.bf16.mxu0 0
        %2986 = vmatpush1.bf16.msra.mxu0 0
        %2987 = vmatprep.subr.bf16.mxu0 0
        %2988 = vmatpush1.bf16.msra.mxu0 0
        %2989 = vmatprep.subr.bf16.mxu0 0
        %2990 = vmatpush1.bf16.msra.mxu0 0
        %2991 = vmatprep.subr.bf16.mxu0 0
        %2992 = vmatpush1.bf16.msra.mxu0 0
        %2993 = vmatprep.subr.bf16.mxu0 0
        %2994 = vmatpush1.bf16.msra.mxu0 0
        %2995 = vmatprep.mubr.bf16.mxu0 0
        %2996 = vmatmul.mubr.bf16.gmra.mrb[0].mxu0 %v738
        %v2997 = vpop.f32.mrb[0].mxu0
        %v2998 = vadd.f32 %v2913, %v2997
        %v2999 = vpop.f32.mrb[0].mxu0
        %v3000 = vpop.f32.mrb[0].mxu0
        %v3001 = vpop.f32.mrb[0].mxu0
        %3002 = vdwg.mxu0
        %v3003 = vld [vmem:[%s12 + $0x4] sm:$0xf]
        %v3004 = vld [vmem:[%s12 + $0x10] sm:$0xf]
        %v3005 = vld [vmem:[%s12 + $0x1c] sm:$0xf]
        %v3006 = vld [vmem:[%s12 + $0x28] sm:$0xf]
        %v3007 = vld [vmem:[%s12 + $0x34] sm:$0xf]
        %v3008 = vld [vmem:[%s12 + $0x40] sm:$0xf]
        %v3009 = vld [vmem:[%s12 + $0x4c] sm:$0xf]
        %v3010 = vld [vmem:[%s12 + $0x58] sm:$0xf]
        %v3011 = vld [vmem:[%s12 + $0x64] sm:$0xf]
        %v3012 = vld [vmem:[%s12 + $0x70] sm:$0xf]
        %v3013 = vld [vmem:[%s12 + $0x7c] sm:$0xf]
        %v3014 = vld [vmem:[%s12 + $0x88] sm:$0xf]
        %v3015 = vld [vmem:[%s12 + $0x94] sm:$0xf]
        %v3016 = vld [vmem:[%s12 + $0xa0] sm:$0xf]
        %v3017 = vld [vmem:[%s12 + $0xac] sm:$0xf]
        %v3018 = vld [vmem:[%s12 + $0xb8] sm:$0xf]
        %v3019 = vld [vmem:[%s13 + $0x1] sm:$0x1]
        %v3021 = vlaneseq
        %v3022 = vshrl.u32 %v3021, 7
        %v3023 = vsub.s32 0, %v3022
        %v3024 = vrot.slane %v3019, %v3023
        %v3042 = vunpack.c.l.b16 %v3003
        %v3043 = vunpack.c.l.b16 %v3004
        %v3044 = vunpack.c.l.b16 %v3005
        %v3045 = vunpack.c.l.b16 %v3006
        %v3046 = vunpack.c.l.b16 %v3007
        %v3047 = vunpack.c.l.b16 %v3008
        %v3048 = vunpack.c.l.b16 %v3009
        %v3049 = vunpack.c.l.b16 %v3010
        %v3050 = vunpack.c.l.b16 %v3011
        %v3051 = vunpack.c.l.b16 %v3012
        %v3052 = vunpack.c.l.b16 %v3013
        %v3053 = vunpack.c.l.b16 %v3014
        %v3054 = vunpack.c.l.b16 %v3015
        %v3055 = vunpack.c.l.b16 %v3016
        %v3056 = vunpack.c.l.b16 %v3017
        %v3057 = vunpack.c.l.b16 %v3018
        %v3058 = vpack.c.b16 %v3043, %v3042
        %v3059 = vpack.c.b16 %v3045, %v3044
        %v3060 = vpack.c.b16 %v3047, %v3046
        %v3061 = vpack.c.b16 %v3049, %v3048
        %v3062 = vpack.c.b16 %v3051, %v3050
        %v3063 = vpack.c.b16 %v3053, %v3052
        %v3064 = vpack.c.b16 %v3055, %v3054
        %v3065 = vpack.c.b16 %v3057, %v3056
        %3074 = vmatprep.subr.bf16.mxu0 0
        %3075 = vmatpush1.bf16.msra.mxu0 %v3058
        %3076 = vmatprep.subr.bf16.mxu0 0
        %3077 = vmatpush1.bf16.msra.mxu0 %v3059
        %3078 = vmatprep.subr.bf16.mxu0 0
        %3079 = vmatpush1.bf16.msra.mxu0 %v3060
        %3080 = vmatprep.subr.bf16.mxu0 0
        %3081 = vmatpush1.bf16.msra.mxu0 %v3061
        %3082 = vmatprep.subr.bf16.mxu0 0
        %3083 = vmatpush1.bf16.msra.mxu0 %v3062
        %3084 = vmatprep.subr.bf16.mxu0 0
        %3085 = vmatpush1.bf16.msra.mxu0 %v3063
        %3086 = vmatprep.subr.bf16.mxu0 0
        %3087 = vmatpush1.bf16.msra.mxu0 %v3064
        %3088 = vmatprep.subr.bf16.mxu0 0
        %3089 = vmatpush1.bf16.msra.mxu0 %v3065
        %3090 = vmatprep.subr.bf16.mxu0 0
        %3091 = vmatpush1.bf16.msra.mxu0 0
        %3092 = vmatprep.subr.bf16.mxu0 0
        %3093 = vmatpush1.bf16.msra.mxu0 0
        %3094 = vmatprep.subr.bf16.mxu0 0
        %3095 = vmatpush1.bf16.msra.mxu0 0
        %3096 = vmatprep.subr.bf16.mxu0 0
        %3097 = vmatpush1.bf16.msra.mxu0 0
        %3098 = vmatprep.subr.bf16.mxu0 0
        %3099 = vmatpush1.bf16.msra.mxu0 0
        %3100 = vmatprep.subr.bf16.mxu0 0
        %3101 = vmatpush1.bf16.msra.mxu0 0
        %3102 = vmatprep.subr.bf16.mxu0 0
        %3103 = vmatpush1.bf16.msra.mxu0 0
        %3104 = vmatprep.subr.bf16.mxu0 0
        %3105 = vmatpush1.bf16.msra.mxu0 0
        %3106 = vmatprep.mubr.bf16.mxu0 0
        %3107 = vmatmul.mubr.bf16.gmra.mrb[0].mxu0 %v2891
        %v3108 = vpop.f32.mrb[0].mxu0
        %v3109 = vadd.f32 %v3024, %v3108
        %v3110 = vpop.f32.mrb[0].mxu0
        %v3111 = vpop.f32.mrb[0].mxu0
        %v3112 = vpop.f32.mrb[0].mxu0
        %3113 = vdwg.mxu0
        %v3114 = vld [vmem:[%s12 + $0x8] sm:$0xf]
        %v3115 = vld [vmem:[%s12 + $0x14] sm:$0xf]
        %v3116 = vld [vmem:[%s12 + $0x20] sm:$0xf]
        %v3117 = vld [vmem:[%s12 + $0x2c] sm:$0xf]
        %v3118 = vld [vmem:[%s12 + $0x38] sm:$0xf]
        %v3119 = vld [vmem:[%s12 + $0x44] sm:$0xf]
        %v3120 = vld [vmem:[%s12 + $0x50] sm:$0xf]
        %v3121 = vld [vmem:[%s12 + $0x5c] sm:$0xf]
        %v3122 = vld [vmem:[%s12 + $0x68] sm:$0xf]
        %v3123 = vld [vmem:[%s12 + $0x74] sm:$0xf]
        %v3124 = vld [vmem:[%s12 + $0x80] sm:$0xf]
        %v3125 = vld [vmem:[%s12 + $0x8c] sm:$0xf]
        %v3126 = vld [vmem:[%s12 + $0x98] sm:$0xf]
        %v3127 = vld [vmem:[%s12 + $0xa4] sm:$0xf]
        %v3128 = vld [vmem:[%s12 + $0xb0] sm:$0xf]
        %v3129 = vld [vmem:[%s12 + $0xbc] sm:$0xf]
        %v3130 = vld [vmem:[%s13 + $0x2] sm:$0x1]
        %v3132 = vlaneseq
        %v3133 = vshrl.u32 %v3132, 7
        %v3134 = vsub.s32 0, %v3133
        %v3135 = vrot.slane %v3130, %v3134
        %v3153 = vunpack.c.l.b16 %v3114
        %v3154 = vunpack.c.l.b16 %v3115
        %v3155 = vunpack.c.l.b16 %v3116
        %v3156 = vunpack.c.l.b16 %v3117
        %v3157 = vunpack.c.l.b16 %v3118
        %v3158 = vunpack.c.l.b16 %v3119
        %v3159 = vunpack.c.l.b16 %v3120
        %v3160 = vunpack.c.l.b16 %v3121
        %v3161 = vunpack.c.l.b16 %v3122
        %v3162 = vunpack.c.l.b16 %v3123
        %v3163 = vunpack.c.l.b16 %v3124
        %v3164 = vunpack.c.l.b16 %v3125
        %v3165 = vunpack.c.l.b16 %v3126
        %v3166 = vunpack.c.l.b16 %v3127
        %v3167 = vunpack.c.l.b16 %v3128
        %v3168 = vunpack.c.l.b16 %v3129
        %v3169 = vpack.c.b16 %v3154, %v3153
        %v3170 = vpack.c.b16 %v3156, %v3155
        %v3171 = vpack.c.b16 %v3158, %v3157
        %v3172 = vpack.c.b16 %v3160, %v3159
        %v3173 = vpack.c.b16 %v3162, %v3161
        %v3174 = vpack.c.b16 %v3164, %v3163
        %v3175 = vpack.c.b16 %v3166, %v3165
        %v3176 = vpack.c.b16 %v3168, %v3167
        %3185 = vmatprep.subr.bf16.mxu0 0
        %3186 = vmatpush1.bf16.msra.mxu0 %v3169
        %3187 = vmatprep.subr.bf16.mxu0 0
        %3188 = vmatpush1.bf16.msra.mxu0 %v3170
        %3189 = vmatprep.subr.bf16.mxu0 0
        %3190 = vmatpush1.bf16.msra.mxu0 %v3171
        %3191 = vmatprep.subr.bf16.mxu0 0
        %3192 = vmatpush1.bf16.msra.mxu0 %v3172
        %3193 = vmatprep.subr.bf16.mxu0 0
        %3194 = vmatpush1.bf16.msra.mxu0 %v3173
        %3195 = vmatprep.subr.bf16.mxu0 0
        %3196 = vmatpush1.bf16.msra.mxu0 %v3174
        %3197 = vmatprep.subr.bf16.mxu0 0
        %3198 = vmatpush1.bf16.msra.mxu0 %v3175
        %3199 = vmatprep.subr.bf16.mxu0 0
        %3200 = vmatpush1.bf16.msra.mxu0 %v3176
        %3201 = vmatprep.subr.bf16.mxu0 0
        %3202 = vmatpush1.bf16.msra.mxu0 0
        %3203 = vmatprep.subr.bf16.mxu0 0
        %3204 = vmatpush1.bf16.msra.mxu0 0
        %3205 = vmatprep.subr.bf16.mxu0 0
        %3206 = vmatpush1.bf16.msra.mxu0 0
        %3207 = vmatprep.subr.bf16.mxu0 0
        %3208 = vmatpush1.bf16.msra.mxu0 0
        %3209 = vmatprep.subr.bf16.mxu0 0
        %3210 = vmatpush1.bf16.msra.mxu0 0
        %3211 = vmatprep.subr.bf16.mxu0 0
        %3212 = vmatpush1.bf16.msra.mxu0 0
        %3213 = vmatprep.subr.bf16.mxu0 0
        %3214 = vmatpush1.bf16.msra.mxu0 0
        %3215 = vmatprep.subr.bf16.mxu0 0
        %3216 = vmatpush1.bf16.msra.mxu0 0
        %3217 = vmatprep.mubr.bf16.mxu0 0
        %3218 = vmatmul.mubr.bf16.gmra.mrb[0].mxu0 %v2891
        %v3219 = vpop.f32.mrb[0].mxu0
        %v3220 = vadd.f32 %v3135, %v3219
        %v3221 = vpop.f32.mrb[0].mxu0
        %v3222 = vpop.f32.mrb[0].mxu0
        %v3223 = vpop.f32.mrb[0].mxu0
        %3224 = vdwg.mxu0
        %v3225 = vpack.c.bf16 %v2998, %v2998
        %v3226 = vpack.c.bf16 %v3220, %v3220
        %3227 = vxpose.xlu0.b32.start [1/16] %v3109, 128
        %3228 = vxpose.xlu0.b32.cont [2/16] 0.0, 128
        %3229 = vxpose.xlu0.b32.cont [3/16] 0.0, 128
        %3230 = vxpose.xlu0.b32.cont [4/16] 0.0, 128
        %3231 = vxpose.xlu0.b32.cont [5/16] 0.0, 128
        %3232 = vxpose.xlu0.b32.cont [6/16] 0.0, 128
        %3233 = vxpose.xlu0.b32.cont [7/16] 0.0, 128
        %3234 = vxpose.xlu0.b32.cont [8/16] 0.0, 128
        %3235 = vxpose.xlu0.b32.cont [9/16] 0.0, 128
        %3236 = vxpose.xlu0.b32.cont [10/16] 0.0, 128
        %3237 = vxpose.xlu0.b32.cont [11/16] 0.0, 128
        %3238 = vxpose.xlu0.b32.cont [12/16] 0.0, 128
        %3239 = vxpose.xlu0.b32.cont [13/16] 0.0, 128
        %3240 = vxpose.xlu0.b32.cont [14/16] 0.0, 128
        %3241 = vxpose.xlu0.b32.cont [15/16] 0.0, 128
        %3242 = vxpose.xlu0.b32.end [16/16] 0.0, 128
        %v3243 = vpop.trf.xlu0
        %v3244 = vpop.trf.xlu0
        %v3245 = vpop.trf.xlu0
        %v3246 = vpop.trf.xlu0
        %v3247 = vpop.trf.xlu0
        %v3248 = vpop.trf.xlu0
        %v3249 = vpop.trf.xlu0
        %v3250 = vpop.trf.xlu0
        %v3251 = vpop.trf.xlu0
        %v3252 = vpop.trf.xlu0
        %v3253 = vpop.trf.xlu0
        %v3254 = vpop.trf.xlu0
        %v3255 = vpop.trf.xlu0
        %v3256 = vpop.trf.xlu0
        %v3257 = vpop.trf.xlu0
        %v3258 = vpop.trf.xlu0
        %v3259 = vpack.c.bf16 %v3244, %v3243
        %v3260 = vpack.c.bf16 %v3246, %v3245
        %v3261 = vpack.c.bf16 %v3248, %v3247
        %v3262 = vpack.c.bf16 %v3250, %v3249
        %v3263 = vpack.c.bf16 %v3252, %v3251
        %v3264 = vpack.c.bf16 %v3254, %v3253
        %v3265 = vpack.c.bf16 %v3256, %v3255
        %v3266 = vpack.c.bf16 %v3258, %v3257
        %v3268 = vsel %vm1114, %v3225, 0
        %3270 = vmatprep.subr.bf16.mxu0 0
        %3271 = vmatpush1.bf16.msra.mxu0 %v3259
        %3272 = vmatprep.subr.bf16.mxu0 0
        %3273 = vmatpush1.bf16.msra.mxu0 0
        %3274 = vmatprep.subr.bf16.mxu0 0
        %3275 = vmatpush1.bf16.msra.mxu0 0
        %3276 = vmatprep.subr.bf16.mxu0 0
        %3277 = vmatpush1.bf16.msra.mxu0 0
        %3278 = vmatprep.subr.bf16.mxu0 0
        %3279 = vmatpush1.bf16.msra.mxu0 0
        %3280 = vmatprep.subr.bf16.mxu0 0
        %3281 = vmatpush1.bf16.msra.mxu0 0
        %3282 = vmatprep.subr.bf16.mxu0 0
        %3283 = vmatpush1.bf16.msra.mxu0 0
        %3284 = vmatprep.subr.bf16.mxu0 0
        %3285 = vmatpush1.bf16.msra.mxu0 0
        %3286 = vmatprep.subr.bf16.mxu0 0
        %3287 = vmatpush1.bf16.msra.mxu0 0
        %3288 = vmatprep.subr.bf16.mxu0 0
        %3289 = vmatpush1.bf16.msra.mxu0 0
        %3290 = vmatprep.subr.bf16.mxu0 0
        %3291 = vmatpush1.bf16.msra.mxu0 0
        %3292 = vmatprep.subr.bf16.mxu0 0
        %3293 = vmatpush1.bf16.msra.mxu0 0
        %3294 = vmatprep.subr.bf16.mxu0 0
        %3295 = vmatpush1.bf16.msra.mxu0 0
        %3296 = vmatprep.subr.bf16.mxu0 0
        %3297 = vmatpush1.bf16.msra.mxu0 0
        %3298 = vmatprep.subr.bf16.mxu0 0
        %3299 = vmatpush1.bf16.msra.mxu0 0
        %3300 = vmatprep.subr.bf16.mxu0 0
        %3301 = vmatpush1.bf16.msra.mxu0 0
        %3302 = vmatprep.mubr.bf16.mxu0 0
        %3303 = vmatmul.mubr.bf16.gmra.mrb[0].mxu0 %v3268
        %v3304 = vpop.f32.mrb[0].mxu0
        %v3305 = vadd.f32 0.0, %v3304
        %v3306 = vpop.f32.mrb[0].mxu0
        %v3307 = vpop.f32.mrb[0].mxu0
        %v3308 = vpop.f32.mrb[0].mxu0
        %3309 = vdwg.mxu0
        %v3310 = vsel %vm1158, %v3305, -inf
        %3311 = vmax.xlane.f32.xlu0 %v3310
        %v3312 = vpop.xlane.xlu0 %3311
        %v3313 = vsub.f32 %v3305, %v3312
        %v3314 = vmul.f32 %v3313, 1.442695
        %v3315 = vpow.pop %v3314
        %v3316 = vsel %vm1158, %v3315, 0.0
        %3317 = vadd.xlane.f32.xlu0 %v3316
        %v3318 = vpop.xlane.xlu0 %3317
        %v3319 = vrcp.pop %v3318
        %v3320 = vmul.f32 %v3315, %v3319
        %v3321 = vpack.c.bf16 %v3320, %v3320
        %v3323 = vsel %vm1158, %v3321, 0
        %v3326 = vsel %vm1174, %v3226, 0
        %3328 = vmatprep.subr.bf16.mxu0 0
        %3329 = vmatpush1.bf16.msra.mxu0 %v3326
        %3330 = vmatprep.subr.bf16.mxu0 0
        %3331 = vmatpush1.bf16.msra.mxu0 0
        %3332 = vmatprep.subr.bf16.mxu0 0
        %3333 = vmatpush1.bf16.msra.mxu0 0
        %3334 = vmatprep.subr.bf16.mxu0 0
        %3335 = vmatpush1.bf16.msra.mxu0 0
        %3336 = vmatprep.subr.bf16.mxu0 0
        %3337 = vmatpush1.bf16.msra.mxu0 0
        %3338 = vmatprep.subr.bf16.mxu0 0
        %3339 = vmatpush1.bf16.msra.mxu0 0
        %3340 = vmatprep.subr.bf16.mxu0 0
        %3341 = vmatpush1.bf16.msra.mxu0 0
        %3342 = vmatprep.subr.bf16.mxu0 0
        %3343 = vmatpush1.bf16.msra.mxu0 0
        %3344 = vmatprep.subr.bf16.mxu0 0
        %3345 = vmatpush1.bf16.msra.mxu0 0
        %3346 = vmatprep.subr.bf16.mxu0 0
        %3347 = vmatpush1.bf16.msra.mxu0 0
        %3348 = vmatprep.subr.bf16.mxu0 0
        %3349 = vmatpush1.bf16.msra.mxu0 0
        %3350 = vmatprep.subr.bf16.mxu0 0
        %3351 = vmatpush1.bf16.msra.mxu0 0
        %3352 = vmatprep.subr.bf16.mxu0 0
        %3353 = vmatpush1.bf16.msra.mxu0 0
        %3354 = vmatprep.subr.bf16.mxu0 0
        %3355 = vmatpush1.bf16.msra.mxu0 0
        %3356 = vmatprep.subr.bf16.mxu0 0
        %3357 = vmatpush1.bf16.msra.mxu0 0
        %3358 = vmatprep.subr.bf16.mxu0 0
        %3359 = vmatpush1.bf16.msra.mxu0 0
        %3360 = vmatprep.mubr.bf16.mxu0 0
        %3361 = vmatmul.mubr.bf16.gmra.mrb[0].mxu0 %v3323
        %v3362 = vpop.f32.mrb[0].mxu0
        %v3363 = vadd.f32 0.0, %v3362
        %v3364 = vpop.f32.mrb[0].mxu0
        %v3365 = vpop.f32.mrb[0].mxu0
        %v3366 = vpop.f32.mrb[0].mxu0
        %3367 = vdwg.mxu0
        %3369 = vrot.lane.b32.xlu0 %v3225, 112
        %v3370 = vpop.permute.xlu0 %3369
        %v3372 = vsel %vm1114, %v3370, 0
        %3374 = vmatprep.subr.bf16.mxu0 0
        %3375 = vmatpush1.bf16.msra.mxu0 %v3260
        %3376 = vmatprep.subr.bf16.mxu0 0
        %3377 = vmatpush1.bf16.msra.mxu0 0
        %3378 = vmatprep.subr.bf16.mxu0 0
        %3379 = vmatpush1.bf16.msra.mxu0 0
        %3380 = vmatprep.subr.bf16.mxu0 0
        %3381 = vmatpush1.bf16.msra.mxu0 0
        %3382 = vmatprep.subr.bf16.mxu0 0
        %3383 = vmatpush1.bf16.msra.mxu0 0
        %3384 = vmatprep.subr.bf16.mxu0 0
        %3385 = vmatpush1.bf16.msra.mxu0 0
        %3386 = vmatprep.subr.bf16.mxu0 0
        %3387 = vmatpush1.bf16.msra.mxu0 0
        %3388 = vmatprep.subr.bf16.mxu0 0
        %3389 = vmatpush1.bf16.msra.mxu0 0
        %3390 = vmatprep.subr.bf16.mxu0 0
        %3391 = vmatpush1.bf16.msra.mxu0 0
        %3392 = vmatprep.subr.bf16.mxu0 0
        %3393 = vmatpush1.bf16.msra.mxu0 0
        %3394 = vmatprep.subr.bf16.mxu0 0
        %3395 = vmatpush1.bf16.msra.mxu0 0
        %3396 = vmatprep.subr.bf16.mxu0 0
        %3397 = vmatpush1.bf16.msra.mxu0 0
        %3398 = vmatprep.subr.bf16.mxu0 0
        %3399 = vmatpush1.bf16.msra.mxu0 0
        %3400 = vmatprep.subr.bf16.mxu0 0
        %3401 = vmatpush1.bf16.msra.mxu0 0
        %3402 = vmatprep.subr.bf16.mxu0 0
        %3403 = vmatpush1.bf16.msra.mxu0 0
        %3404 = vmatprep.subr.bf16.mxu0 0
        %3405 = vmatpush1.bf16.msra.mxu0 0
        %3406 = vmatprep.mubr.bf16.mxu0 0
        %3407 = vmatmul.mubr.bf16.gmra.mrb[0].mxu0 %v3372
        %v3408 = vpop.f32.mrb[0].mxu0
        %v3409 = vadd.f32 0.0, %v3408
        %v3410 = vpop.f32.mrb[0].mxu0
        %v3411 = vpop.f32.mrb[0].mxu0
        %v3412 = vpop.f32.mrb[0].mxu0
        %3413 = vdwg.mxu0
        %v3414 = vsel %vm1158, %v3409, -inf
        %3415 = vmax.xlane.f32.xlu0 %v3414
        %v3416 = vpop.xlane.xlu0 %3415
        %v3417 = vsub.f32 %v3409, %v3416
        %v3418 = vmul.f32 %v3417, 1.442695
        %v3419 = vpow.pop %v3418
        %v3420 = vsel %vm1158, %v3419, 0.0
        %3421 = vadd.xlane.f32.xlu0 %v3420
        %v3422 = vpop.xlane.xlu0 %3421
        %v3423 = vrcp.pop %v3422
        %v3424 = vmul.f32 %v3419, %v3423
        %v3425 = vpack.c.bf16 %v3424, %v3424
        %3427 = vrot.lane.b32.xlu0 %v3226, 112
        %v3428 = vpop.permute.xlu0 %3427
        %v3430 = vsel %vm1158, %v3425, 0
        %v3433 = vsel %vm1174, %v3428, 0
        %3435 = vmatprep.subr.bf16.mxu0 0
        %3436 = vmatpush1.bf16.msra.mxu0 %v3433
        %3437 = vmatprep.subr.bf16.mxu0 0
        %3438 = vmatpush1.bf16.msra.mxu0 0
        %3439 = vmatprep.subr.bf16.mxu0 0
        %3440 = vmatpush1.bf16.msra.mxu0 0
        %3441 = vmatprep.subr.bf16.mxu0 0
        %3442 = vmatpush1.bf16.msra.mxu0 0
        %3443 = vmatprep.subr.bf16.mxu0 0
        %3444 = vmatpush1.bf16.msra.mxu0 0
        %3445 = vmatprep.subr.bf16.mxu0 0
        %3446 = vmatpush1.bf16.msra.mxu0 0
        %3447 = vmatprep.subr.bf16.mxu0 0
        %3448 = vmatpush1.bf16.msra.mxu0 0
        %3449 = vmatprep.subr.bf16.mxu0 0
        %3450 = vmatpush1.bf16.msra.mxu0 0
        %3451 = vmatprep.subr.bf16.mxu0 0
        %3452 = vmatpush1.bf16.msra.mxu0 0
        %3453 = vmatprep.subr.bf16.mxu0 0
        %3454 = vmatpush1.bf16.msra.mxu0 0
        %3455 = vmatprep.subr.bf16.mxu0 0
        %3456 = vmatpush1.bf16.msra.mxu0 0
        %3457 = vmatprep.subr.bf16.mxu0 0
        %3458 = vmatpush1.bf16.msra.mxu0 0
        %3459 = vmatprep.subr.bf16.mxu0 0
        %3460 = vmatpush1.bf16.msra.mxu0 0
        %3461 = vmatprep.subr.bf16.mxu0 0
        %3462 = vmatpush1.bf16.msra.mxu0 0
        %3463 = vmatprep.subr.bf16.mxu0 0
        %3464 = vmatpush1.bf16.msra.mxu0 0
        %3465 = vmatprep.subr.bf16.mxu0 0
        %3466 = vmatpush1.bf16.msra.mxu0 0
        %3467 = vmatprep.mubr.bf16.mxu0 0
        %3468 = vmatmul.mubr.bf16.gmra.mrb[0].mxu0 %v3430
        %v3469 = vpop.f32.mrb[0].mxu0
        %v3470 = vadd.f32 0.0, %v3469
        %v3471 = vpop.f32.mrb[0].mxu0
        %v3472 = vpop.f32.mrb[0].mxu0
        %v3473 = vpop.f32.mrb[0].mxu0
        %3474 = vdwg.mxu0
        %3475 = vrot.lane.b32.xlu0 %v3225, 96
        %v3476 = vpop.permute.xlu0 %3475
        %v3478 = vsel %vm1114, %v3476, 0
        %3480 = vmatprep.subr.bf16.mxu0 0
        %3481 = vmatpush1.bf16.msra.mxu0 %v3261
        %3482 = vmatprep.subr.bf16.mxu0 0
        %3483 = vmatpush1.bf16.msra.mxu0 0
        %3484 = vmatprep.subr.bf16.mxu0 0
        %3485 = vmatpush1.bf16.msra.mxu0 0
        %3486 = vmatprep.subr.bf16.mxu0 0
        %3487 = vmatpush1.bf16.msra.mxu0 0
        %3488 = vmatprep.subr.bf16.mxu0 0
        %3489 = vmatpush1.bf16.msra.mxu0 0
        %3490 = vmatprep.subr.bf16.mxu0 0
        %3491 = vmatpush1.bf16.msra.mxu0 0
        %3492 = vmatprep.subr.bf16.mxu0 0
        %3493 = vmatpush1.bf16.msra.mxu0 0
        %3494 = vmatprep.subr.bf16.mxu0 0
        %3495 = vmatpush1.bf16.msra.mxu0 0
        %3496 = vmatprep.subr.bf16.mxu0 0
        %3497 = vmatpush1.bf16.msra.mxu0 0
        %3498 = vmatprep.subr.bf16.mxu0 0
        %3499 = vmatpush1.bf16.msra.mxu0 0
        %3500 = vmatprep.subr.bf16.mxu0 0
        %3501 = vmatpush1.bf16.msra.mxu0 0
        %3502 = vmatprep.subr.bf16.mxu0 0
        %3503 = vmatpush1.bf16.msra.mxu0 0
        %3504 = vmatprep.subr.bf16.mxu0 0
        %3505 = vmatpush1.bf16.msra.mxu0 0
        %3506 = vmatprep.subr.bf16.mxu0 0
        %3507 = vmatpush1.bf16.msra.mxu0 0
        %3508 = vmatprep.subr.bf16.mxu0 0
        %3509 = vmatpush1.bf16.msra.mxu0 0
        %3510 = vmatprep.subr.bf16.mxu0 0
        %3511 = vmatpush1.bf16.msra.mxu0 0
        %3512 = vmatprep.mubr.bf16.mxu0 0
        %3513 = vmatmul.mubr.bf16.gmra.mrb[0].mxu0 %v3478
        %v3514 = vpop.f32.mrb[0].mxu0
        %v3515 = vadd.f32 0.0, %v3514
        %v3516 = vpop.f32.mrb[0].mxu0
        %v3517 = vpop.f32.mrb[0].mxu0
        %v3518 = vpop.f32.mrb[0].mxu0
        %3519 = vdwg.mxu0
        %v3520 = vsel %vm1158, %v3515, -inf
        %3521 = vmax.xlane.f32.xlu0 %v3520
        %v3522 = vpop.xlane.xlu0 %3521
        %v3523 = vsub.f32 %v3515, %v3522
        %v3524 = vmul.f32 %v3523, 1.442695
        %v3525 = vpow.pop %v3524
        %v3526 = vsel %vm1158, %v3525, 0.0
        %3527 = vadd.xlane.f32.xlu0 %v3526
        %v3528 = vpop.xlane.xlu0 %3527
        %v3529 = vrcp.pop %v3528
        %v3530 = vmul.f32 %v3525, %v3529
        %v3531 = vpack.c.bf16 %v3530, %v3530
        %3532 = vrot.lane.b32.xlu0 %v3226, 96
        %v3533 = vpop.permute.xlu0 %3532
        %v3535 = vsel %vm1158, %v3531, 0
        %v3538 = vsel %vm1174, %v3533, 0
        %3540 = vmatprep.subr.bf16.mxu0 0
        %3541 = vmatpush1.bf16.msra.mxu0 %v3538
        %3542 = vmatprep.subr.bf16.mxu0 0
        %3543 = vmatpush1.bf16.msra.mxu0 0
        %3544 = vmatprep.subr.bf16.mxu0 0
        %3545 = vmatpush1.bf16.msra.mxu0 0
        %3546 = vmatprep.subr.bf16.mxu0 0
        %3547 = vmatpush1.bf16.msra.mxu0 0
        %3548 = vmatprep.subr.bf16.mxu0 0
        %3549 = vmatpush1.bf16.msra.mxu0 0
        %3550 = vmatprep.subr.bf16.mxu0 0
        %3551 = vmatpush1.bf16.msra.mxu0 0
        %3552 = vmatprep.subr.bf16.mxu0 0
        %3553 = vmatpush1.bf16.msra.mxu0 0
        %3554 = vmatprep.subr.bf16.mxu0 0
        %3555 = vmatpush1.bf16.msra.mxu0 0
        %3556 = vmatprep.subr.bf16.mxu0 0
        %3557 = vmatpush1.bf16.msra.mxu0 0
        %3558 = vmatprep.subr.bf16.mxu0 0
        %3559 = vmatpush1.bf16.msra.mxu0 0
        %3560 = vmatprep.subr.bf16.mxu0 0
        %3561 = vmatpush1.bf16.msra.mxu0 0
        %3562 = vmatprep.subr.bf16.mxu0 0
        %3563 = vmatpush1.bf16.msra.mxu0 0
        %3564 = vmatprep.subr.bf16.mxu0 0
        %3565 = vmatpush1.bf16.msra.mxu0 0
        %3566 = vmatprep.subr.bf16.mxu0 0
        %3567 = vmatpush1.bf16.msra.mxu0 0
        %3568 = vmatprep.subr.bf16.mxu0 0
        %3569 = vmatpush1.bf16.msra.mxu0 0
        %3570 = vmatprep.subr.bf16.mxu0 0
        %3571 = vmatpush1.bf16.msra.mxu0 0
        %3572 = vmatprep.mubr.bf16.mxu0 0
        %3573 = vmatmul.mubr.bf16.gmra.mrb[0].mxu0 %v3535
        %v3574 = vpop.f32.mrb[0].mxu0
        %v3575 = vadd.f32 0.0, %v3574
        %v3576 = vpop.f32.mrb[0].mxu0
        %v3577 = vpop.f32.mrb[0].mxu0
        %v3578 = vpop.f32.mrb[0].mxu0
        %3579 = vdwg.mxu0
        %3580 = vrot.lane.b32.xlu0 %v3225, 80
        %v3581 = vpop.permute.xlu0 %3580
        %v3583 = vsel %vm1114, %v3581, 0
        %3585 = vmatprep.subr.bf16.mxu0 0
        %3586 = vmatpush1.bf16.msra.mxu0 %v3262
        %3587 = vmatprep.subr.bf16.mxu0 0
        %3588 = vmatpush1.bf16.msra.mxu0 0
        %3589 = vmatprep.subr.bf16.mxu0 0
        %3590 = vmatpush1.bf16.msra.mxu0 0
        %3591 = vmatprep.subr.bf16.mxu0 0
        %3592 = vmatpush1.bf16.msra.mxu0 0
        %3593 = vmatprep.subr.bf16.mxu0 0
        %3594 = vmatpush1.bf16.msra.mxu0 0
        %3595 = vmatprep.subr.bf16.mxu0 0
        %3596 = vmatpush1.bf16.msra.mxu0 0
        %3597 = vmatprep.subr.bf16.mxu0 0
        %3598 = vmatpush1.bf16.msra.mxu0 0
        %3599 = vmatprep.subr.bf16.mxu0 0
        %3600 = vmatpush1.bf16.msra.mxu0 0
        %3601 = vmatprep.subr.bf16.mxu0 0
        %3602 = vmatpush1.bf16.msra.mxu0 0
        %3603 = vmatprep.subr.bf16.mxu0 0
        %3604 = vmatpush1.bf16.msra.mxu0 0
        %3605 = vmatprep.subr.bf16.mxu0 0
        %3606 = vmatpush1.bf16.msra.mxu0 0
        %3607 = vmatprep.subr.bf16.mxu0 0
        %3608 = vmatpush1.bf16.msra.mxu0 0
        %3609 = vmatprep.subr.bf16.mxu0 0
        %3610 = vmatpush1.bf16.msra.mxu0 0
        %3611 = vmatprep.subr.bf16.mxu0 0
        %3612 = vmatpush1.bf16.msra.mxu0 0
        %3613 = vmatprep.subr.bf16.mxu0 0
        %3614 = vmatpush1.bf16.msra.mxu0 0
        %3615 = vmatprep.subr.bf16.mxu0 0
        %3616 = vmatpush1.bf16.msra.mxu0 0
        %3617 = vmatprep.mubr.bf16.mxu0 0
        %3618 = vmatmul.mubr.bf16.gmra.mrb[0].mxu0 %v3583
        %v3619 = vpop.f32.mrb[0].mxu0
        %v3620 = vadd.f32 0.0, %v3619
        %v3621 = vpop.f32.mrb[0].mxu0
        %v3622 = vpop.f32.mrb[0].mxu0
        %v3623 = vpop.f32.mrb[0].mxu0
        %3624 = vdwg.mxu0
        %v3625 = vsel %vm1158, %v3620, -inf
        %3626 = vmax.xlane.f32.xlu0 %v3625
        %v3627 = vpop.xlane.xlu0 %3626
        %v3628 = vsub.f32 %v3620, %v3627
        %v3629 = vmul.f32 %v3628, 1.442695
        %v3630 = vpow.pop %v3629
        %v3631 = vsel %vm1158, %v3630, 0.0
        %3632 = vadd.xlane.f32.xlu0 %v3631
        %v3633 = vpop.xlane.xlu0 %3632
        %v3634 = vrcp.pop %v3633
        %v3635 = vmul.f32 %v3630, %v3634
        %v3636 = vpack.c.bf16 %v3635, %v3635
        %3637 = vrot.lane.b32.xlu0 %v3226, 80
        %v3638 = vpop.permute.xlu0 %3637
        %v3640 = vsel %vm1158, %v3636, 0
        %v3643 = vsel %vm1174, %v3638, 0
        %3645 = vmatprep.subr.bf16.mxu0 0
        %3646 = vmatpush1.bf16.msra.mxu0 %v3643
        %3647 = vmatprep.subr.bf16.mxu0 0
        %3648 = vmatpush1.bf16.msra.mxu0 0
        %3649 = vmatprep.subr.bf16.mxu0 0
        %3650 = vmatpush1.bf16.msra.mxu0 0
        %3651 = vmatprep.subr.bf16.mxu0 0
        %3652 = vmatpush1.bf16.msra.mxu0 0
        %3653 = vmatprep.subr.bf16.mxu0 0
        %3654 = vmatpush1.bf16.msra.mxu0 0
        %3655 = vmatprep.subr.bf16.mxu0 0
        %3656 = vmatpush1.bf16.msra.mxu0 0
        %3657 = vmatprep.subr.bf16.mxu0 0
        %3658 = vmatpush1.bf16.msra.mxu0 0
        %3659 = vmatprep.subr.bf16.mxu0 0
        %3660 = vmatpush1.bf16.msra.mxu0 0
        %3661 = vmatprep.subr.bf16.mxu0 0
        %3662 = vmatpush1.bf16.msra.mxu0 0
        %3663 = vmatprep.subr.bf16.mxu0 0
        %3664 = vmatpush1.bf16.msra.mxu0 0
        %3665 = vmatprep.subr.bf16.mxu0 0
        %3666 = vmatpush1.bf16.msra.mxu0 0
        %3667 = vmatprep.subr.bf16.mxu0 0
        %3668 = vmatpush1.bf16.msra.mxu0 0
        %3669 = vmatprep.subr.bf16.mxu0 0
        %3670 = vmatpush1.bf16.msra.mxu0 0
        %3671 = vmatprep.subr.bf16.mxu0 0
        %3672 = vmatpush1.bf16.msra.mxu0 0
        %3673 = vmatprep.subr.bf16.mxu0 0
        %3674 = vmatpush1.bf16.msra.mxu0 0
        %3675 = vmatprep.subr.bf16.mxu0 0
        %3676 = vmatpush1.bf16.msra.mxu0 0
        %3677 = vmatprep.mubr.bf16.mxu0 0
        %3678 = vmatmul.mubr.bf16.gmra.mrb[0].mxu0 %v3640
        %v3679 = vpop.f32.mrb[0].mxu0
        %v3680 = vadd.f32 0.0, %v3679
        %v3681 = vpop.f32.mrb[0].mxu0
        %v3682 = vpop.f32.mrb[0].mxu0
        %v3683 = vpop.f32.mrb[0].mxu0
        %3684 = vdwg.mxu0
        %3685 = vrot.lane.b32.xlu0 %v3225, 64
        %v3686 = vpop.permute.xlu0 %3685
        %v3688 = vsel %vm1114, %v3686, 0
        %3690 = vmatprep.subr.bf16.mxu0 0
        %3691 = vmatpush1.bf16.msra.mxu0 %v3263
        %3692 = vmatprep.subr.bf16.mxu0 0
        %3693 = vmatpush1.bf16.msra.mxu0 0
        %3694 = vmatprep.subr.bf16.mxu0 0
        %3695 = vmatpush1.bf16.msra.mxu0 0
        %3696 = vmatprep.subr.bf16.mxu0 0
        %3697 = vmatpush1.bf16.msra.mxu0 0
        %3698 = vmatprep.subr.bf16.mxu0 0
        %3699 = vmatpush1.bf16.msra.mxu0 0
        %3700 = vmatprep.subr.bf16.mxu0 0
        %3701 = vmatpush1.bf16.msra.mxu0 0
        %3702 = vmatprep.subr.bf16.mxu0 0
        %3703 = vmatpush1.bf16.msra.mxu0 0
        %3704 = vmatprep.subr.bf16.mxu0 0
        %3705 = vmatpush1.bf16.msra.mxu0 0
        %3706 = vmatprep.subr.bf16.mxu0 0
        %3707 = vmatpush1.bf16.msra.mxu0 0
        %3708 = vmatprep.subr.bf16.mxu0 0
        %3709 = vmatpush1.bf16.msra.mxu0 0
        %3710 = vmatprep.subr.bf16.mxu0 0
        %3711 = vmatpush1.bf16.msra.mxu0 0
        %3712 = vmatprep.subr.bf16.mxu0 0
        %3713 = vmatpush1.bf16.msra.mxu0 0
        %3714 = vmatprep.subr.bf16.mxu0 0
        %3715 = vmatpush1.bf16.msra.mxu0 0
        %3716 = vmatprep.subr.bf16.mxu0 0
        %3717 = vmatpush1.bf16.msra.mxu0 0
        %3718 = vmatprep.subr.bf16.mxu0 0
        %3719 = vmatpush1.bf16.msra.mxu0 0
        %3720 = vmatprep.subr.bf16.mxu0 0
        %3721 = vmatpush1.bf16.msra.mxu0 0
        %3722 = vmatprep.mubr.bf16.mxu0 0
        %3723 = vmatmul.mubr.bf16.gmra.mrb[0].mxu0 %v3688
        %v3724 = vpop.f32.mrb[0].mxu0
        %v3725 = vadd.f32 0.0, %v3724
        %v3726 = vpop.f32.mrb[0].mxu0
        %v3727 = vpop.f32.mrb[0].mxu0
        %v3728 = vpop.f32.mrb[0].mxu0
        %3729 = vdwg.mxu0
        %v3730 = vsel %vm1158, %v3725, -inf
        %3731 = vmax.xlane.f32.xlu0 %v3730
        %v3732 = vpop.xlane.xlu0 %3731
        %v3733 = vsub.f32 %v3725, %v3732
        %v3734 = vmul.f32 %v3733, 1.442695
        %v3735 = vpow.pop %v3734
        %v3736 = vsel %vm1158, %v3735, 0.0
        %3737 = vadd.xlane.f32.xlu0 %v3736
        %v3738 = vpop.xlane.xlu0 %3737
        %v3739 = vrcp.pop %v3738
        %v3740 = vmul.f32 %v3735, %v3739
        %v3741 = vpack.c.bf16 %v3740, %v3740
        %3742 = vrot.lane.b32.xlu0 %v3226, 64
        %v3743 = vpop.permute.xlu0 %3742
        %v3745 = vsel %vm1158, %v3741, 0
        %v3748 = vsel %vm1174, %v3743, 0
        %3750 = vmatprep.subr.bf16.mxu0 0
        %3751 = vmatpush1.bf16.msra.mxu0 %v3748
        %3752 = vmatprep.subr.bf16.mxu0 0
        %3753 = vmatpush1.bf16.msra.mxu0 0
        %3754 = vmatprep.subr.bf16.mxu0 0
        %3755 = vmatpush1.bf16.msra.mxu0 0
        %3756 = vmatprep.subr.bf16.mxu0 0
        %3757 = vmatpush1.bf16.msra.mxu0 0
        %3758 = vmatprep.subr.bf16.mxu0 0
        %3759 = vmatpush1.bf16.msra.mxu0 0
        %3760 = vmatprep.subr.bf16.mxu0 0
        %3761 = vmatpush1.bf16.msra.mxu0 0
        %3762 = vmatprep.subr.bf16.mxu0 0
        %3763 = vmatpush1.bf16.msra.mxu0 0
        %3764 = vmatprep.subr.bf16.mxu0 0
        %3765 = vmatpush1.bf16.msra.mxu0 0
        %3766 = vmatprep.subr.bf16.mxu0 0
        %3767 = vmatpush1.bf16.msra.mxu0 0
        %3768 = vmatprep.subr.bf16.mxu0 0
        %3769 = vmatpush1.bf16.msra.mxu0 0
        %3770 = vmatprep.subr.bf16.mxu0 0
        %3771 = vmatpush1.bf16.msra.mxu0 0
        %3772 = vmatprep.subr.bf16.mxu0 0
        %3773 = vmatpush1.bf16.msra.mxu0 0
        %3774 = vmatprep.subr.bf16.mxu0 0
        %3775 = vmatpush1.bf16.msra.mxu0 0
        %3776 = vmatprep.subr.bf16.mxu0 0
        %3777 = vmatpush1.bf16.msra.mxu0 0
        %3778 = vmatprep.subr.bf16.mxu0 0
        %3779 = vmatpush1.bf16.msra.mxu0 0
        %3780 = vmatprep.subr.bf16.mxu0 0
        %3781 = vmatpush1.bf16.msra.mxu0 0
        %3782 = vmatprep.mubr.bf16.mxu0 0
        %3783 = vmatmul.mubr.bf16.gmra.mrb[0].mxu0 %v3745
        %v3784 = vpop.f32.mrb[0].mxu0
        %v3785 = vadd.f32 0.0, %v3784
        %v3786 = vpop.f32.mrb[0].mxu0
        %v3787 = vpop.f32.mrb[0].mxu0
        %v3788 = vpop.f32.mrb[0].mxu0
        %3789 = vdwg.mxu0
        %3790 = vrot.lane.b32.xlu0 %v3225, 48
        %v3791 = vpop.permute.xlu0 %3790
        %v3793 = vsel %vm1114, %v3791, 0
        %3795 = vmatprep.subr.bf16.mxu0 0
        %3796 = vmatpush1.bf16.msra.mxu0 %v3264
        %3797 = vmatprep.subr.bf16.mxu0 0
        %3798 = vmatpush1.bf16.msra.mxu0 0
        %3799 = vmatprep.subr.bf16.mxu0 0
        %3800 = vmatpush1.bf16.msra.mxu0 0
        %3801 = vmatprep.subr.bf16.mxu0 0
        %3802 = vmatpush1.bf16.msra.mxu0 0
        %3803 = vmatprep.subr.bf16.mxu0 0
        %3804 = vmatpush1.bf16.msra.mxu0 0
        %3805 = vmatprep.subr.bf16.mxu0 0
        %3806 = vmatpush1.bf16.msra.mxu0 0
        %3807 = vmatprep.subr.bf16.mxu0 0
        %3808 = vmatpush1.bf16.msra.mxu0 0
        %3809 = vmatprep.subr.bf16.mxu0 0
        %3810 = vmatpush1.bf16.msra.mxu0 0
        %3811 = vmatprep.subr.bf16.mxu0 0
        %3812 = vmatpush1.bf16.msra.mxu0 0
        %3813 = vmatprep.subr.bf16.mxu0 0
        %3814 = vmatpush1.bf16.msra.mxu0 0
        %3815 = vmatprep.subr.bf16.mxu0 0
        %3816 = vmatpush1.bf16.msra.mxu0 0
        %3817 = vmatprep.subr.bf16.mxu0 0
        %3818 = vmatpush1.bf16.msra.mxu0 0
        %3819 = vmatprep.subr.bf16.mxu0 0
        %3820 = vmatpush1.bf16.msra.mxu0 0
        %3821 = vmatprep.subr.bf16.mxu0 0
        %3822 = vmatpush1.bf16.msra.mxu0 0
        %3823 = vmatprep.subr.bf16.mxu0 0
        %3824 = vmatpush1.bf16.msra.mxu0 0
        %3825 = vmatprep.subr.bf16.mxu0 0
        %3826 = vmatpush1.bf16.msra.mxu0 0
        %3827 = vmatprep.mubr.bf16.mxu0 0
        %3828 = vmatmul.mubr.bf16.gmra.mrb[0].mxu0 %v3793
        %v3829 = vpop.f32.mrb[0].mxu0
        %v3830 = vadd.f32 0.0, %v3829
        %v3831 = vpop.f32.mrb[0].mxu0
        %v3832 = vpop.f32.mrb[0].mxu0
        %v3833 = vpop.f32.mrb[0].mxu0
        %3834 = vdwg.mxu0
        %v3835 = vsel %vm1158, %v3830, -inf
        %3836 = vmax.xlane.f32.xlu0 %v3835
        %v3837 = vpop.xlane.xlu0 %3836
        %v3838 = vsub.f32 %v3830, %v3837
        %v3839 = vmul.f32 %v3838, 1.442695
        %v3840 = vpow.pop %v3839
        %v3841 = vsel %vm1158, %v3840, 0.0
        %3842 = vadd.xlane.f32.xlu0 %v3841
        %v3843 = vpop.xlane.xlu0 %3842
        %v3844 = vrcp.pop %v3843
        %v3845 = vmul.f32 %v3840, %v3844
        %v3846 = vpack.c.bf16 %v3845, %v3845
        %3847 = vrot.lane.b32.xlu0 %v3226, 48
        %v3848 = vpop.permute.xlu0 %3847
        %v3850 = vsel %vm1158, %v3846, 0
        %v3853 = vsel %vm1174, %v3848, 0
        %3855 = vmatprep.subr.bf16.mxu0 0
        %3856 = vmatpush1.bf16.msra.mxu0 %v3853
        %3857 = vmatprep.subr.bf16.mxu0 0
        %3858 = vmatpush1.bf16.msra.mxu0 0
        %3859 = vmatprep.subr.bf16.mxu0 0
        %3860 = vmatpush1.bf16.msra.mxu0 0
        %3861 = vmatprep.subr.bf16.mxu0 0
        %3862 = vmatpush1.bf16.msra.mxu0 0
        %3863 = vmatprep.subr.bf16.mxu0 0
        %3864 = vmatpush1.bf16.msra.mxu0 0
        %3865 = vmatprep.subr.bf16.mxu0 0
        %3866 = vmatpush1.bf16.msra.mxu0 0
        %3867 = vmatprep.subr.bf16.mxu0 0
        %3868 = vmatpush1.bf16.msra.mxu0 0
        %3869 = vmatprep.subr.bf16.mxu0 0
        %3870 = vmatpush1.bf16.msra.mxu0 0
        %3871 = vmatprep.subr.bf16.mxu0 0
        %3872 = vmatpush1.bf16.msra.mxu0 0
        %3873 = vmatprep.subr.bf16.mxu0 0
        %3874 = vmatpush1.bf16.msra.mxu0 0
        %3875 = vmatprep.subr.bf16.mxu0 0
        %3876 = vmatpush1.bf16.msra.mxu0 0
        %3877 = vmatprep.subr.bf16.mxu0 0
        %3878 = vmatpush1.bf16.msra.mxu0 0
        %3879 = vmatprep.subr.bf16.mxu0 0
        %3880 = vmatpush1.bf16.msra.mxu0 0
        %3881 = vmatprep.subr.bf16.mxu0 0
        %3882 = vmatpush1.bf16.msra.mxu0 0
        %3883 = vmatprep.subr.bf16.mxu0 0
        %3884 = vmatpush1.bf16.msra.mxu0 0
        %3885 = vmatprep.subr.bf16.mxu0 0
        %3886 = vmatpush1.bf16.msra.mxu0 0
        %3887 = vmatprep.mubr.bf16.mxu0 0
        %3888 = vmatmul.mubr.bf16.gmra.mrb[0].mxu0 %v3850
        %v3889 = vpop.f32.mrb[0].mxu0
        %v3890 = vadd.f32 0.0, %v3889
        %v3891 = vpop.f32.mrb[0].mxu0
        %v3892 = vpop.f32.mrb[0].mxu0
        %v3893 = vpop.f32.mrb[0].mxu0
        %3894 = vdwg.mxu0
        %3895 = vrot.lane.b32.xlu0 %v3225, 32
        %v3896 = vpop.permute.xlu0 %3895
        %v3898 = vsel %vm1114, %v3896, 0
        %3900 = vmatprep.subr.bf16.mxu0 0
        %3901 = vmatpush1.bf16.msra.mxu0 %v3265
        %3902 = vmatprep.subr.bf16.mxu0 0
        %3903 = vmatpush1.bf16.msra.mxu0 0
        %3904 = vmatprep.subr.bf16.mxu0 0
        %3905 = vmatpush1.bf16.msra.mxu0 0
        %3906 = vmatprep.subr.bf16.mxu0 0
        %3907 = vmatpush1.bf16.msra.mxu0 0
        %3908 = vmatprep.subr.bf16.mxu0 0
        %3909 = vmatpush1.bf16.msra.mxu0 0
        %3910 = vmatprep.subr.bf16.mxu0 0
        %3911 = vmatpush1.bf16.msra.mxu0 0
        %3912 = vmatprep.subr.bf16.mxu0 0
        %3913 = vmatpush1.bf16.msra.mxu0 0
        %3914 = vmatprep.subr.bf16.mxu0 0
        %3915 = vmatpush1.bf16.msra.mxu0 0
        %3916 = vmatprep.subr.bf16.mxu0 0
        %3917 = vmatpush1.bf16.msra.mxu0 0
        %3918 = vmatprep.subr.bf16.mxu0 0
        %3919 = vmatpush1.bf16.msra.mxu0 0
        %3920 = vmatprep.subr.bf16.mxu0 0
        %3921 = vmatpush1.bf16.msra.mxu0 0
        %3922 = vmatprep.subr.bf16.mxu0 0
        %3923 = vmatpush1.bf16.msra.mxu0 0
        %3924 = vmatprep.subr.bf16.mxu0 0
        %3925 = vmatpush1.bf16.msra.mxu0 0
        %3926 = vmatprep.subr.bf16.mxu0 0
        %3927 = vmatpush1.bf16.msra.mxu0 0
        %3928 = vmatprep.subr.bf16.mxu0 0
        %3929 = vmatpush1.bf16.msra.mxu0 0
        %3930 = vmatprep.subr.bf16.mxu0 0
        %3931 = vmatpush1.bf16.msra.mxu0 0
        %3932 = vmatprep.mubr.bf16.mxu0 0
        %3933 = vmatmul.mubr.bf16.gmra.mrb[0].mxu0 %v3898
        %v3934 = vpop.f32.mrb[0].mxu0
        %v3935 = vadd.f32 0.0, %v3934
        %v3936 = vpop.f32.mrb[0].mxu0
        %v3937 = vpop.f32.mrb[0].mxu0
        %v3938 = vpop.f32.mrb[0].mxu0
        %3939 = vdwg.mxu0
        %v3940 = vsel %vm1158, %v3935, -inf
        %3941 = vmax.xlane.f32.xlu0 %v3940
        %v3942 = vpop.xlane.xlu0 %3941
        %v3943 = vsub.f32 %v3935, %v3942
        %v3944 = vmul.f32 %v3943, 1.442695
        %v3945 = vpow.pop %v3944
        %v3946 = vsel %vm1158, %v3945, 0.0
        %3947 = vadd.xlane.f32.xlu0 %v3946
        %v3948 = vpop.xlane.xlu0 %3947
        %v3949 = vrcp.pop %v3948
        %v3950 = vmul.f32 %v3945, %v3949
        %v3951 = vpack.c.bf16 %v3950, %v3950
        %3952 = vrot.lane.b32.xlu0 %v3226, 32
        %v3953 = vpop.permute.xlu0 %3952
        %v3955 = vsel %vm1158, %v3951, 0
        %v3958 = vsel %vm1174, %v3953, 0
        %3960 = vmatprep.subr.bf16.mxu0 0
        %3961 = vmatpush1.bf16.msra.mxu0 %v3958
        %3962 = vmatprep.subr.bf16.mxu0 0
        %3963 = vmatpush1.bf16.msra.mxu0 0
        %3964 = vmatprep.subr.bf16.mxu0 0
        %3965 = vmatpush1.bf16.msra.mxu0 0
        %3966 = vmatprep.subr.bf16.mxu0 0
        %3967 = vmatpush1.bf16.msra.mxu0 0
        %3968 = vmatprep.subr.bf16.mxu0 0
        %3969 = vmatpush1.bf16.msra.mxu0 0
        %3970 = vmatprep.subr.bf16.mxu0 0
        %3971 = vmatpush1.bf16.msra.mxu0 0
        %3972 = vmatprep.subr.bf16.mxu0 0
        %3973 = vmatpush1.bf16.msra.mxu0 0
        %3974 = vmatprep.subr.bf16.mxu0 0
        %3975 = vmatpush1.bf16.msra.mxu0 0
        %3976 = vmatprep.subr.bf16.mxu0 0
        %3977 = vmatpush1.bf16.msra.mxu0 0
        %3978 = vmatprep.subr.bf16.mxu0 0
        %3979 = vmatpush1.bf16.msra.mxu0 0
        %3980 = vmatprep.subr.bf16.mxu0 0
        %3981 = vmatpush1.bf16.msra.mxu0 0
        %3982 = vmatprep.subr.bf16.mxu0 0
        %3983 = vmatpush1.bf16.msra.mxu0 0
        %3984 = vmatprep.subr.bf16.mxu0 0
        %3985 = vmatpush1.bf16.msra.mxu0 0
        %3986 = vmatprep.subr.bf16.mxu0 0
        %3987 = vmatpush1.bf16.msra.mxu0 0
        %3988 = vmatprep.subr.bf16.mxu0 0
        %3989 = vmatpush1.bf16.msra.mxu0 0
        %3990 = vmatprep.subr.bf16.mxu0 0
        %3991 = vmatpush1.bf16.msra.mxu0 0
        %3992 = vmatprep.mubr.bf16.mxu0 0
        %3993 = vmatmul.mubr.bf16.gmra.mrb[0].mxu0 %v3955
        %v3994 = vpop.f32.mrb[0].mxu0
        %v3995 = vadd.f32 0.0, %v3994
        %v3996 = vpop.f32.mrb[0].mxu0
        %v3997 = vpop.f32.mrb[0].mxu0
        %v3998 = vpop.f32.mrb[0].mxu0
        %3999 = vdwg.mxu0
        %4000 = vrot.lane.b32.xlu0 %v3225, 16
        %v4001 = vpop.permute.xlu0 %4000
        %v4003 = vsel %vm1114, %v4001, 0
        %4005 = vmatprep.subr.bf16.mxu0 0
        %4006 = vmatpush1.bf16.msra.mxu0 %v3266
        %4007 = vmatprep.subr.bf16.mxu0 0
        %4008 = vmatpush1.bf16.msra.mxu0 0
        %4009 = vmatprep.subr.bf16.mxu0 0
        %4010 = vmatpush1.bf16.msra.mxu0 0
        %4011 = vmatprep.subr.bf16.mxu0 0
        %4012 = vmatpush1.bf16.msra.mxu0 0
        %4013 = vmatprep.subr.bf16.mxu0 0
        %4014 = vmatpush1.bf16.msra.mxu0 0
        %4015 = vmatprep.subr.bf16.mxu0 0
        %4016 = vmatpush1.bf16.msra.mxu0 0
        %4017 = vmatprep.subr.bf16.mxu0 0
        %4018 = vmatpush1.bf16.msra.mxu0 0
        %4019 = vmatprep.subr.bf16.mxu0 0
        %4020 = vmatpush1.bf16.msra.mxu0 0
        %4021 = vmatprep.subr.bf16.mxu0 0
        %4022 = vmatpush1.bf16.msra.mxu0 0
        %4023 = vmatprep.subr.bf16.mxu0 0
        %4024 = vmatpush1.bf16.msra.mxu0 0
        %4025 = vmatprep.subr.bf16.mxu0 0
        %4026 = vmatpush1.bf16.msra.mxu0 0
        %4027 = vmatprep.subr.bf16.mxu0 0
        %4028 = vmatpush1.bf16.msra.mxu0 0
        %4029 = vmatprep.subr.bf16.mxu0 0
        %4030 = vmatpush1.bf16.msra.mxu0 0
        %4031 = vmatprep.subr.bf16.mxu0 0
        %4032 = vmatpush1.bf16.msra.mxu0 0
        %4033 = vmatprep.subr.bf16.mxu0 0
        %4034 = vmatpush1.bf16.msra.mxu0 0
        %4035 = vmatprep.subr.bf16.mxu0 0
        %4036 = vmatpush1.bf16.msra.mxu0 0
        %4037 = vmatprep.mubr.bf16.mxu0 0
        %4038 = vmatmul.mubr.bf16.gmra.mrb[0].mxu0 %v4003
        %v4039 = vpop.f32.mrb[0].mxu0
        %v4040 = vadd.f32 0.0, %v4039
        %v4041 = vpop.f32.mrb[0].mxu0
        %v4042 = vpop.f32.mrb[0].mxu0
        %v4043 = vpop.f32.mrb[0].mxu0
        %4044 = vdwg.mxu0
        %v4045 = vsel %vm1158, %v4040, -inf
        %4046 = vmax.xlane.f32.xlu0 %v4045
        %v4047 = vpop.xlane.xlu0 %4046
        %v4048 = vsub.f32 %v4040, %v4047
        %v4049 = vmul.f32 %v4048, 1.442695
        %v4050 = vpow.pop %v4049
        %v4051 = vsel %vm1158, %v4050, 0.0
        %4052 = vadd.xlane.f32.xlu0 %v4051
        %v4053 = vpop.xlane.xlu0 %4052
        %v4054 = vrcp.pop %v4053
        %v4055 = vmul.f32 %v4050, %v4054
        %v4056 = vpack.c.bf16 %v4055, %v4055
        %4057 = vrot.lane.b32.xlu0 %v3226, 16
        %v4058 = vpop.permute.xlu0 %4057
        %v4060 = vsel %vm1158, %v4056, 0
        %v4063 = vsel %vm1174, %v4058, 0
        %4065 = vmatprep.subr.bf16.mxu0 0
        %4066 = vmatpush1.bf16.msra.mxu0 %v4063
        %4067 = vmatprep.subr.bf16.mxu0 0
        %4068 = vmatpush1.bf16.msra.mxu0 0
        %4069 = vmatprep.subr.bf16.mxu0 0
        %4070 = vmatpush1.bf16.msra.mxu0 0
        %4071 = vmatprep.subr.bf16.mxu0 0
        %4072 = vmatpush1.bf16.msra.mxu0 0
        %4073 = vmatprep.subr.bf16.mxu0 0
        %4074 = vmatpush1.bf16.msra.mxu0 0
        %4075 = vmatprep.subr.bf16.mxu0 0
        %4076 = vmatpush1.bf16.msra.mxu0 0
        %4077 = vmatprep.subr.bf16.mxu0 0
        %4078 = vmatpush1.bf16.msra.mxu0 0
        %4079 = vmatprep.subr.bf16.mxu0 0
        %4080 = vmatpush1.bf16.msra.mxu0 0
        %4081 = vmatprep.subr.bf16.mxu0 0
        %4082 = vmatpush1.bf16.msra.mxu0 0
        %4083 = vmatprep.subr.bf16.mxu0 0
        %4084 = vmatpush1.bf16.msra.mxu0 0
        %4085 = vmatprep.subr.bf16.mxu0 0
        %4086 = vmatpush1.bf16.msra.mxu0 0
        %4087 = vmatprep.subr.bf16.mxu0 0
        %4088 = vmatpush1.bf16.msra.mxu0 0
        %4089 = vmatprep.subr.bf16.mxu0 0
        %4090 = vmatpush1.bf16.msra.mxu0 0
        %4091 = vmatprep.subr.bf16.mxu0 0
        %4092 = vmatpush1.bf16.msra.mxu0 0
        %4093 = vmatprep.subr.bf16.mxu0 0
        %4094 = vmatpush1.bf16.msra.mxu0 0
        %4095 = vmatprep.subr.bf16.mxu0 0
        %4096 = vmatpush1.bf16.msra.mxu0 0
        %4097 = vmatprep.mubr.bf16.mxu0 0
        %4098 = vmatmul.mubr.bf16.gmra.mrb[0].mxu0 %v4060
        %v4099 = vpop.f32.mrb[0].mxu0
        %v4100 = vadd.f32 0.0, %v4099
        %v4101 = vpop.f32.mrb[0].mxu0
        %v4102 = vpop.f32.mrb[0].mxu0
        %v4103 = vpop.f32.mrb[0].mxu0
        %4104 = vdwg.mxu0
        %4106 = vrot.lane.b32.xlu0 %v3470, 16
        %v4107 = vpop.permute.xlu0 %4106
        %4110 = vrot.lane.b32.xlu0 %v3575, 32
        %v4111 = vpop.permute.xlu0 %4110
        %4114 = vrot.lane.b32.xlu0 %v3680, 48
        %v4115 = vpop.permute.xlu0 %4114
        %4118 = vrot.lane.b32.xlu0 %v3785, 64
        %v4119 = vpop.permute.xlu0 %4118
        %4122 = vrot.lane.b32.xlu0 %v3890, 80
        %v4123 = vpop.permute.xlu0 %4122
        %4126 = vrot.lane.b32.xlu0 %v3995, 96
        %v4127 = vpop.permute.xlu0 %4126
        %4130 = vrot.lane.b32.xlu0 %v4100, 112
        %v4131 = vpop.permute.xlu0 %4130
        %v4133 = vsel %vm1114, %v3363, %v4107
        %v4134 = vsel %vm1984, %v4133, %v4111
        %v4135 = vsel %vm1986, %v4134, %v4115
        %v4136 = vsel %vm1988, %v4135, %v4119
        %v4137 = vsel %vm1990, %v4136, %v4123
        %v4138 = vsel %vm1992, %v4137, %v4127
        %v4139 = vsel %vm1994, %v4138, %v4131
        %v4140 = vpack.c.bf16 %v4139, %v4139
        %v4141 = vld [vmem:[%s14] sm:$0xf]
        %v4142 = vld [vmem:[%s14 + $0x4] sm:$0xf]
        %v4143 = vld [vmem:[%s14 + $0x8] sm:$0xf]
        %v4144 = vld [vmem:[%s14 + $0xc] sm:$0xf]
        %v4145 = vld [vmem:[%s14 + $0x10] sm:$0xf]
        %v4146 = vld [vmem:[%s14 + $0x14] sm:$0xf]
        %v4147 = vld [vmem:[%s14 + $0x18] sm:$0xf]
        %v4148 = vld [vmem:[%s14 + $0x1c] sm:$0xf]
        %v4149 = vld [vmem:[%s14 + $0x20] sm:$0xf]
        %v4150 = vld [vmem:[%s14 + $0x24] sm:$0xf]
        %v4151 = vld [vmem:[%s14 + $0x28] sm:$0xf]
        %v4152 = vld [vmem:[%s14 + $0x2c] sm:$0xf]
        %v4153 = vld [vmem:[%s14 + $0x30] sm:$0xf]
        %v4154 = vld [vmem:[%s14 + $0x34] sm:$0xf]
        %v4155 = vld [vmem:[%s14 + $0x38] sm:$0xf]
        %v4156 = vld [vmem:[%s14 + $0x3c] sm:$0xf]
        %v4157 = vld [vmem:[%s15] sm:$0x1]
        %v4159 = vlaneseq
        %v4160 = vshrl.u32 %v4159, 7
        %v4161 = vsub.s32 0, %v4160
        %v4162 = vrot.slane %v4157, %v4161
        %v4180 = vunpack.c.l.b16 %v4141
        %v4181 = vunpack.c.l.b16 %v4142
        %v4182 = vunpack.c.l.b16 %v4143
        %v4183 = vunpack.c.l.b16 %v4144
        %v4184 = vunpack.c.l.b16 %v4145
        %v4185 = vunpack.c.l.b16 %v4146
        %v4186 = vunpack.c.l.b16 %v4147
        %v4187 = vunpack.c.l.b16 %v4148
        %v4188 = vunpack.c.l.b16 %v4149
        %v4189 = vunpack.c.l.b16 %v4150
        %v4190 = vunpack.c.l.b16 %v4151
        %v4191 = vunpack.c.l.b16 %v4152
        %v4192 = vunpack.c.l.b16 %v4153
        %v4193 = vunpack.c.l.b16 %v4154
        %v4194 = vunpack.c.l.b16 %v4155
        %v4195 = vunpack.c.l.b16 %v4156
        %v4196 = vpack.c.b16 %v4181, %v4180
        %v4197 = vpack.c.b16 %v4183, %v4182
        %v4198 = vpack.c.b16 %v4185, %v4184
        %v4199 = vpack.c.b16 %v4187, %v4186
        %v4200 = vpack.c.b16 %v4189, %v4188
        %v4201 = vpack.c.b16 %v4191, %v4190
        %v4202 = vpack.c.b16 %v4193, %v4192
        %v4203 = vpack.c.b16 %v4195, %v4194
        %4212 = vmatprep.subr.bf16.mxu0 0
        %4213 = vmatpush1.bf16.msra.mxu0 %v4196
        %4214 = vmatprep.subr.bf16.mxu0 0
        %4215 = vmatpush1.bf16.msra.mxu0 %v4197
        %4216 = vmatprep.subr.bf16.mxu0 0
        %4217 = vmatpush1.bf16.msra.mxu0 %v4198
        %4218 = vmatprep.subr.bf16.mxu0 0
        %4219 = vmatpush1.bf16.msra.mxu0 %v4199
        %4220 = vmatprep.subr.bf16.mxu0 0
        %4221 = vmatpush1.bf16.msra.mxu0 %v4200
        %4222 = vmatprep.subr.bf16.mxu0 0
        %4223 = vmatpush1.bf16.msra.mxu0 %v4201
        %4224 = vmatprep.subr.bf16.mxu0 0
        %4225 = vmatpush1.bf16.msra.mxu0 %v4202
        %4226 = vmatprep.subr.bf16.mxu0 0
        %4227 = vmatpush1.bf16.msra.mxu0 %v4203
        %4228 = vmatprep.subr.bf16.mxu0 0
        %4229 = vmatpush1.bf16.msra.mxu0 0
        %4230 = vmatprep.subr.bf16.mxu0 0
        %4231 = vmatpush1.bf16.msra.mxu0 0
        %4232 = vmatprep.subr.bf16.mxu0 0
        %4233 = vmatpush1.bf16.msra.mxu0 0
        %4234 = vmatprep.subr.bf16.mxu0 0
        %4235 = vmatpush1.bf16.msra.mxu0 0
        %4236 = vmatprep.subr.bf16.mxu0 0
        %4237 = vmatpush1.bf16.msra.mxu0 0
        %4238 = vmatprep.subr.bf16.mxu0 0
        %4239 = vmatpush1.bf16.msra.mxu0 0
        %4240 = vmatprep.subr.bf16.mxu0 0
        %4241 = vmatpush1.bf16.msra.mxu0 0
        %4242 = vmatprep.subr.bf16.mxu0 0
        %4243 = vmatpush1.bf16.msra.mxu0 0
        %4244 = vmatprep.mubr.bf16.mxu0 0
        %4245 = vmatmul.mubr.bf16.gmra.mrb[0].mxu0 %v4140
        %v4246 = vpop.f32.mrb[0].mxu0
        %v4247 = vadd.f32 %v4162, %v4246
        %v4248 = vpop.f32.mrb[0].mxu0
        %v4249 = vpop.f32.mrb[0].mxu0
        %v4250 = vpop.f32.mrb[0].mxu0
        %4251 = vdwg.mxu0
        %v4252 = vadd.f32 %v736, %v4247
        %4253 = vadd.xlane.f32.xlu0 %v4252
        %v4254 = vpop.xlane.xlu0 %4253
        %v4255 = vmul.f32 %v4254, %v2111
        %v4256 = vsub.f32 %v4252, %v4255
        %v4257 = vmul.f32 %v4256, %v4256
        %4258 = vadd.xlane.f32.xlu0 %v4257
        %v4259 = vpop.xlane.xlu0 %4258
        %v4260 = vmul.f32 %v4259, %v2111
        %v4261 = vadd.f32 %v4260, 1e-05
        %v4262 = vrsqrt.pop %v4261
        %v4263 = vmul.f32 %v4256, %v4262
        %v4264 = vld [vmem:[%s16] sm:$0x1]
        %v4266 = vlaneseq
        %v4267 = vshrl.u32 %v4266, 7
        %v4268 = vsub.s32 0, %v4267
        %v4269 = vrot.slane %v4264, %v4268
        %v4271 = vmul.f32 %v4263, %v4269
        %v4272 = vld [vmem:[%s17] sm:$0x1]
        %v4274 = vlaneseq
        %v4275 = vshrl.u32 %v4274, 7
        %v4276 = vsub.s32 0, %v4275
        %v4277 = vrot.slane %v4272, %v4276
        %v4279 = vadd.f32 %v4271, %v4277
        %v4280 = vpack.c.bf16 %v4279, %v4279
        %v4281 = vld [vmem:[%s18] sm:$0xff]
        %v4282 = vld [vmem:[%s18 + $0x8] sm:$0xff]
        %v4283 = vld [vmem:[%s18 + $0x10] sm:$0xff]
        %v4284 = vld [vmem:[%s18 + $0x18] sm:$0xff]
        %v4285 = vld [vmem:[%s18 + $0x20] sm:$0xff]
        %v4286 = vld [vmem:[%s18 + $0x28] sm:$0xff]
        %v4287 = vld [vmem:[%s18 + $0x30] sm:$0xff]
        %v4288 = vld [vmem:[%s18 + $0x38] sm:$0xff]
        %v4289 = vld [vmem:[%s18 + $0x40] sm:$0xff]
        %v4290 = vld [vmem:[%s18 + $0x48] sm:$0xff]
        %v4291 = vld [vmem:[%s18 + $0x50] sm:$0xff]
        %v4292 = vld [vmem:[%s18 + $0x58] sm:$0xff]
        %v4293 = vld [vmem:[%s18 + $0x60] sm:$0xff]
        %v4294 = vld [vmem:[%s18 + $0x68] sm:$0xff]
        %v4295 = vld [vmem:[%s18 + $0x70] sm:$0xff]
        %v4296 = vld [vmem:[%s18 + $0x78] sm:$0xff]
        %v4297 = vld [vmem:[%s18 + $0x80] sm:$0xff]
        %v4298 = vld [vmem:[%s18 + $0x88] sm:$0xff]
        %v4299 = vld [vmem:[%s18 + $0x90] sm:$0xff]
        %v4300 = vld [vmem:[%s18 + $0x98] sm:$0xff]
        %v4301 = vld [vmem:[%s18 + $0xa0] sm:$0xff]
        %v4302 = vld [vmem:[%s18 + $0xa8] sm:$0xff]
        %v4303 = vld [vmem:[%s18 + $0xb0] sm:$0xff]
        %v4304 = vld [vmem:[%s18 + $0xb8] sm:$0xff]
        %v4305 = vld [vmem:[%s18 + $0xc0] sm:$0xff]
        %v4306 = vld [vmem:[%s18 + $0xc8] sm:$0xff]
        %v4307 = vld [vmem:[%s18 + $0xd0] sm:$0xff]
        %v4308 = vld [vmem:[%s18 + $0xd8] sm:$0xff]
        %v4309 = vld [vmem:[%s18 + $0xe0] sm:$0xff]
        %v4310 = vld [vmem:[%s18 + $0xe8] sm:$0xff]
        %v4311 = vld [vmem:[%s18 + $0xf0] sm:$0xff]
        %v4312 = vld [vmem:[%s18 + $0xf8] sm:$0xff]
        %v4313 = vld [vmem:[%s19] sm:$0xf]
        %v4315 = vlaneseq
        %v4316 = vshrl.u32 %v4315, 7
        %v4317 = vsub.s32 0, %v4316
        %v4318 = vrot.slane %v4313, %v4317
        %v4319 = vlaneseq
        %v4320 = vshrl.u32 %v4319, 7
        %v4321 = vsub.s32 1, %v4320
        %v4322 = vrot.slane %v4313, %v4321
        %v4323 = vlaneseq
        %v4324 = vshrl.u32 %v4323, 7
        %v4325 = vsub.s32 2, %v4324
        %v4326 = vrot.slane %v4313, %v4325
        %v4327 = vlaneseq
        %v4328 = vshrl.u32 %v4327, 7
        %v4329 = vsub.s32 3, %v4328
        %v4330 = vrot.slane %v4313, %v4329
        %v4367 = vunpack.c.l.b16 %v4281
        %v4368 = vunpack.c.h.b16 %v4281
        %v4369 = vunpack.c.l.b16 %v4282
        %v4370 = vunpack.c.h.b16 %v4282
        %v4371 = vunpack.c.l.b16 %v4283
        %v4372 = vunpack.c.h.b16 %v4283
        %v4373 = vunpack.c.l.b16 %v4284
        %v4374 = vunpack.c.h.b16 %v4284
        %v4375 = vunpack.c.l.b16 %v4285
        %v4376 = vunpack.c.h.b16 %v4285
        %v4377 = vunpack.c.l.b16 %v4286
        %v4378 = vunpack.c.h.b16 %v4286
        %v4379 = vunpack.c.l.b16 %v4287
        %v4380 = vunpack.c.h.b16 %v4287
        %v4381 = vunpack.c.l.b16 %v4288
        %v4382 = vunpack.c.h.b16 %v4288
        %v4383 = vunpack.c.l.b16 %v4289
        %v4384 = vunpack.c.h.b16 %v4289
        %v4385 = vunpack.c.l.b16 %v4290
        %v4386 = vunpack.c.h.b16 %v4290
        %v4387 = vunpack.c.l.b16 %v4291
        %v4388 = vunpack.c.h.b16 %v4291
        %v4389 = vunpack.c.l.b16 %v4292
        %v4390 = vunpack.c.h.b16 %v4292
        %v4391 = vunpack.c.l.b16 %v4293
        %v4392 = vunpack.c.h.b16 %v4293
        %v4393 = vunpack.c.l.b16 %v4294
        %v4394 = vunpack.c.h.b16 %v4294
        %v4395 = vunpack.c.l.b16 %v4295
        %v4396 = vunpack.c.h.b16 %v4295
        %v4397 = vunpack.c.l.b16 %v4296
        %v4398 = vunpack.c.h.b16 %v4296
        %v4399 = vunpack.c.l.b16 %v4297
        %v4400 = vunpack.c.h.b16 %v4297
        %v4401 = vunpack.c.l.b16 %v4298
        %v4402 = vunpack.c.h.b16 %v4298
        %v4403 = vunpack.c.l.b16 %v4299
        %v4404 = vunpack.c.h.b16 %v4299
        %v4405 = vunpack.c.l.b16 %v4300
        %v4406 = vunpack.c.h.b16 %v4300
        %v4407 = vunpack.c.l.b16 %v4301
        %v4408 = vunpack.c.h.b16 %v4301
        %v4409 = vunpack.c.l.b16 %v4302
        %v4410 = vunpack.c.h.b16 %v4302
        %v4411 = vunpack.c.l.b16 %v4303
        %v4412 = vunpack.c.h.b16 %v4303
        %v4413 = vunpack.c.l.b16 %v4304
        %v4414 = vunpack.c.h.b16 %v4304
        %v4415 = vunpack.c.l.b16 %v4305
        %v4416 = vunpack.c.h.b16 %v4305
        %v4417 = vunpack.c.l.b16 %v4306
        %v4418 = vunpack.c.h.b16 %v4306
        %v4419 = vunpack.c.l.b16 %v4307
        %v4420 = vunpack.c.h.b16 %v4307
        %v4421 = vunpack.c.l.b16 %v4308
        %v4422 = vunpack.c.h.b16 %v4308
        %v4423 = vunpack.c.l.b16 %v4309
        %v4424 = vunpack.c.h.b16 %v4309
        %v4425 = vunpack.c.l.b16 %v4310
        %v4426 = vunpack.c.h.b16 %v4310
        %v4427 = vunpack.c.l.b16 %v4311
        %v4428 = vunpack.c.h.b16 %v4311
        %v4429 = vunpack.c.l.b16 %v4312
        %v4430 = vunpack.c.h.b16 %v4312
        %v4431 = vpack.c.b16 %v4371, %v4367
        %v4432 = vpack.c.b16 %v4372, %v4368
        %v4433 = vpack.c.b16 %v4373, %v4369
        %v4434 = vpack.c.b16 %v4374, %v4370
        %v4435 = vpack.c.b16 %v4379, %v4375
        %v4436 = vpack.c.b16 %v4380, %v4376
        %v4437 = vpack.c.b16 %v4381, %v4377
        %v4438 = vpack.c.b16 %v4382, %v4378
        %v4439 = vpack.c.b16 %v4387, %v4383
        %v4440 = vpack.c.b16 %v4388, %v4384
        %v4441 = vpack.c.b16 %v4389, %v4385
        %v4442 = vpack.c.b16 %v4390, %v4386
        %v4443 = vpack.c.b16 %v4395, %v4391
        %v4444 = vpack.c.b16 %v4396, %v4392
        %v4445 = vpack.c.b16 %v4397, %v4393
        %v4446 = vpack.c.b16 %v4398, %v4394
        %v4447 = vpack.c.b16 %v4403, %v4399
        %v4448 = vpack.c.b16 %v4404, %v4400
        %v4449 = vpack.c.b16 %v4405, %v4401
        %v4450 = vpack.c.b16 %v4406, %v4402
        %v4451 = vpack.c.b16 %v4411, %v4407
        %v4452 = vpack.c.b16 %v4412, %v4408
        %v4453 = vpack.c.b16 %v4413, %v4409
        %v4454 = vpack.c.b16 %v4414, %v4410
        %v4455 = vpack.c.b16 %v4419, %v4415
        %v4456 = vpack.c.b16 %v4420, %v4416
        %v4457 = vpack.c.b16 %v4421, %v4417
        %v4458 = vpack.c.b16 %v4422, %v4418
        %v4459 = vpack.c.b16 %v4427, %v4423
        %v4460 = vpack.c.b16 %v4428, %v4424
        %v4461 = vpack.c.b16 %v4429, %v4425
        %v4462 = vpack.c.b16 %v4430, %v4426
        %4495 = vmatprep.subr.bf16.mxu0 %v4432
        %4496 = vmatpush1.bf16.msra.mxu0 %v4431
        %4497 = vmatprep.subr.bf16.mxu0 %v4436
        %4498 = vmatpush1.bf16.msra.mxu0 %v4435
        %4499 = vmatprep.subr.bf16.mxu0 %v4440
        %4500 = vmatpush1.bf16.msra.mxu0 %v4439
        %4501 = vmatprep.subr.bf16.mxu0 %v4444
        %4502 = vmatpush1.bf16.msra.mxu0 %v4443
        %4503 = vmatprep.subr.bf16.mxu0 %v4448
        %4504 = vmatpush1.bf16.msra.mxu0 %v4447
        %4505 = vmatprep.subr.bf16.mxu0 %v4452
        %4506 = vmatpush1.bf16.msra.mxu0 %v4451
        %4507 = vmatprep.subr.bf16.mxu0 %v4456
        %4508 = vmatpush1.bf16.msra.mxu0 %v4455
        %4509 = vmatprep.subr.bf16.mxu0 %v4460
        %4510 = vmatpush1.bf16.msra.mxu0 %v4459
        %4511 = vmatprep.subr.bf16.mxu0 0
        %4512 = vmatpush1.bf16.msra.mxu0 0
        %4513 = vmatprep.subr.bf16.mxu0 0
        %4514 = vmatpush1.bf16.msra.mxu0 0
        %4515 = vmatprep.subr.bf16.mxu0 0
        %4516 = vmatpush1.bf16.msra.mxu0 0
        %4517 = vmatprep.subr.bf16.mxu0 0
        %4518 = vmatpush1.bf16.msra.mxu0 0
        %4519 = vmatprep.subr.bf16.mxu0 0
        %4520 = vmatpush1.bf16.msra.mxu0 0
        %4521 = vmatprep.subr.bf16.mxu0 0
        %4522 = vmatpush1.bf16.msra.mxu0 0
        %4523 = vmatprep.subr.bf16.mxu0 0
        %4524 = vmatpush1.bf16.msra.mxu0 0
        %4525 = vmatprep.subr.bf16.mxu0 0
        %4526 = vmatpush1.bf16.msra.mxu0 0
        %4527 = vmatprep.mubr.bf16.mxu0 0
        %4528 = vmatmul.mubr.bf16.gmra.mrb[0].mxu0 %v4280
        %v4529 = vpop.f32.mrb[0].mxu0
        %v4530 = vadd.f32 %v4318, %v4529
        %v4531 = vpop.f32.mrb[0].mxu0
        %v4532 = vadd.f32 %v4322, %v4531
        %v4533 = vpop.f32.mrb[0].mxu0
        %v4534 = vpop.f32.mrb[0].mxu0
        %4535 = vdwg.mxu0
        %4536 = vmatprep.subr.bf16.mxu0 %v4434
        %4537 = vmatpush1.bf16.msra.mxu0 %v4433
        %4538 = vmatprep.subr.bf16.mxu0 %v4438
        %4539 = vmatpush1.bf16.msra.mxu0 %v4437
        %4540 = vmatprep.subr.bf16.mxu0 %v4442
        %4541 = vmatpush1.bf16.msra.mxu0 %v4441
        %4542 = vmatprep.subr.bf16.mxu0 %v4446
        %4543 = vmatpush1.bf16.msra.mxu0 %v4445
        %4544 = vmatprep.subr.bf16.mxu0 %v4450
        %4545 = vmatpush1.bf16.msra.mxu0 %v4449
        %4546 = vmatprep.subr.bf16.mxu0 %v4454
        %4547 = vmatpush1.bf16.msra.mxu0 %v4453
        %4548 = vmatprep.subr.bf16.mxu0 %v4458
        %4549 = vmatpush1.bf16.msra.mxu0 %v4457
        %4550 = vmatprep.subr.bf16.mxu0 %v4462
        %4551 = vmatpush1.bf16.msra.mxu0 %v4461
        %4552 = vmatprep.subr.bf16.mxu0 0
        %4553 = vmatpush1.bf16.msra.mxu0 0
        %4554 = vmatprep.subr.bf16.mxu0 0
        %4555 = vmatpush1.bf16.msra.mxu0 0
        %4556 = vmatprep.subr.bf16.mxu0 0
        %4557 = vmatpush1.bf16.msra.mxu0 0
        %4558 = vmatprep.subr.bf16.mxu0 0
        %4559 = vmatpush1.bf16.msra.mxu0 0
        %4560 = vmatprep.subr.bf16.mxu0 0
        %4561 = vmatpush1.bf16.msra.mxu0 0
        %4562 = vmatprep.subr.bf16.mxu0 0
        %4563 = vmatpush1.bf16.msra.mxu0 0
        %4564 = vmatprep.subr.bf16.mxu0 0
        %4565 = vmatpush1.bf16.msra.mxu0 0
        %4566 = vmatprep.subr.bf16.mxu0 0
        %4567 = vmatpush1.bf16.msra.mxu0 0
        %4568 = vmatprep.mubr.bf16.mxu0 0
        %4569 = vmatmul.mubr.bf16.gmra.mrb[0].mxu0 %v4280
        %v4570 = vpop.f32.mrb[0].mxu0
        %v4571 = vadd.f32 %v4326, %v4570
        %v4572 = vpop.f32.mrb[0].mxu0
        %v4573 = vadd.f32 %v4330, %v4572
        %v4574 = vpop.f32.mrb[0].mxu0
        %v4575 = vpop.f32.mrb[0].mxu0
        %4576 = vdwg.mxu0
        %v4577 = vmul.f32 %v4530, 0.5
        %v4578 = vmul.f32 %v4532, 0.5
        %v4579 = vmul.f32 %v4571, 0.5
        %v4580 = vmul.f32 %v4573, 0.5
        %v4581 = vmul.f32 %v4530, 0.70710677
        %v4582 = vmul.f32 %v4532, 0.70710677
        %v4583 = vmul.f32 %v4571, 0.70710677
        %v4584 = vmul.f32 %v4573, 0.70710677
        %v4585 = vand.u32 2147483647, %v4581
        %v4586 = vand.u32 2147483647, %v4582
        %v4587 = vand.u32 2147483647, %v4583
        %v4588 = vand.u32 2147483647, %v4584
        %v4589 = vmul.f32 %v4585, 0.3275911
        %v4590 = vmul.f32 %v4586, 0.3275911
        %v4591 = vmul.f32 %v4587, 0.3275911
        %v4592 = vmul.f32 %v4588, 0.3275911
        %v4593 = vadd.f32 %v4589, 1.0
        %v4594 = vadd.f32 %v4590, 1.0
        %v4595 = vadd.f32 %v4591, 1.0
        %v4596 = vadd.f32 %v4592, 1.0
        %v4597 = vrcp.pop %v4593
        %v4598 = vmul.f32 1.0, %v4597
        %v4599 = vrcp.pop %v4594
        %v4600 = vmul.f32 1.0, %v4599
        %v4601 = vrcp.pop %v4595
        %v4602 = vmul.f32 1.0, %v4601
        %v4603 = vrcp.pop %v4596
        %v4604 = vmul.f32 1.0, %v4603
        %v4605 = vmul.f32 %v4598, 1.0614054
        %v4606 = vmul.f32 %v4600, 1.0614054
        %v4607 = vmul.f32 %v4602, 1.0614054
        %v4608 = vmul.f32 %v4604, 1.0614054
        %v4609 = vadd.f32 %v4605, -1.4531521
        %v4610 = vadd.f32 %v4606, -1.4531521
        %v4611 = vadd.f32 %v4607, -1.4531521
        %v4612 = vadd.f32 %v4608, -1.4531521
        %v4613 = vmul.f32 %v4609, %v4598
        %v4614 = vmul.f32 %v4610, %v4600
        %v4615 = vmul.f32 %v4611, %v4602
        %v4616 = vmul.f32 %v4612, %v4604
        %v4617 = vadd.f32 %v4613, 1.4214138
        %v4618 = vadd.f32 %v4614, 1.4214138
        %v4619 = vadd.f32 %v4615, 1.4214138
        %v4620 = vadd.f32 %v4616, 1.4214138
        %v4621 = vmul.f32 %v4617, %v4598
        %v4622 = vmul.f32 %v4618, %v4600
        %v4623 = vmul.f32 %v4619, %v4602
        %v4624 = vmul.f32 %v4620, %v4604
        %v4625 = vadd.f32 %v4621, -0.28449672
        %v4626 = vadd.f32 %v4622, -0.28449672
        %v4627 = vadd.f32 %v4623, -0.28449672
        %v4628 = vadd.f32 %v4624, -0.28449672
        %v4629 = vmul.f32 %v4625, %v4598
        %v4630 = vmul.f32 %v4626, %v4600
        %v4631 = vmul.f32 %v4627, %v4602
        %v4632 = vmul.f32 %v4628, %v4604
        %v4633 = vadd.f32 %v4629, 0.2548296
        %v4634 = vadd.f32 %v4630, 0.2548296
        %v4635 = vadd.f32 %v4631, 0.2548296
        %v4636 = vadd.f32 %v4632, 0.2548296
        %v4637 = vmul.f32 %v4633, %v4598
        %v4638 = vmul.f32 %v4634, %v4600
        %v4639 = vmul.f32 %v4635, %v4602
        %v4640 = vmul.f32 %v4636, %v4604
        %v4641 = vsub.f32 0.0, %v4585
        %v4642 = vsub.f32 0.0, %v4586
        %v4643 = vsub.f32 0.0, %v4587
        %v4644 = vsub.f32 0.0, %v4588
        %v4645 = vmul.f32 %v4641, %v4585
        %v4646 = vmul.f32 %v4642, %v4586
        %v4647 = vmul.f32 %v4643, %v4587
        %v4648 = vmul.f32 %v4644, %v4588
        %v4649 = vmul.f32 %v4645, 1.442695
        %v4650 = vpow.pop %v4649
        %v4651 = vmul.f32 %v4646, 1.442695
        %v4652 = vpow.pop %v4651
        %v4653 = vmul.f32 %v4647, 1.442695
        %v4654 = vpow.pop %v4653
        %v4655 = vmul.f32 %v4648, 1.442695
        %v4656 = vpow.pop %v4655
        %v4657 = vmul.f32 %v4637, %v4650
        %v4658 = vmul.f32 %v4638, %v4652
        %v4659 = vmul.f32 %v4639, %v4654
        %v4660 = vmul.f32 %v4640, %v4656
        %v4661 = vsub.f32 1.0, %v4657
        %v4662 = vsub.f32 1.0, %v4658
        %v4663 = vsub.f32 1.0, %v4659
        %v4664 = vsub.f32 1.0, %v4660
        %vm4665 = vcmp.ge.f32.partialorder %v4581, 0.0
        %vm4666 = vcmp.ge.f32.partialorder %v4582, 0.0
        %vm4667 = vcmp.ge.f32.partialorder %v4583, 0.0
        %vm4668 = vcmp.ge.f32.partialorder %v4584, 0.0
        %v4669 = vsub.f32 0.0, %v4661
        %v4670 = vsub.f32 0.0, %v4662
        %v4671 = vsub.f32 0.0, %v4663
        %v4672 = vsub.f32 0.0, %v4664
        %v4673 = vsel %vm4665, %v4661, %v4669
        %v4674 = vsel %vm4666, %v4662, %v4670
        %v4675 = vsel %vm4667, %v4663, %v4671
        %v4676 = vsel %vm4668, %v4664, %v4672
        %v4677 = vadd.f32 %v4673, 1.0
        %v4678 = vadd.f32 %v4674, 1.0
        %v4679 = vadd.f32 %v4675, 1.0
        %v4680 = vadd.f32 %v4676, 1.0
        %v4681 = vmul.f32 %v4577, %v4677
        %v4682 = vmul.f32 %v4578, %v4678
        %v4683 = vmul.f32 %v4579, %v4679
        %v4684 = vmul.f32 %v4580, %v4680
        %v4685 = vpack.c.bf16 %v4681, %v4681
        %v4686 = vpack.c.bf16 %v4682, %v4682
        %v4687 = vpack.c.bf16 %v4683, %v4683
        %v4688 = vpack.c.bf16 %v4684, %v4684
        %v4689 = vld [vmem:[%s20] sm:$0xf]
        %v4690 = vld [vmem:[%s20 + $0x4] sm:$0xf]
        %v4691 = vld [vmem:[%s20 + $0x8] sm:$0xf]
        %v4692 = vld [vmem:[%s20 + $0xc] sm:$0xf]
        %v4693 = vld [vmem:[%s20 + $0x10] sm:$0xf]
        %v4694 = vld [vmem:[%s20 + $0x14] sm:$0xf]
        %v4695 = vld [vmem:[%s20 + $0x18] sm:$0xf]
        %v4696 = vld [vmem:[%s20 + $0x1c] sm:$0xf]
        %v4697 = vld [vmem:[%s20 + $0x20] sm:$0xf]
        %v4698 = vld [vmem:[%s20 + $0x24] sm:$0xf]
        %v4699 = vld [vmem:[%s20 + $0x28] sm:$0xf]
        %v4700 = vld [vmem:[%s20 + $0x2c] sm:$0xf]
        %v4701 = vld [vmem:[%s20 + $0x30] sm:$0xf]
        %v4702 = vld [vmem:[%s20 + $0x34] sm:$0xf]
        %v4703 = vld [vmem:[%s20 + $0x38] sm:$0xf]
        %v4704 = vld [vmem:[%s20 + $0x3c] sm:$0xf]
        %v4705 = vld [vmem:[%s20 + $0x40] sm:$0xf]
        %v4706 = vld [vmem:[%s20 + $0x44] sm:$0xf]
        %v4707 = vld [vmem:[%s20 + $0x48] sm:$0xf]
        %v4708 = vld [vmem:[%s20 + $0x4c] sm:$0xf]
        %v4709 = vld [vmem:[%s20 + $0x50] sm:$0xf]
        %v4710 = vld [vmem:[%s20 + $0x54] sm:$0xf]
        %v4711 = vld [vmem:[%s20 + $0x58] sm:$0xf]
        %v4712 = vld [vmem:[%s20 + $0x5c] sm:$0xf]
        %v4713 = vld [vmem:[%s20 + $0x60] sm:$0xf]
        %v4714 = vld [vmem:[%s20 + $0x64] sm:$0xf]
        %v4715 = vld [vmem:[%s20 + $0x68] sm:$0xf]
        %v4716 = vld [vmem:[%s20 + $0x6c] sm:$0xf]
        %v4717 = vld [vmem:[%s20 + $0x70] sm:$0xf]
        %v4718 = vld [vmem:[%s20 + $0x74] sm:$0xf]
        %v4719 = vld [vmem:[%s20 + $0x78] sm:$0xf]
        %v4720 = vld [vmem:[%s20 + $0x7c] sm:$0xf]
        %v4721 = vld [vmem:[%s20 + $0x80] sm:$0xf]
        %v4722 = vld [vmem:[%s20 + $0x84] sm:$0xf]
        %v4723 = vld [vmem:[%s20 + $0x88] sm:$0xf]
        %v4724 = vld [vmem:[%s20 + $0x8c] sm:$0xf]
        %v4725 = vld [vmem:[%s20 + $0x90] sm:$0xf]
        %v4726 = vld [vmem:[%s20 + $0x94] sm:$0xf]
        %v4727 = vld [vmem:[%s20 + $0x98] sm:$0xf]
        %v4728 = vld [vmem:[%s20 + $0x9c] sm:$0xf]
        %v4729 = vld [vmem:[%s20 + $0xa0] sm:$0xf]
        %v4730 = vld [vmem:[%s20 + $0xa4] sm:$0xf]
        %v4731 = vld [vmem:[%s20 + $0xa8] sm:$0xf]
        %v4732 = vld [vmem:[%s20 + $0xac] sm:$0xf]
        %v4733 = vld [vmem:[%s20 + $0xb0] sm:$0xf]
        %v4734 = vld [vmem:[%s20 + $0xb4] sm:$0xf]
        %v4735 = vld [vmem:[%s20 + $0xb8] sm:$0xf]
        %v4736 = vld [vmem:[%s20 + $0xbc] sm:$0xf]
        %v4737 = vld [vmem:[%s20 + $0xc0] sm:$0xf]
        %v4738 = vld [vmem:[%s20 + $0xc4] sm:$0xf]
        %v4739 = vld [vmem:[%s20 + $0xc8] sm:$0xf]
        %v4740 = vld [vmem:[%s20 + $0xcc] sm:$0xf]
        %v4741 = vld [vmem:[%s20 + $0xd0] sm:$0xf]
        %v4742 = vld [vmem:[%s20 + $0xd4] sm:$0xf]
        %v4743 = vld [vmem:[%s20 + $0xd8] sm:$0xf]
        %v4744 = vld [vmem:[%s20 + $0xdc] sm:$0xf]
        %v4745 = vld [vmem:[%s20 + $0xe0] sm:$0xf]
        %v4746 = vld [vmem:[%s20 + $0xe4] sm:$0xf]
        %v4747 = vld [vmem:[%s20 + $0xe8] sm:$0xf]
        %v4748 = vld [vmem:[%s20 + $0xec] sm:$0xf]
        %v4749 = vld [vmem:[%s20 + $0xf0] sm:$0xf]
        %v4750 = vld [vmem:[%s20 + $0xf4] sm:$0xf]
        %v4751 = vld [vmem:[%s20 + $0xf8] sm:$0xf]
        %v4752 = vld [vmem:[%s20 + $0xfc] sm:$0xf]
        %v4817 = vunpack.c.l.b16 %v4689
        %v4818 = vunpack.c.l.b16 %v4690
        %v4819 = vunpack.c.l.b16 %v4691
        %v4820 = vunpack.c.l.b16 %v4692
        %v4821 = vunpack.c.l.b16 %v4693
        %v4822 = vunpack.c.l.b16 %v4694
        %v4823 = vunpack.c.l.b16 %v4695
        %v4824 = vunpack.c.l.b16 %v4696
        %v4825 = vunpack.c.l.b16 %v4697
        %v4826 = vunpack.c.l.b16 %v4698
        %v4827 = vunpack.c.l.b16 %v4699
        %v4828 = vunpack.c.l.b16 %v4700
        %v4829 = vunpack.c.l.b16 %v4701
        %v4830 = vunpack.c.l.b16 %v4702
        %v4831 = vunpack.c.l.b16 %v4703
        %v4832 = vunpack.c.l.b16 %v4704
        %v4833 = vunpack.c.l.b16 %v4705
        %v4834 = vunpack.c.l.b16 %v4706
        %v4835 = vunpack.c.l.b16 %v4707
        %v4836 = vunpack.c.l.b16 %v4708
        %v4837 = vunpack.c.l.b16 %v4709
        %v4838 = vunpack.c.l.b16 %v4710
        %v4839 = vunpack.c.l.b16 %v4711
        %v4840 = vunpack.c.l.b16 %v4712
        %v4841 = vunpack.c.l.b16 %v4713
        %v4842 = vunpack.c.l.b16 %v4714
        %v4843 = vunpack.c.l.b16 %v4715
        %v4844 = vunpack.c.l.b16 %v4716
        %v4845 = vunpack.c.l.b16 %v4717
        %v4846 = vunpack.c.l.b16 %v4718
        %v4847 = vunpack.c.l.b16 %v4719
        %v4848 = vunpack.c.l.b16 %v4720
        %v4849 = vunpack.c.l.b16 %v4721
        %v4850 = vunpack.c.l.b16 %v4722
        %v4851 = vunpack.c.l.b16 %v4723
        %v4852 = vunpack.c.l.b16 %v4724
        %v4853 = vunpack.c.l.b16 %v4725
        %v4854 = vunpack.c.l.b16 %v4726
        %v4855 = vunpack.c.l.b16 %v4727
        %v4856 = vunpack.c.l.b16 %v4728
        %v4857 = vunpack.c.l.b16 %v4729
        %v4858 = vunpack.c.l.b16 %v4730
        %v4859 = vunpack.c.l.b16 %v4731
        %v4860 = vunpack.c.l.b16 %v4732
        %v4861 = vunpack.c.l.b16 %v4733
        %v4862 = vunpack.c.l.b16 %v4734
        %v4863 = vunpack.c.l.b16 %v4735
        %v4864 = vunpack.c.l.b16 %v4736
        %v4865 = vunpack.c.l.b16 %v4737
        %v4866 = vunpack.c.l.b16 %v4738
        %v4867 = vunpack.c.l.b16 %v4739
        %v4868 = vunpack.c.l.b16 %v4740
        %v4869 = vunpack.c.l.b16 %v4741
        %v4870 = vunpack.c.l.b16 %v4742
        %v4871 = vunpack.c.l.b16 %v4743
        %v4872 = vunpack.c.l.b16 %v4744
        %v4873 = vunpack.c.l.b16 %v4745
        %v4874 = vunpack.c.l.b16 %v4746
        %v4875 = vunpack.c.l.b16 %v4747
        %v4876 = vunpack.c.l.b16 %v4748
        %v4877 = vunpack.c.l.b16 %v4749
        %v4878 = vunpack.c.l.b16 %v4750
        %v4879 = vunpack.c.l.b16 %v4751
        %v4880 = vunpack.c.l.b16 %v4752
        %v4881 = vpack.c.b16 %v4818, %v4817
        %v4882 = vpack.c.b16 %v4820, %v4819
        %v4883 = vpack.c.b16 %v4822, %v4821
        %v4884 = vpack.c.b16 %v4824, %v4823
        %v4885 = vpack.c.b16 %v4826, %v4825
        %v4886 = vpack.c.b16 %v4828, %v4827
        %v4887 = vpack.c.b16 %v4830, %v4829
        %v4888 = vpack.c.b16 %v4832, %v4831
        %v4889 = vpack.c.b16 %v4834, %v4833
        %v4890 = vpack.c.b16 %v4836, %v4835
        %v4891 = vpack.c.b16 %v4838, %v4837
        %v4892 = vpack.c.b16 %v4840, %v4839
        %v4893 = vpack.c.b16 %v4842, %v4841
        %v4894 = vpack.c.b16 %v4844, %v4843
        %v4895 = vpack.c.b16 %v4846, %v4845
        %v4896 = vpack.c.b16 %v4848, %v4847
        %v4897 = vpack.c.b16 %v4850, %v4849
        %v4898 = vpack.c.b16 %v4852, %v4851
        %v4899 = vpack.c.b16 %v4854, %v4853
        %v4900 = vpack.c.b16 %v4856, %v4855
        %v4901 = vpack.c.b16 %v4858, %v4857
        %v4902 = vpack.c.b16 %v4860, %v4859
        %v4903 = vpack.c.b16 %v4862, %v4861
        %v4904 = vpack.c.b16 %v4864, %v4863
        %v4905 = vpack.c.b16 %v4866, %v4865
        %v4906 = vpack.c.b16 %v4868, %v4867
        %v4907 = vpack.c.b16 %v4870, %v4869
        %v4908 = vpack.c.b16 %v4872, %v4871
        %v4909 = vpack.c.b16 %v4874, %v4873
        %v4910 = vpack.c.b16 %v4876, %v4875
        %v4911 = vpack.c.b16 %v4878, %v4877
        %v4912 = vpack.c.b16 %v4880, %v4879
        %4945 = vmatprep.subr.bf16.mxu0 0
        %4946 = vmatpush1.bf16.msra.mxu0 %v4881
        %4947 = vmatprep.subr.bf16.mxu0 0
        %4948 = vmatpush1.bf16.msra.mxu0 %v4882
        %4949 = vmatprep.subr.bf16.mxu0 0
        %4950 = vmatpush1.bf16.msra.mxu0 %v4883
        %4951 = vmatprep.subr.bf16.mxu0 0
        %4952 = vmatpush1.bf16.msra.mxu0 %v4884
        %4953 = vmatprep.subr.bf16.mxu0 0
        %4954 = vmatpush1.bf16.msra.mxu0 %v4885
        %4955 = vmatprep.subr.bf16.mxu0 0
        %4956 = vmatpush1.bf16.msra.mxu0 %v4886
        %4957 = vmatprep.subr.bf16.mxu0 0
        %4958 = vmatpush1.bf16.msra.mxu0 %v4887
        %4959 = vmatprep.subr.bf16.mxu0 0
        %4960 = vmatpush1.bf16.msra.mxu0 %v4888
        %4961 = vmatprep.subr.bf16.mxu0 0
        %4962 = vmatpush1.bf16.msra.mxu0 %v4889
        %4963 = vmatprep.subr.bf16.mxu0 0
        %4964 = vmatpush1.bf16.msra.mxu0 %v4890
        %4965 = vmatprep.subr.bf16.mxu0 0
        %4966 = vmatpush1.bf16.msra.mxu0 %v4891
        %4967 = vmatprep.subr.bf16.mxu0 0
        %4968 = vmatpush1.bf16.msra.mxu0 %v4892
        %4969 = vmatprep.subr.bf16.mxu0 0
        %4970 = vmatpush1.bf16.msra.mxu0 %v4893
        %4971 = vmatprep.subr.bf16.mxu0 0
        %4972 = vmatpush1.bf16.msra.mxu0 %v4894
        %4973 = vmatprep.subr.bf16.mxu0 0
        %4974 = vmatpush1.bf16.msra.mxu0 %v4895
        %4975 = vmatprep.subr.bf16.mxu0 0
        %4976 = vmatpush1.bf16.msra.mxu0 %v4896
        %4977 = vmatprep.mubr.bf16.mxu0 %v4686
        %4978 = vmatmul.mubr.bf16.gmra.mrb[0].mxu0 %v4685
        %v4979 = vpop.f32.mrb[0].mxu0
        %v4980 = vadd.f32 0.0, %v4979
        %v4981 = vpop.f32.mrb[0].mxu0
        %v4982 = vpop.f32.mrb[0].mxu0
        %v4983 = vpop.f32.mrb[0].mxu0
        %4984 = vdwg.mxu0
        %4985 = vmatprep.subr.bf16.mxu0 0
        %4986 = vmatpush1.bf16.msra.mxu0 %v4897
        %4987 = vmatprep.subr.bf16.mxu0 0
        %4988 = vmatpush1.bf16.msra.mxu0 %v4898
        %4989 = vmatprep.subr.bf16.mxu0 0
        %4990 = vmatpush1.bf16.msra.mxu0 %v4899
        %4991 = vmatprep.subr.bf16.mxu0 0
        %4992 = vmatpush1.bf16.msra.mxu0 %v4900
        %4993 = vmatprep.subr.bf16.mxu0 0
        %4994 = vmatpush1.bf16.msra.mxu0 %v4901
        %4995 = vmatprep.subr.bf16.mxu0 0
        %4996 = vmatpush1.bf16.msra.mxu0 %v4902
        %4997 = vmatprep.subr.bf16.mxu0 0
        %4998 = vmatpush1.bf16.msra.mxu0 %v4903
        %4999 = vmatprep.subr.bf16.mxu0 0
        %5000 = vmatpush1.bf16.msra.mxu0 %v4904
        %5001 = vmatprep.subr.bf16.mxu0 0
        %5002 = vmatpush1.bf16.msra.mxu0 %v4905
        %5003 = vmatprep.subr.bf16.mxu0 0
        %5004 = vmatpush1.bf16.msra.mxu0 %v4906
        %5005 = vmatprep.subr.bf16.mxu0 0
        %5006 = vmatpush1.bf16.msra.mxu0 %v4907
        %5007 = vmatprep.subr.bf16.mxu0 0
        %5008 = vmatpush1.bf16.msra.mxu0 %v4908
        %5009 = vmatprep.subr.bf16.mxu0 0
        %5010 = vmatpush1.bf16.msra.mxu0 %v4909
        %5011 = vmatprep.subr.bf16.mxu0 0
        %5012 = vmatpush1.bf16.msra.mxu0 %v4910
        %5013 = vmatprep.subr.bf16.mxu0 0
        %5014 = vmatpush1.bf16.msra.mxu0 %v4911
        %5015 = vmatprep.subr.bf16.mxu0 0
        %5016 = vmatpush1.bf16.msra.mxu0 %v4912
        %5017 = vmatprep.mubr.bf16.mxu0 %v4688
        %5018 = vmatmul.mubr.bf16.gmra.mrb[0].mxu0 %v4687
        %v5019 = vpop.f32.mrb[0].mxu0
        %v5020 = vadd.f32 %v4980, %v5019
        %v5021 = vpop.f32.mrb[0].mxu0
        %v5022 = vpop.f32.mrb[0].mxu0
        %v5023 = vpop.f32.mrb[0].mxu0
        %5024 = vdwg.mxu0
        %v5025 = vadd.f32 %v4279, %v5020
        %v5026 = vld [vmem:[%s21] sm:$0x1]
        %v5028 = vlaneseq
        %v5029 = vshrl.u32 %v5028, 7
        %v5030 = vsub.s32 0, %v5029
        %v5031 = vrot.slane %v5026, %v5030
        %v5033 = vadd.f32 %v5025, %v5031
        %5034 = vst [vmem:[%s718] sm:$0xff] %v2890
        %5035 = vst [vmem:[%s725] sm:$0xff] %v5033
        %s5036 = sand.u32 %s521, 1
        %s5037 = scalar_lea.sflag [#allocation3], %s5036
        %s5038 = sand.u32 %s521, 1
        %s5039 = smul.addr %s5038, 8
        %s5040 = scalar_lea.vmem [#allocation2], %s5039
        %s5041 = sand.u32 %s547, 1
        %s5042 = scalar_lea.sflag [#allocation5], %s5041
        %s5043 = sand.u32 %s547, 1
        %s5044 = smul.addr %s5043, 8
        %s5045 = scalar_lea.vmem [#allocation4], %s5044
        // Predicated region
        $region109: #{cross_modal_attention.1} parent=107 // pred_check
          %p5046 = pneg %p531
        $region110: #{cross_modal_attention.1} parent=107 // pred_check_branch
          %5048 = sbr.rel (%p5046) target = $region112
        $region111: #{cross_modal_attention.1} parent=107 // pred_region
          %s5050 = ssub.s32 128, 128
          %5051 = vsyncadd %s5037, %s5050
          %s5052 = smul.addr %s41, 128
          %s5053 = scalar_lea.hbm %s22, %s5052
          %s5055 = sshll.u32 %s5040, 4
          %s5056 = int_to_ptr.vmem [resolvable:$true] %s5055
          %5058 = dma.vmem_to_hbm [thread:$0]  %s5056, 128, %s5053, %s5037
        $region112: #{cross_modal_attention.1} parent=107 // pred_fallthru
          _
        // Predicated region
        $region113: #{cross_modal_attention.1} parent=107 // pred_check
          %p5059 = pneg %p557
        $region114: #{cross_modal_attention.1} parent=107 // pred_check_branch
          %5061 = sbr.rel (%p5059) target = $region116
        $region115: #{cross_modal_attention.1} parent=107 // pred_region
          %s5063 = ssub.s32 128, 128
          %5064 = vsyncadd %s5042, %s5063
          %s5065 = smul.addr %s41, 128
          %s5066 = scalar_lea.hbm %s23, %s5065
          %s5068 = sshll.u32 %s5045, 4
          %s5069 = int_to_ptr.vmem [resolvable:$true] %s5068
          %5071 = dma.vmem_to_hbm [thread:$0]  %s5069, 128, %s5066, %s5042
        $region116: #{cross_modal_attention.1} parent=107 // pred_fallthru
          _
      $region108: #{cross_modal_attention.1} parent=5 // pred_fallthru
        _
      %p5072 = scmp.le.s32.totalorder 2, %s36
      // Predicated region
      $region117: #{cross_modal_attention.1} parent=5 // pred_check
        %p5073 = pneg %p5072
      $region118: #{cross_modal_attention.1} parent=5 // pred_check_branch
        %5075 = sbr.rel (%p5073) target = $region120
      $region119: #{cross_modal_attention.1} parent=5 // pred_region
        %s5076 = ssub.s32 %s36, 2
        // Predicated region
        $region121: #{cross_modal_attention.1} parent=119 // pred_check
          %p5077 = pneg %p537
        $region122: #{cross_modal_attention.1} parent=119 // pred_check_branch
          %5079 = sbr.rel (%p5077) target = $region124
        $region123: #{cross_modal_attention.1} parent=119 // pred_region
          %s5080 = sand.u32 %s522, 1
          %s5081 = scalar_lea.sflag [#allocation3], %s5080
          %s5082 = sand.u32 %s522, 1
          %s5083 = smul.addr %s5082, 8
          %s5084 = scalar_lea.vmem [#allocation2], %s5083
          %5085 = dma.done %s5081, 128
        $region124: #{cross_modal_attention.1} parent=119 // pred_fallthru
          _
        // Predicated region
        $region125: #{cross_modal_attention.1} parent=119 // pred_check
          %p5086 = pneg %p563
        $region126: #{cross_modal_attention.1} parent=119 // pred_check_branch
          %5088 = sbr.rel (%p5086) target = $region128
        $region127: #{cross_modal_attention.1} parent=119 // pred_region
          %s5089 = sand.u32 %s548, 1
          %s5090 = scalar_lea.sflag [#allocation5], %s5089
          %s5091 = sand.u32 %s548, 1
          %s5092 = smul.addr %s5091, 8
          %s5093 = scalar_lea.vmem [#allocation4], %s5092
          %5094 = dma.done %s5090, 128
        $region128: #{cross_modal_attention.1} parent=119 // pred_fallthru
          _
      $region120: #{cross_modal_attention.1} parent=5 // pred_fallthru
        _
    $region6: #{cross_modal_attention.1} parent=1 // loop_footer
      %s40 = sadd.s32 1, %s36
    $region7: #{cross_modal_attention.1} parent=1 // loop_footer_branch
      %35 = sbr.rel target = $region3
    $region8: #{cross_modal_attention.1} parent=1 // loop_exit
      _
    %5095 = vsyncpa [#allocation3], 1
    %s5096 = scalar_lea.sflag [#allocation3], 1
    %5097 = vsyncpa %s5096, 1
    %5098 = vsyncpa [#allocation5], 1
    %s5099 = scalar_lea.sflag [#allocation5], 1
    %5100 = vsyncpa %s5099, 1

</llo_original>
